<compile_context>
chip_gen: v7x
topology: tpu7x:2x2x1
jax: 0.10.0
libtpu: 0.0.40
codegen_flags: <defaults>
</compile_context>

<pallas_src>
import functools

import jax
import jax.numpy as jnp
from jax import lax
from jax.experimental import pallas as pl
from jax.experimental.pallas import tpu as pltpu

SELU_ALPHA = 1.6732632423543772
SELU_SCALE = 1.0507009873554805
BN_EPS = 1e-5


def _selu(x):
    return SELU_SCALE * jnp.where(x > 0, x, SELU_ALPHA * (jnp.exp(x) - 1.0))


# --------------------------------------------------------------------------
# Pass 1: conv (9 shifted MXU matmuls on a halo'd tile) + batch statistics
# --------------------------------------------------------------------------
def _conv_stats_kernel(xh_ref, w_ref, y_ref, stats_ref, *, tile_h, width):
    # xh_ref   : (1, tile_h+2, width+2, C)  bf16  halo'd input block
    # w_ref    : (9, C, C)                  bf16  per-tap weights (resident)
    # y_ref    : (1, tile_h, width, C)      f32   conv output block
    # stats_ref: (2, C)                     f32   [sum ; sum of squares] accum
    @pl.when(pl.program_id(0) == 0)
    def _init():
        stats_ref[...] = jnp.zeros_like(stats_ref)

    c_in = xh_ref.shape[-1]
    c_out = w_ref.shape[2]
    xh = xh_ref[0]                                     # (tile_h+2, width+2, C)

    acc = jnp.zeros((tile_h * width, c_out), jnp.float32)
    for t in range(9):                                 # static unroll, 9 taps
        dh, dw = t // 3, t % 3
        patch = xh[dh:dh + tile_h, dw:dw + width, :]
        patch = patch.reshape(tile_h * width, c_in)
        acc = acc + jnp.dot(patch, w_ref[t],
                            preferred_element_type=jnp.float32)

    y_ref[...] = acc.reshape(1, tile_h, width, c_out)

    s = jnp.sum(acc, axis=0, keepdims=True)            # (1, C)
    ss = jnp.sum(acc * acc, axis=0, keepdims=True)     # (1, C)
    stats_ref[...] = stats_ref[...] + jnp.concatenate([s, ss], axis=0)


def _conv_stats(xh, w_taps, tile_h, width, channels):
    n_blocks = xh.shape[0]
    kernel = functools.partial(_conv_stats_kernel, tile_h=tile_h, width=width)
    return pl.pallas_call(
        kernel,
        out_shape=(
            jax.ShapeDtypeStruct((n_blocks, tile_h, width, channels),
                                 jnp.float32),
            jax.ShapeDtypeStruct((2, channels), jnp.float32),
        ),
        grid_spec=pltpu.PrefetchScalarGridSpec(
            num_scalar_prefetch=0,
            grid=(n_blocks,),
            in_specs=[
                pl.BlockSpec((1, tile_h + 2, width + 2, channels),
                             lambda i: (i, 0, 0, 0)),
                pl.BlockSpec((9, channels, channels), lambda i: (0, 0, 0)),
            ],
            out_specs=[
                pl.BlockSpec((1, tile_h, width, channels),
                             lambda i: (i, 0, 0, 0)),
                pl.BlockSpec((2, channels), lambda i: (0, 0)),
            ],
        ),
        # stats output accumulates across the grid -> axis must be "arbitrary"
        compiler_params=pltpu.CompilerParams(
            dimension_semantics=("arbitrary",)),
    )(xh, w_taps)


# --------------------------------------------------------------------------
# Pass 2: BN affine (+ optional residual) + SELU, lane-dense (rows, W*C) layout
# --------------------------------------------------------------------------
def _bn_act_kernel(y_ref, scale_ref, shift_ref, out_ref):
    out_ref[...] = _selu(y_ref[...] * scale_ref[...] + shift_ref[...])


def _bn_add_act_kernel(y_ref, scale_ref, shift_ref, res_ref, out_ref):
    out_ref[...] = _selu(
        y_ref[...] * scale_ref[...] + shift_ref[...] + res_ref[...])


def _pick_tile_r(rows):
    for cand in (1024, 512, 256, 128, 64, 32, 16, 8):
        if rows % cand == 0:
            return cand
    return rows          # full extent (always legal as a block dim)


def _normalize(kernel, y2d, scale_row, shift_row, residual=None):
    rows, lanes = y2d.shape
    tile_r = _pick_tile_r(rows)
    args = [y2d, scale_row, shift_row]
    in_specs = [
        pl.BlockSpec((tile_r, lanes), lambda i: (i, 0)),
        pl.BlockSpec((1, lanes), lambda i: (0, 0)),
        pl.BlockSpec((1, lanes), lambda i: (0, 0)),
    ]
    if residual is not None:
        args.append(residual)
        in_specs.append(pl.BlockSpec((tile_r, lanes), lambda i: (i, 0)))
    return pl.pallas_call(
        kernel,
        out_shape=jax.ShapeDtypeStruct((rows, lanes), jnp.float32),
        grid_spec=pltpu.PrefetchScalarGridSpec(
            num_scalar_prefetch=0,
            grid=(rows // tile_r,),
            in_specs=in_specs,
            out_specs=pl.BlockSpec((tile_r, lanes), lambda i: (i, 0)),
        ),
        compiler_params=pltpu.CompilerParams(
            dimension_semantics=("parallel",)),
    )(*args)


# --------------------------------------------------------------------------
# Glue (pure data rearrangement / tiny per-channel math)
# --------------------------------------------------------------------------
def _pick_tile_h(h, w):
    # Largest divisor of H keeping the per-step tile small (v7x VMEM-safe).
    best = 1
    for d in range(1, h + 1):
        if h % d == 0 and d * w <= 2048:
            best = d
    return best


def _build_halo(x_nhwc, tile_h):
    # (N, H, W, C) -> (N*HB, tile_h+2, W+2, C) halo'd row-blocks ("same" pad 1).
    n, h, w, c = x_nhwc.shape
    hb = h // tile_h
    xp = jnp.pad(x_nhwc, ((0, 0), (1, 1), (1, 1), (0, 0)))
    blocks = [xp[:, i * tile_h:i * tile_h + tile_h + 2, :, :] for i in range(hb)]
    xh = jnp.stack(blocks, axis=1)
    return xh.reshape(n * hb, tile_h + 2, w + 2, c)


def _bn_affine(stats, gamma, beta, count):
    # stats: (2, C) = [sum ; sum of squares] over all N*H*W positions.
    mean = stats[0] / count
    var = stats[1] / count - mean * mean      # biased variance (PyTorch train)
    inv = lax.rsqrt(var + BN_EPS)
    scale = gamma.astype(jnp.float32) * inv
    shift = beta.astype(jnp.float32) - mean * scale
    return scale, shift


def _row_params(vec_c, w):
    # (C,) -> (1, W*C) so the normalize pass is lane-dense in (rows, W*C).
    return jnp.tile(vec_c, w)[None, :].astype(jnp.float32)


# --------------------------------------------------------------------------
# Full residual block forward (NCHW in / NCHW out, matching the nn.Module)
# --------------------------------------------------------------------------
def residual_block_forward(x_nchw, params):
    # Conv biases b1/b2 are unused: training-mode BN cancels them exactly.
    w1, _b1, g1, be1, w2, _b2, g2, be2 = params
    n, c, h, w = x_nchw.shape
    count = n * h * w
    x_nhwc = jnp.transpose(x_nchw, (0, 2, 3, 1)).astype(jnp.float32)

    tile_h = _pick_tile_h(h, w)

    # OIHW -> (9, C_in, C_out) per-tap weights, bf16 for the MXU.
    wt1 = jnp.transpose(w1, (2, 3, 1, 0)).reshape(9, c, c).astype(jnp.bfloat16)
    wt2 = jnp.transpose(w2, (2, 3, 1, 0)).reshape(9, c, c).astype(jnp.bfloat16)

    # ---- layer 1: conv1 (+stats) -> bn1 -> selu
    xh1 = _build_halo(x_nhwc.astype(jnp.bfloat16), tile_h)
    y1, st1 = _conv_stats(xh1, wt1, tile_h, w, c)
    scale1, shift1 = _bn_affine(st1, g1, be1, count)
    a1_2d = _normalize(_bn_act_kernel,
                       y1.reshape(n * h, w * c),
                       _row_params(scale1, w), _row_params(shift1, w))

    # ---- layer 2: conv2 (+stats) -> bn2 -> +x -> selu
    a1 = a1_2d.reshape(n, h, w, c)
    xh2 = _build_halo(a1.astype(jnp.bfloat16), tile_h)
    y2, st2 = _conv_stats(xh2, wt2, tile_h, w, c)
    scale2, shift2 = _bn_affine(st2, g2, be2, count)
    out_2d = _normalize(_bn_add_act_kernel,
                        y2.reshape(n * h, w * c),
                        _row_params(scale2, w), _row_params(shift2, w),
                        residual=x_nhwc.reshape(n * h, w * c))

    out = out_2d.reshape(n, h, w, c)
    return jnp.transpose(out, (0, 3, 1, 2))


# --------------------------------------------------------------------------
# Pure-JAX reference (f32 everywhere) and parameter init
# --------------------------------------------------------------------------
def _reference(x_nchw, params):
    w1, b1, g1, be1, w2, b2, g2, be2 = params

    def conv(x, wgt, bias):
        y = lax.conv_general_dilated(
            x, wgt, window_strides=(1, 1), padding="SAME",
            dimension_numbers=("NCHW", "OIHW", "NCHW"))
        return y + bias[None, :, None, None]

    def bn(x, g, be):
        mean = jnp.mean(x, axis=(0, 2, 3), keepdims=True)
        var = jnp.mean((x - mean) ** 2, axis=(0, 2, 3), keepdims=True)
        return ((x - mean) * lax.rsqrt(var + BN_EPS)
                * g[None, :, None, None] + be[None, :, None, None])

    y = _selu(bn(conv(x_nchw, w1, b1), g1, be1))
    y = bn(conv(y, w2, b2), g2, be2) + x_nchw
    return _selu(y)


def init_params(key, hidden_size):
    c = hidden_size
    ks = jax.random.split(key, 8)
    bound = 1.0 / jnp.sqrt(c * 9.0)   # PyTorch conv default init bound
    w1 = jax.random.uniform(ks[0], (c, c, 3, 3), jnp.float32, -bound, bound)
    b1 = jax.random.uniform(ks[1], (c,), jnp.float32, -bound, bound)
    w2 = jax.random.uniform(ks[2], (c, c, 3, 3), jnp.float32, -bound, bound)
    b2 = jax.random.uniform(ks[3], (c,), jnp.float32, -bound, bound)
    g1 = 1.0 + 0.1 * jax.random.normal(ks[4], (c,), jnp.float32)
    be1 = 0.1 * jax.random.normal(ks[5], (c,), jnp.float32)
    g2 = 1.0 + 0.1 * jax.random.normal(ks[6], (c,), jnp.float32)
    be2 = 0.1 * jax.random.normal(ks[7], (c,), jnp.float32)
    return (w1, b1, g1, be1, w2, b2, g2, be2)


if __name__ == "__main__":
    hidden_size = 8
    batch, spatial = 2, 16          # W*C = 128 -> lane-dense elementwise pass

    key = jax.random.PRNGKey(0)
    k_x, k_p = jax.random.split(key)
    x = jax.random.normal(k_x, (batch, hidden_size, spatial, spatial),
                          jnp.float32)
    params = init_params(k_p, hidden_size)

    out = jax.jit(residual_block_forward)(x, params)
    out = jax.block_until_ready(out)

    ref = _reference(x, params)
    assert out.shape == ref.shape and out.dtype == jnp.float32
    # bf16 matmul operands (f32 accumulation) => looser tolerance vs f32 ref.
    max_diff = float(jnp.max(jnp.abs(out - ref)))
    assert jnp.allclose(out, ref, atol=5e-2, rtol=5e-2), (
        "max abs diff = %g" % max_diff)

    print("KERNEL_OK")
</pallas_src>

<mosaic_0001>
module attributes {stable_mosaic.version = 11 : i64} {
  func.func @_conv_stats_kernel(%arg0: i32, %arg1: memref<1x18x18x8xbf16, #tpu.memory_space<vmem>>, %arg2: memref<9x8x8xbf16, #tpu.memory_space<vmem>>, %arg3: memref<1x16x16x8xf32, #tpu.memory_space<vmem>>, %arg4: memref<2x8xf32, #tpu.memory_space<vmem>>) attributes {dimension_semantics = [#tpu.dimension_semantics<arbitrary>], iteration_bounds = array<i64: 2>, scalar_prefetch = 0 : i64, scratch_operands = 0 : i64, tpu.core_type = #tpu.core_type<tc>, window_params = [{transform_indices = @transform_0, window_bounds = array<i64: 1, 18, 18, 8>}, {pipeline_mode = #tpu.pipeline_mode<synchronous>, transform_indices = @transform_1, window_bounds = array<i64: 9, 8, 8>}, {transform_indices = @transform_2, window_bounds = array<i64: 1, 16, 16, 8>}, {pipeline_mode = #tpu.pipeline_mode<synchronous>, transform_indices = @transform_3, window_bounds = array<i64: 2, 8>}]} {
    %c0_i32 = arith.constant 0 : i32
    %0 = arith.cmpi eq, %arg0, %c0_i32 : i32
    %1 = arith.extui %0 : i1 to i32
    %c0_i32_0 = arith.constant 0 : i32
    %2 = arith.cmpi ne, %1, %c0_i32_0 : i32
    scf.if %2 {
      %cst_42 = arith.constant 0.000000e+00 : f32
      %71 = vector.broadcast %cst_42 : f32 to vector<2x8xf32>
      %c0_43 = arith.constant 0 : index
      %c0_44 = arith.constant 0 : index
      %72 = vector.load %arg4[%c0_43, %c0_44] : memref<2x8xf32, #tpu.memory_space<vmem>>, vector<2x8xf32>
      tpu.vector_store %arg4[%c0_43, %c0_44], %71 {strides = array<i32>} : memref<2x8xf32, #tpu.memory_space<vmem>>, vector<2x8xf32>,
    } else {
    }
    %c0 = arith.constant 0 : index
    %c0_1 = arith.constant 0 : index
    %c0_2 = arith.constant 0 : index
    %c0_3 = arith.constant 0 : index
    %3 = vector.load %arg1[%c0, %c0_1, %c0_2, %c0_3] : memref<1x18x18x8xbf16, #tpu.memory_space<vmem>>, vector<1x18x18x8xbf16>
    %4 = vector.shape_cast %3 : vector<1x18x18x8xbf16> to vector<18x18x8xbf16>
    %cst = arith.constant 0.000000e+00 : f32
    %5 = vector.broadcast %cst : f32 to vector<256x8xf32>
    %6 = vector.extract_strided_slice %4 {offsets = [0, 0, 0], sizes = [16, 16, 8], strides = [1, 1, 1]} : vector<18x18x8xbf16> to vector<16x16x8xbf16>
    %7 = vector.shape_cast %6 : vector<16x16x8xbf16> to vector<256x8xbf16>
    %c0_4 = arith.constant 0 : index
    %c0_5 = arith.constant 0 : index
    %c0_6 = arith.constant 0 : index
    %8 = vector.load %arg2[%c0_4, %c0_5, %c0_6] : memref<9x8x8xbf16, #tpu.memory_space<vmem>>, vector<1x8x8xbf16>
    %9 = vector.shape_cast %8 : vector<1x8x8xbf16> to vector<8x8xbf16>
    %cst_7 = arith.constant dense<0.000000e+00> : vector<256x8xf32>
    %10 = tpu.matmul %7, %9, %cst_7 {dimension_numbers = #tpu.dot_dimension_numbers<[1], [0], [0], [1], [0, 0, 1, 1], [], []>} : vector<256x8xbf16>, vector<8x8xbf16>, vector<256x8xf32> -> vector<256x8xf32>
    %11 = arith.addf %5, %10 : vector<256x8xf32>
    %12 = vector.extract_strided_slice %4 {offsets = [0, 1, 0], sizes = [16, 16, 8], strides = [1, 1, 1]} : vector<18x18x8xbf16> to vector<16x16x8xbf16>
    %13 = vector.shape_cast %12 : vector<16x16x8xbf16> to vector<256x8xbf16>
    %c1 = arith.constant 1 : index
    %c0_8 = arith.constant 0 : index
    %c0_9 = arith.constant 0 : index
    %14 = vector.load %arg2[%c1, %c0_8, %c0_9] : memref<9x8x8xbf16, #tpu.memory_space<vmem>>, vector<1x8x8xbf16>
    %15 = vector.shape_cast %14 : vector<1x8x8xbf16> to vector<8x8xbf16>
    %cst_10 = arith.constant dense<0.000000e+00> : vector<256x8xf32>
    %16 = tpu.matmul %13, %15, %cst_10 {dimension_numbers = #tpu.dot_dimension_numbers<[1], [0], [0], [1], [0, 0, 1, 1], [], []>} : vector<256x8xbf16>, vector<8x8xbf16>, vector<256x8xf32> -> vector<256x8xf32>
    %17 = arith.addf %11, %16 : vector<256x8xf32>
    %18 = vector.extract_strided_slice %4 {offsets = [0, 2, 0], sizes = [16, 16, 8], strides = [1, 1, 1]} : vector<18x18x8xbf16> to vector<16x16x8xbf16>
    %19 = vector.shape_cast %18 : vector<16x16x8xbf16> to vector<256x8xbf16>
    %c2 = arith.constant 2 : index
    %c0_11 = arith.constant 0 : index
    %c0_12 = arith.constant 0 : index
    %20 = vector.load %arg2[%c2, %c0_11, %c0_12] : memref<9x8x8xbf16, #tpu.memory_space<vmem>>, vector<1x8x8xbf16>
    %21 = vector.shape_cast %20 : vector<1x8x8xbf16> to vector<8x8xbf16>
    %cst_13 = arith.constant dense<0.000000e+00> : vector<256x8xf32>
    %22 = tpu.matmul %19, %21, %cst_13 {dimension_numbers = #tpu.dot_dimension_numbers<[1], [0], [0], [1], [0, 0, 1, 1], [], []>} : vector<256x8xbf16>, vector<8x8xbf16>, vector<256x8xf32> -> vector<256x8xf32>
    %23 = arith.addf %17, %22 : vector<256x8xf32>
    %24 = vector.extract_strided_slice %4 {offsets = [1, 0, 0], sizes = [16, 16, 8], strides = [1, 1, 1]} : vector<18x18x8xbf16> to vector<16x16x8xbf16>
    %25 = vector.shape_cast %24 : vector<16x16x8xbf16> to vector<256x8xbf16>
    %c3 = arith.constant 3 : index
    %c0_14 = arith.constant 0 : index
    %c0_15 = arith.constant 0 : index
    %26 = vector.load %arg2[%c3, %c0_14, %c0_15] : memref<9x8x8xbf16, #tpu.memory_space<vmem>>, vector<1x8x8xbf16>
    %27 = vector.shape_cast %26 : vector<1x8x8xbf16> to vector<8x8xbf16>
    %cst_16 = arith.constant dense<0.000000e+00> : vector<256x8xf32>
    %28 = tpu.matmul %25, %27, %cst_16 {dimension_numbers = #tpu.dot_dimension_numbers<[1], [0], [0], [1], [0, 0, 1, 1], [], []>} : vector<256x8xbf16>, vector<8x8xbf16>, vector<256x8xf32> -> vector<256x8xf32>
    %29 = arith.addf %23, %28 : vector<256x8xf32>
    %30 = vector.extract_strided_slice %4 {offsets = [1, 1, 0], sizes = [16, 16, 8], strides = [1, 1, 1]} : vector<18x18x8xbf16> to vector<16x16x8xbf16>
    %31 = vector.shape_cast %30 : vector<16x16x8xbf16> to vector<256x8xbf16>
    %c4 = arith.constant 4 : index
    %c0_17 = arith.constant 0 : index
    %c0_18 = arith.constant 0 : index
    %32 = vector.load %arg2[%c4, %c0_17, %c0_18] : memref<9x8x8xbf16, #tpu.memory_space<vmem>>, vector<1x8x8xbf16>
    %33 = vector.shape_cast %32 : vector<1x8x8xbf16> to vector<8x8xbf16>
    %cst_19 = arith.constant dense<0.000000e+00> : vector<256x8xf32>
    %34 = tpu.matmul %31, %33, %cst_19 {dimension_numbers = #tpu.dot_dimension_numbers<[1], [0], [0], [1], [0, 0, 1, 1], [], []>} : vector<256x8xbf16>, vector<8x8xbf16>, vector<256x8xf32> -> vector<256x8xf32>
    %35 = arith.addf %29, %34 : vector<256x8xf32>
    %36 = vector.extract_strided_slice %4 {offsets = [1, 2, 0], sizes = [16, 16, 8], strides = [1, 1, 1]} : vector<18x18x8xbf16> to vector<16x16x8xbf16>
    %37 = vector.shape_cast %36 : vector<16x16x8xbf16> to vector<256x8xbf16>
    %c5 = arith.constant 5 : index
    %c0_20 = arith.constant 0 : index
    %c0_21 = arith.constant 0 : index
    %38 = vector.load %arg2[%c5, %c0_20, %c0_21] : memref<9x8x8xbf16, #tpu.memory_space<vmem>>, vector<1x8x8xbf16>
    %39 = vector.shape_cast %38 : vector<1x8x8xbf16> to vector<8x8xbf16>
    %cst_22 = arith.constant dense<0.000000e+00> : vector<256x8xf32>
    %40 = tpu.matmul %37, %39, %cst_22 {dimension_numbers = #tpu.dot_dimension_numbers<[1], [0], [0], [1], [0, 0, 1, 1], [], []>} : vector<256x8xbf16>, vector<8x8xbf16>, vector<256x8xf32> -> vector<256x8xf32>
    %41 = arith.addf %35, %40 : vector<256x8xf32>
    %42 = vector.extract_strided_slice %4 {offsets = [2, 0, 0], sizes = [16, 16, 8], strides = [1, 1, 1]} : vector<18x18x8xbf16> to vector<16x16x8xbf16>
    %43 = vector.shape_cast %42 : vector<16x16x8xbf16> to vector<256x8xbf16>
    %c6 = arith.constant 6 : index
    %c0_23 = arith.constant 0 : index
    %c0_24 = arith.constant 0 : index
    %44 = vector.load %arg2[%c6, %c0_23, %c0_24] : memref<9x8x8xbf16, #tpu.memory_space<vmem>>, vector<1x8x8xbf16>
    %45 = vector.shape_cast %44 : vector<1x8x8xbf16> to vector<8x8xbf16>
    %cst_25 = arith.constant dense<0.000000e+00> : vector<256x8xf32>
    %46 = tpu.matmul %43, %45, %cst_25 {dimension_numbers = #tpu.dot_dimension_numbers<[1], [0], [0], [1], [0, 0, 1, 1], [], []>} : vector<256x8xbf16>, vector<8x8xbf16>, vector<256x8xf32> -> vector<256x8xf32>
    %47 = arith.addf %41, %46 : vector<256x8xf32>
    %48 = vector.extract_strided_slice %4 {offsets = [2, 1, 0], sizes = [16, 16, 8], strides = [1, 1, 1]} : vector<18x18x8xbf16> to vector<16x16x8xbf16>
    %49 = vector.shape_cast %48 : vector<16x16x8xbf16> to vector<256x8xbf16>
    %c7 = arith.constant 7 : index
    %c0_26 = arith.constant 0 : index
    %c0_27 = arith.constant 0 : index
    %50 = vector.load %arg2[%c7, %c0_26, %c0_27] : memref<9x8x8xbf16, #tpu.memory_space<vmem>>, vector<1x8x8xbf16>
    %51 = vector.shape_cast %50 : vector<1x8x8xbf16> to vector<8x8xbf16>
    %cst_28 = arith.constant dense<0.000000e+00> : vector<256x8xf32>
    %52 = tpu.matmul %49, %51, %cst_28 {dimension_numbers = #tpu.dot_dimension_numbers<[1], [0], [0], [1], [0, 0, 1, 1], [], []>} : vector<256x8xbf16>, vector<8x8xbf16>, vector<256x8xf32> -> vector<256x8xf32>
    %53 = arith.addf %47, %52 : vector<256x8xf32>
    %54 = vector.extract_strided_slice %4 {offsets = [2, 2, 0], sizes = [16, 16, 8], strides = [1, 1, 1]} : vector<18x18x8xbf16> to vector<16x16x8xbf16>
    %55 = vector.shape_cast %54 : vector<16x16x8xbf16> to vector<256x8xbf16>
    %c8 = arith.constant 8 : index
    %c0_29 = arith.constant 0 : index
    %c0_30 = arith.constant 0 : index
    %56 = vector.load %arg2[%c8, %c0_29, %c0_30] : memref<9x8x8xbf16, #tpu.memory_space<vmem>>, vector<1x8x8xbf16>
    %57 = vector.shape_cast %56 : vector<1x8x8xbf16> to vector<8x8xbf16>
    %cst_31 = arith.constant dense<0.000000e+00> : vector<256x8xf32>
    %58 = tpu.matmul %55, %57, %cst_31 {dimension_numbers = #tpu.dot_dimension_numbers<[1], [0], [0], [1], [0, 0, 1, 1], [], []>} : vector<256x8xbf16>, vector<8x8xbf16>, vector<256x8xf32> -> vector<256x8xf32>
    %59 = arith.addf %53, %58 : vector<256x8xf32>
    %60 = vector.shape_cast %59 : vector<256x8xf32> to vector<1x16x16x8xf32>
    %c0_32 = arith.constant 0 : index
    %c0_33 = arith.constant 0 : index
    %c0_34 = arith.constant 0 : index
    %c0_35 = arith.constant 0 : index
    %61 = vector.load %arg3[%c0_32, %c0_33, %c0_34, %c0_35] : memref<1x16x16x8xf32, #tpu.memory_space<vmem>>, vector<1x16x16x8xf32>
    tpu.vector_store %arg3[%c0_32, %c0_33, %c0_34, %c0_35], %60 {strides = array<i32>} : memref<1x16x16x8xf32, #tpu.memory_space<vmem>>, vector<1x16x16x8xf32>,
    %cst_36 = arith.constant dense<0.000000e+00> : vector<8xf32>
    %62 = vector.multi_reduction <add>, %59, %cst_36 [0] : vector<256x8xf32> to vector<8xf32>
    %63 = vector.shape_cast %62 : vector<8xf32> to vector<1x8xf32>
    %64 = arith.mulf %59, %59 : vector<256x8xf32>
    %cst_37 = arith.constant dense<0.000000e+00> : vector<8xf32>
    %65 = vector.multi_reduction <add>, %64, %cst_37 [0] : vector<256x8xf32> to vector<8xf32>
    %66 = vector.shape_cast %65 : vector<8xf32> to vector<1x8xf32>
    %c0_38 = arith.constant 0 : index
    %c0_39 = arith.constant 0 : index
    %67 = vector.load %arg4[%c0_38, %c0_39] : memref<2x8xf32, #tpu.memory_space<vmem>>, vector<2x8xf32>
    %68 = tpu.concatenate %63, %66 in 0 : vector<1x8xf32>, vector<1x8xf32> -> vector<2x8xf32>
    %69 = arith.addf %67, %68 : vector<2x8xf32>
    %c0_40 = arith.constant 0 : index
    %c0_41 = arith.constant 0 : index
    %70 = vector.load %arg4[%c0_40, %c0_41] : memref<2x8xf32, #tpu.memory_space<vmem>>, vector<2x8xf32>
    tpu.vector_store %arg4[%c0_40, %c0_41], %69 {strides = array<i32>} : memref<2x8xf32, #tpu.memory_space<vmem>>, vector<2x8xf32>,
    return
  }
  func.func @transform_0(%arg0: i32) -> (i32, i32, i32, i32) {
    %c0_i32 = arith.constant 0 : i32
    %c0_i32_0 = arith.constant 0 : i32
    %c0_i32_1 = arith.constant 0 : i32
    %c0_i32_2 = arith.constant 0 : i32
    return %arg0, %c0_i32, %c0_i32_0, %c0_i32_1 : i32, i32, i32, i32
  }
  func.func @transform_1(%arg0: i32) -> (i32, i32, i32) {
    %c0_i32 = arith.constant 0 : i32
    %c0_i32_0 = arith.constant 0 : i32
    %c0_i32_1 = arith.constant 0 : i32
    %c0_i32_2 = arith.constant 0 : i32
    return %c0_i32, %c0_i32_0, %c0_i32_1 : i32, i32, i32
  }
  func.func @transform_2(%arg0: i32) -> (i32, i32, i32, i32) {
    %c0_i32 = arith.constant 0 : i32
    %c0_i32_0 = arith.constant 0 : i32
    %c0_i32_1 = arith.constant 0 : i32
    %c0_i32_2 = arith.constant 0 : i32
    return %arg0, %c0_i32, %c0_i32_0, %c0_i32_1 : i32, i32, i32, i32
  }
  func.func @transform_3(%arg0: i32) -> (i32, i32) {
    %c0_i32 = arith.constant 0 : i32
    %c0_i32_0 = arith.constant 0 : i32
    %c0_i32_1 = arith.constant 0 : i32
    return %c0_i32, %c0_i32_0 : i32, i32
  }
}

module attributes {stable_mosaic.version = 11 : i64} {
  func.func @_bn_act_kernel(%arg0: i32, %arg1: memref<32x128xf32, #tpu.memory_space<vmem>>, %arg2: memref<1x128xf32, #tpu.memory_space<vmem>>, %arg3: memref<1x128xf32, #tpu.memory_space<vmem>>, %arg4: memref<32x128xf32, #tpu.memory_space<vmem>>) attributes {dimension_semantics = [#tpu.dimension_semantics<parallel>], iteration_bounds = array<i64: 1>, scalar_prefetch = 0 : i64, scratch_operands = 0 : i64, tpu.core_type = #tpu.core_type<tc>, window_params = [{transform_indices = @transform_0, window_bounds = array<i64: 32, 128>}, {pipeline_mode = #tpu.pipeline_mode<synchronous>, transform_indices = @transform_1, window_bounds = array<i64: 1, 128>}, {pipeline_mode = #tpu.pipeline_mode<synchronous>, transform_indices = @transform_2, window_bounds = array<i64: 1, 128>}, {transform_indices = @transform_3, window_bounds = array<i64: 32, 128>}]} {
    %c0 = arith.constant 0 : index
    %c0_0 = arith.constant 0 : index
    %0 = vector.load %arg1[%c0, %c0_0] : memref<32x128xf32, #tpu.memory_space<vmem>>, vector<32x128xf32>
    %c0_1 = arith.constant 0 : index
    %c0_2 = arith.constant 0 : index
    %1 = vector.load %arg2[%c0_1, %c0_2] : memref<1x128xf32, #tpu.memory_space<vmem>>, vector<1x128xf32>
    %2 = vector.broadcast %1 : vector<1x128xf32> to vector<32x128xf32>
    %3 = arith.mulf %0, %2 : vector<32x128xf32>
    %c0_3 = arith.constant 0 : index
    %c0_4 = arith.constant 0 : index
    %4 = vector.load %arg3[%c0_3, %c0_4] : memref<1x128xf32, #tpu.memory_space<vmem>>, vector<1x128xf32>
    %5 = vector.broadcast %4 : vector<1x128xf32> to vector<32x128xf32>
    %6 = arith.addf %3, %5 : vector<32x128xf32>
    %cst = arith.constant 0.000000e+00 : f32
    %7 = vector.broadcast %cst : f32 to vector<32x128xf32>
    %8 = arith.cmpf ogt, %6, %7 : vector<32x128xf32>
    %9 = math.exp %6 : vector<32x128xf32>
    %cst_5 = arith.constant 1.000000e+00 : f32
    %10 = vector.broadcast %cst_5 : f32 to vector<32x128xf32>
    %11 = arith.subf %9, %10 : vector<32x128xf32>
    %cst_6 = arith.constant 1.67326319 : f32
    %12 = vector.broadcast %cst_6 : f32 to vector<32x128xf32>
    %13 = arith.mulf %12, %11 : vector<32x128xf32>
    %14 = arith.select %8, %6, %13 : vector<32x128xi1>, vector<32x128xf32>
    %cst_7 = arith.constant 1.05070102 : f32
    %15 = vector.broadcast %cst_7 : f32 to vector<32x128xf32>
    %16 = arith.mulf %15, %14 : vector<32x128xf32>
    %c0_8 = arith.constant 0 : index
    %c0_9 = arith.constant 0 : index
    %17 = vector.load %arg4[%c0_8, %c0_9] : memref<32x128xf32, #tpu.memory_space<vmem>>, vector<32x128xf32>
    tpu.vector_store %arg4[%c0_8, %c0_9], %16 {strides = array<i32>} : memref<32x128xf32, #tpu.memory_space<vmem>>, vector<32x128xf32>,
    return
  }
  func.func @transform_0(%arg0: i32) -> (i32, i32) {
    %c0_i32 = arith.constant 0 : i32
    %c0_i32_0 = arith.constant 0 : i32
    return %arg0, %c0_i32 : i32, i32
  }
  func.func @transform_1(%arg0: i32) -> (i32, i32) {
    %c0_i32 = arith.constant 0 : i32
    %c0_i32_0 = arith.constant 0 : i32
    %c0_i32_1 = arith.constant 0 : i32
    return %c0_i32, %c0_i32_0 : i32, i32
  }
  func.func @transform_2(%arg0: i32) -> (i32, i32) {
    %c0_i32 = arith.constant 0 : i32
    %c0_i32_0 = arith.constant 0 : i32
    %c0_i32_1 = arith.constant 0 : i32
    return %c0_i32, %c0_i32_0 : i32, i32
  }
  func.func @transform_3(%arg0: i32) -> (i32, i32) {
    %c0_i32 = arith.constant 0 : i32
    %c0_i32_0 = arith.constant 0 : i32
    return %arg0, %c0_i32 : i32, i32
  }
}

module attributes {stable_mosaic.version = 11 : i64} {
  func.func @_bn_add_act_kernel(%arg0: i32, %arg1: memref<32x128xf32, #tpu.memory_space<vmem>>, %arg2: memref<1x128xf32, #tpu.memory_space<vmem>>, %arg3: memref<1x128xf32, #tpu.memory_space<vmem>>, %arg4: memref<32x128xf32, #tpu.memory_space<vmem>>, %arg5: memref<32x128xf32, #tpu.memory_space<vmem>>) attributes {dimension_semantics = [#tpu.dimension_semantics<parallel>], iteration_bounds = array<i64: 1>, scalar_prefetch = 0 : i64, scratch_operands = 0 : i64, tpu.core_type = #tpu.core_type<tc>, window_params = [{transform_indices = @transform_0, window_bounds = array<i64: 32, 128>}, {pipeline_mode = #tpu.pipeline_mode<synchronous>, transform_indices = @transform_1, window_bounds = array<i64: 1, 128>}, {pipeline_mode = #tpu.pipeline_mode<synchronous>, transform_indices = @transform_2, window_bounds = array<i64: 1, 128>}, {transform_indices = @transform_3, window_bounds = array<i64: 32, 128>}, {transform_indices = @transform_4, window_bounds = array<i64: 32, 128>}]} {
    %c0 = arith.constant 0 : index
    %c0_0 = arith.constant 0 : index
    %0 = vector.load %arg1[%c0, %c0_0] : memref<32x128xf32, #tpu.memory_space<vmem>>, vector<32x128xf32>
    %c0_1 = arith.constant 0 : index
    %c0_2 = arith.constant 0 : index
    %1 = vector.load %arg2[%c0_1, %c0_2] : memref<1x128xf32, #tpu.memory_space<vmem>>, vector<1x128xf32>
    %2 = vector.broadcast %1 : vector<1x128xf32> to vector<32x128xf32>
    %3 = arith.mulf %0, %2 : vector<32x128xf32>
    %c0_3 = arith.constant 0 : index
    %c0_4 = arith.constant 0 : index
    %4 = vector.load %arg3[%c0_3, %c0_4] : memref<1x128xf32, #tpu.memory_space<vmem>>, vector<1x128xf32>
    %5 = vector.broadcast %4 : vector<1x128xf32> to vector<32x128xf32>
    %6 = arith.addf %3, %5 : vector<32x128xf32>
    %c0_5 = arith.constant 0 : index
    %c0_6 = arith.constant 0 : index
    %7 = vector.load %arg4[%c0_5, %c0_6] : memref<32x128xf32, #tpu.memory_space<vmem>>, vector<32x128xf32>
    %8 = arith.addf %6, %7 : vector<32x128xf32>
    %cst = arith.constant 0.000000e+00 : f32
    %9 = vector.broadcast %cst : f32 to vector<32x128xf32>
    %10 = arith.cmpf ogt, %8, %9 : vector<32x128xf32>
    %11 = math.exp %8 : vector<32x128xf32>
    %cst_7 = arith.constant 1.000000e+00 : f32
    %12 = vector.broadcast %cst_7 : f32 to vector<32x128xf32>
    %13 = arith.subf %11, %12 : vector<32x128xf32>
    %cst_8 = arith.constant 1.67326319 : f32
    %14 = vector.broadcast %cst_8 : f32 to vector<32x128xf32>
    %15 = arith.mulf %14, %13 : vector<32x128xf32>
    %16 = arith.select %10, %8, %15 : vector<32x128xi1>, vector<32x128xf32>
    %cst_9 = arith.constant 1.05070102 : f32
    %17 = vector.broadcast %cst_9 : f32 to vector<32x128xf32>
    %18 = arith.mulf %17, %16 : vector<32x128xf32>
    %c0_10 = arith.constant 0 : index
    %c0_11 = arith.constant 0 : index
    %19 = vector.load %arg5[%c0_10, %c0_11] : memref<32x128xf32, #tpu.memory_space<vmem>>, vector<32x128xf32>
    tpu.vector_store %arg5[%c0_10, %c0_11], %18 {strides = array<i32>} : memref<32x128xf32, #tpu.memory_space<vmem>>, vector<32x128xf32>,
    return
  }
  func.func @transform_0(%arg0: i32) -> (i32, i32) {
    %c0_i32 = arith.constant 0 : i32
    %c0_i32_0 = arith.constant 0 : i32
    return %arg0, %c0_i32 : i32, i32
  }
  func.func @transform_1(%arg0: i32) -> (i32, i32) {
    %c0_i32 = arith.constant 0 : i32
    %c0_i32_0 = arith.constant 0 : i32
    %c0_i32_1 = arith.constant 0 : i32
    return %c0_i32, %c0_i32_0 : i32, i32
  }
  func.func @transform_2(%arg0: i32) -> (i32, i32) {
    %c0_i32 = arith.constant 0 : i32
    %c0_i32_0 = arith.constant 0 : i32
    %c0_i32_1 = arith.constant 0 : i32
    return %c0_i32, %c0_i32_0 : i32, i32
  }
  func.func @transform_3(%arg0: i32) -> (i32, i32) {
    %c0_i32 = arith.constant 0 : i32
    %c0_i32_0 = arith.constant 0 : i32
    return %arg0, %c0_i32 : i32, i32
  }
  func.func @transform_4(%arg0: i32) -> (i32, i32) {
    %c0_i32 = arith.constant 0 : i32
    %c0_i32_0 = arith.constant 0 : i32
    return %arg0, %c0_i32 : i32, i32
  }
}

</mosaic_0001>

<llo_original>
// kernel: tile.23
$region0: #{tile.23}
  #allocation0 [shape = 's32[1]{0}', space=sflag, size = 0x4, scoped, tag = 'scoped memory for tile.23']
  %s0 = inlined_call_operand.vmem [shape: f32[8], index: 0, kind: input, shape index: {}]
  %s1 = inlined_call_operand.vmem [shape: f32[16,8], index: 1, kind: output, shape index: {}]
  // Predicated region
  $region2: #{tile.23} parent=0 // pred_check
    _
  $region3: #{tile.23} parent=0 // pred_check_branch
    %3 = sbr.rel (0) target = $region5
  $region4: #{tile.23} parent=0 // pred_region
    _
  $region5: #{tile.23} parent=0 // pred_fallthru
    _
  %v4 = vld [vmem:[%s0] ss:$0 sm:$0xff]
  %5 = vst [vmem:[%s1] sm:$0xff] %v4
  %s6 = scalar_lea.vmem %s1, 8
  %7 = vst [vmem:[%s6] sm:$0xff] %v4

// kernel: tile.24
$region0: #{tile.24}
  %s0 = inlined_call_operand.vmem [shape: f32[16,8], index: 0, kind: input, shape index: {}]
  %s1 = inlined_call_operand.vmem [shape: f32[1,128], index: 1, kind: output, shape index: {}]
  $region1: #{tile.24} parent=0
    #allocation0 [shape = 'u8[4096]{0}', space=vmem, size = 0x1000, scoped, tag = 'scoped mem for output reshape']
    %v2 = vld [vmem:[%s0] sm:$0x1]
    %vm3 = vcmask 64512
    %4 = vst.msk [vmem:[#allocation0] sm:$0x1] %vm3, %v2
    %s5 = scalar_lea.vmem %s0, 15
    %v6 = vld [vmem:[%s5] sm:$0x1]
    %7 = vrot.lane.b32.xlu0 %v6, 120
    %v8 = vpop.permute.xlu0 %7
    %vm9 = vcmask 1048512
    %10 = vst.msk [vmem:[#allocation0] sm:$0x1] %vm9, %v8
    %s11 = scalar_lea.vmem %s0, 14
    %v12 = vld [vmem:[%s11] sm:$0x1]
    %13 = vrot.lane.b32.xlu0 %v12, 112
    %v14 = vpop.permute.xlu0 %13
    %vm15 = vcmask 982912
    %16 = vst.msk [vmem:[#allocation0] sm:$0x1] %vm15, %v14
    %s17 = scalar_lea.vmem %s0, 13
    %v18 = vld [vmem:[%s17] sm:$0x1]
    %19 = vrot.lane.b32.xlu0 %v18, 104
    %v20 = vpop.permute.xlu0 %19
    %vm21 = vcmask 917312
    %22 = vst.msk [vmem:[#allocation0] sm:$0x1] %vm21, %v20
    %s23 = scalar_lea.vmem %s0, 12
    %v24 = vld [vmem:[%s23] sm:$0x1]
    %25 = vrot.lane.b32.xlu0 %v24, 96
    %v26 = vpop.permute.xlu0 %25
    %vm27 = vcmask 851712
    %28 = vst.msk [vmem:[#allocation0] sm:$0x1] %vm27, %v26
    %s29 = scalar_lea.vmem %s0, 11
    %v30 = vld [vmem:[%s29] sm:$0x1]
    %31 = vrot.lane.b32.xlu0 %v30, 88
    %v32 = vpop.permute.xlu0 %31
    %vm33 = vcmask 786112
    %34 = vst.msk [vmem:[#allocation0] sm:$0x1] %vm33, %v32
    %s35 = scalar_lea.vmem %s0, 10
    %v36 = vld [vmem:[%s35] sm:$0x1]
    %37 = vrot.lane.b32.xlu0 %v36, 80
    %v38 = vpop.permute.xlu0 %37
    %vm39 = vcmask 720512
    %40 = vst.msk [vmem:[#allocation0] sm:$0x1] %vm39, %v38
    %s41 = scalar_lea.vmem %s0, 9
    %v42 = vld [vmem:[%s41] sm:$0x1]
    %43 = vrot.lane.b32.xlu0 %v42, 72
    %v44 = vpop.permute.xlu0 %43
    %vm45 = vcmask 654912
    %46 = vst.msk [vmem:[#allocation0] sm:$0x1] %vm45, %v44
    %s47 = scalar_lea.vmem %s0, 8
    %v48 = vld [vmem:[%s47] sm:$0x1]
    %49 = vrot.lane.b32.xlu0 %v48, 64
    %v50 = vpop.permute.xlu0 %49
    %vm51 = vcmask 589312
    %52 = vst.msk [vmem:[#allocation0] sm:$0x1] %vm51, %v50
    %s53 = scalar_lea.vmem %s0, 7
    %v54 = vld [vmem:[%s53] sm:$0x1]
    %55 = vrot.lane.b32.xlu0 %v54, 56
    %v56 = vpop.permute.xlu0 %55
    %vm57 = vcmask 523712
    %58 = vst.msk [vmem:[#allocation0] sm:$0x1] %vm57, %v56
    %s59 = scalar_lea.vmem %s0, 6
    %v60 = vld [vmem:[%s59] sm:$0x1]
    %61 = vrot.lane.b32.xlu0 %v60, 48
    %v62 = vpop.permute.xlu0 %61
    %vm63 = vcmask 458112
    %64 = vst.msk [vmem:[#allocation0] sm:$0x1] %vm63, %v62
    %s65 = scalar_lea.vmem %s0, 5
    %v66 = vld [vmem:[%s65] sm:$0x1]
    %67 = vrot.lane.b32.xlu0 %v66, 40
    %v68 = vpop.permute.xlu0 %67
    %vm69 = vcmask 392512
    %70 = vst.msk [vmem:[#allocation0] sm:$0x1] %vm69, %v68
    %s71 = scalar_lea.vmem %s0, 4
    %v72 = vld [vmem:[%s71] sm:$0x1]
    %73 = vrot.lane.b32.xlu0 %v72, 32
    %v74 = vpop.permute.xlu0 %73
    %vm75 = vcmask 326912
    %76 = vst.msk [vmem:[#allocation0] sm:$0x1] %vm75, %v74
    %s77 = scalar_lea.vmem %s0, 3
    %v78 = vld [vmem:[%s77] sm:$0x1]
    %79 = vrot.lane.b32.xlu0 %v78, 24
    %v80 = vpop.permute.xlu0 %79
    %vm81 = vcmask 261312
    %82 = vst.msk [vmem:[#allocation0] sm:$0x1] %vm81, %v80
    %s83 = scalar_lea.vmem %s0, 2
    %v84 = vld [vmem:[%s83] sm:$0x1]
    %85 = vrot.lane.b32.xlu0 %v84, 16
    %v86 = vpop.permute.xlu0 %85
    %vm87 = vcmask 195712
    %88 = vst.msk [vmem:[#allocation0] sm:$0x1] %vm87, %v86
    %s89 = scalar_lea.vmem %s0, 1
    %v90 = vld [vmem:[%s89] sm:$0x1]
    %91 = vrot.lane.b32.xlu0 %v90, 8
    %v92 = vpop.permute.xlu0 %91
    %vm93 = vcmask 130112
    %94 = vst.msk [vmem:[#allocation0] sm:$0x1] %vm93, %v92
    %s96 = sshllo.u32 0, 1
    %v98 = vld [vmem:[#allocation0] sm:%s96]
    %s99 = sshllo.u32 0, 1
    %100 = vst [vmem:[%s1] sm:%s99] %v98

// kernel: residual_block_forward.5
$region0: #{residual_block_forward.5}
  #allocation0 [shape = 'u32[]', space=smem, size = 0x4, offset = 0x4, fixed_abs, tag = 'smem constant byte address 0x4 - core index']
  #allocation1 [shape = 'u32[144,128]{1,0:T(1,128)}', space=vmem, size = 0x12000, scoped, tag = 'internal scratch']
  %s0 = inlined_call_operand.vmem [shape: f32[32,128], index: 0, kind: input, shape index: {}]
  %s1 = inlined_call_operand.vmem [shape: f32[1,128], index: 1, kind: input, shape index: {}]
  %s2 = inlined_call_operand.vmem [shape: f32[1,128], index: 2, kind: input, shape index: {}]
  %s3 = inlined_call_operand.vmem [shape: f32[32,128], index: 3, kind: output, shape index: {}]
  %s4 = sld [smem:[#allocation0]]
  $region22: #{residual_block_forward.5} parent=0
    _
  %s6 = ssub.s32 1, %s4
  %s7 = scalar_select 0, %s6, %s4
  // Predicated region
  $region2: #{residual_block_forward.5} parent=0 // pred_check
    _
  $region3: #{residual_block_forward.5} parent=0 // pred_check_branch
    %9 = sbr.rel (0) target = $region5
  $region4: #{residual_block_forward.5} parent=0 // pred_region
    _
  $region5: #{residual_block_forward.5} parent=0 // pred_fallthru
    _
  // Predicated region
  $region6: #{residual_block_forward.5} parent=0 // pred_check
    _
  $region7: #{residual_block_forward.5} parent=0 // pred_check_branch
    %11 = sbr.rel (0) target = $region9
  $region8: #{residual_block_forward.5} parent=0 // pred_region
    _
  $region9: #{residual_block_forward.5} parent=0 // pred_fallthru
    _
  // Predicated region
  $region10: #{residual_block_forward.5} parent=0 // pred_check
    _
  $region11: #{residual_block_forward.5} parent=0 // pred_check_branch
    %13 = sbr.rel (0) target = $region13
  $region12: #{residual_block_forward.5} parent=0 // pred_region
    _
  $region13: #{residual_block_forward.5} parent=0 // pred_fallthru
    _
  %v14 = vld [vmem:[%s0] sm:$0xff]
  %v15 = vld [vmem:[%s0 + $0x8] sm:$0xff]
  %v16 = vld [vmem:[%s0 + $0x10] sm:$0xff]
  %v17 = vld [vmem:[%s0 + $0x18] sm:$0xff]
  %v18 = vld [vmem:[%s1] sm:$0x1]
  %v20 = vlaneseq
  %v21 = vshrl.u32 %v20, 7
  %v22 = vsub.s32 0, %v21
  %v23 = vrot.slane %v18, %v22
  %v25 = vmul.f32 %v14, %v23
  %v26 = vmul.f32 %v15, %v23
  %v27 = vmul.f32 %v16, %v23
  %v28 = vmul.f32 %v17, %v23
  %v29 = vld [vmem:[%s2] sm:$0x1]
  %v31 = vlaneseq
  %v32 = vshrl.u32 %v31, 7
  %v33 = vsub.s32 0, %v32
  %v34 = vrot.slane %v29, %v33
  %v36 = vadd.f32 %v25, %v34
  %v37 = vadd.f32 %v26, %v34
  %v38 = vadd.f32 %v27, %v34
  %v39 = vadd.f32 %v28, %v34
  %vm40 = vcmp.gt.f32.partialorder %v36, 0.0
  %vm41 = vcmp.gt.f32.partialorder %v37, 0.0
  %vm42 = vcmp.gt.f32.partialorder %v38, 0.0
  %vm43 = vcmp.gt.f32.partialorder %v39, 0.0
  %v44 = vmul.f32 %v36, 1.442695
  %v45 = vpow.pop %v44
  %v46 = vmul.f32 %v37, 1.442695
  %v47 = vpow.pop %v46
  %v48 = vmul.f32 %v38, 1.442695
  %v49 = vpow.pop %v48
  %v50 = vmul.f32 %v39, 1.442695
  %v51 = vpow.pop %v50
  %v52 = vsub.f32 %v45, 1.0
  %v53 = vsub.f32 %v47, 1.0
  %v54 = vsub.f32 %v49, 1.0
  %v55 = vsub.f32 %v51, 1.0
  %v56 = vmul.f32 %v52, 1.6732632
  %v57 = vmul.f32 %v53, 1.6732632
  %v58 = vmul.f32 %v54, 1.6732632
  %v59 = vmul.f32 %v55, 1.6732632
  %v60 = vsel %vm40, %v36, %v56
  %v61 = vsel %vm41, %v37, %v57
  %v62 = vsel %vm42, %v38, %v58
  %v63 = vsel %vm43, %v39, %v59
  %v64 = vmul.f32 %v60, 1.050701
  %v65 = vmul.f32 %v61, 1.050701
  %v66 = vmul.f32 %v62, 1.050701
  %v67 = vmul.f32 %v63, 1.050701
  %68 = vst [vmem:[%s3] sm:$0xff] %v64
  %69 = vst [vmem:[%s3 + $0x8] sm:$0xff] %v65
  %70 = vst [vmem:[%s3 + $0x10] sm:$0xff] %v66
  %71 = vst [vmem:[%s3 + $0x18] sm:$0xff] %v67
  // Predicated region
  $region14: #{residual_block_forward.5} parent=0 // pred_check
    _
  $region15: #{residual_block_forward.5} parent=0 // pred_check_branch
    %73 = sbr.rel (0) target = $region17
  $region16: #{residual_block_forward.5} parent=0 // pred_region
    _
  $region17: #{residual_block_forward.5} parent=0 // pred_fallthru
    _
  // Predicated region
  $region18: #{residual_block_forward.5} parent=0 // pred_check
    _
  $region19: #{residual_block_forward.5} parent=0 // pred_check_branch
    %75 = sbr.rel (0) target = $region21
  $region20: #{residual_block_forward.5} parent=0 // pred_region
    _
  $region21: #{residual_block_forward.5} parent=0 // pred_fallthru
    _

// kernel: residual_block_forward.7
$region0: #{residual_block_forward.7}
  #allocation0 [shape = 'u32[]', space=smem, size = 0x4, offset = 0x4, fixed_abs, tag = 'smem constant byte address 0x4 - core index']
  #allocation1 [shape = 'u32[144,128]{1,0:T(1,128)}', space=vmem, size = 0x12000, scoped, tag = 'internal scratch']
  %s0 = inlined_call_operand.vmem [shape: f32[32,128], index: 0, kind: input, shape index: {}]
  %s1 = inlined_call_operand.vmem [shape: f32[1,128], index: 1, kind: input, shape index: {}]
  %s2 = inlined_call_operand.vmem [shape: f32[1,128], index: 2, kind: input, shape index: {}]
  %s3 = inlined_call_operand.vmem [shape: f32[32,128], index: 3, kind: input, shape index: {}]
  %s4 = inlined_call_operand.vmem [shape: f32[32,128], index: 4, kind: output, shape index: {}]
  %s5 = sld [smem:[#allocation0]]
  $region26: #{residual_block_forward.7} parent=0
    _
  %s7 = ssub.s32 1, %s5
  %s8 = scalar_select 0, %s7, %s5
  // Predicated region
  $region2: #{residual_block_forward.7} parent=0 // pred_check
    _
  $region3: #{residual_block_forward.7} parent=0 // pred_check_branch
    %10 = sbr.rel (0) target = $region5
  $region4: #{residual_block_forward.7} parent=0 // pred_region
    _
  $region5: #{residual_block_forward.7} parent=0 // pred_fallthru
    _
  // Predicated region
  $region6: #{residual_block_forward.7} parent=0 // pred_check
    _
  $region7: #{residual_block_forward.7} parent=0 // pred_check_branch
    %12 = sbr.rel (0) target = $region9
  $region8: #{residual_block_forward.7} parent=0 // pred_region
    _
  $region9: #{residual_block_forward.7} parent=0 // pred_fallthru
    _
  // Predicated region
  $region10: #{residual_block_forward.7} parent=0 // pred_check
    _
  $region11: #{residual_block_forward.7} parent=0 // pred_check_branch
    %14 = sbr.rel (0) target = $region13
  $region12: #{residual_block_forward.7} parent=0 // pred_region
    _
  $region13: #{residual_block_forward.7} parent=0 // pred_fallthru
    _
  // Predicated region
  $region14: #{residual_block_forward.7} parent=0 // pred_check
    _
  $region15: #{residual_block_forward.7} parent=0 // pred_check_branch
    %16 = sbr.rel (0) target = $region17
  $region16: #{residual_block_forward.7} parent=0 // pred_region
    _
  $region17: #{residual_block_forward.7} parent=0 // pred_fallthru
    _
  %v17 = vld [vmem:[%s0] sm:$0xff]
  %v18 = vld [vmem:[%s0 + $0x8] sm:$0xff]
  %v19 = vld [vmem:[%s0 + $0x10] sm:$0xff]
  %v20 = vld [vmem:[%s0 + $0x18] sm:$0xff]
  %v21 = vld [vmem:[%s1] sm:$0x1]
  %v23 = vlaneseq
  %v24 = vshrl.u32 %v23, 7
  %v25 = vsub.s32 0, %v24
  %v26 = vrot.slane %v21, %v25
  %v28 = vmul.f32 %v17, %v26
  %v29 = vmul.f32 %v18, %v26
  %v30 = vmul.f32 %v19, %v26
  %v31 = vmul.f32 %v20, %v26
  %v32 = vld [vmem:[%s2] sm:$0x1]
  %v34 = vlaneseq
  %v35 = vshrl.u32 %v34, 7
  %v36 = vsub.s32 0, %v35
  %v37 = vrot.slane %v32, %v36
  %v39 = vadd.f32 %v28, %v37
  %v40 = vadd.f32 %v29, %v37
  %v41 = vadd.f32 %v30, %v37
  %v42 = vadd.f32 %v31, %v37
  %v43 = vld [vmem:[%s3] sm:$0xff]
  %v44 = vld [vmem:[%s3 + $0x8] sm:$0xff]
  %v45 = vld [vmem:[%s3 + $0x10] sm:$0xff]
  %v46 = vld [vmem:[%s3 + $0x18] sm:$0xff]
  %v47 = vadd.f32 %v39, %v43
  %v48 = vadd.f32 %v40, %v44
  %v49 = vadd.f32 %v41, %v45
  %v50 = vadd.f32 %v42, %v46
  %vm51 = vcmp.gt.f32.partialorder %v47, 0.0
  %vm52 = vcmp.gt.f32.partialorder %v48, 0.0
  %vm53 = vcmp.gt.f32.partialorder %v49, 0.0
  %vm54 = vcmp.gt.f32.partialorder %v50, 0.0
  %v55 = vmul.f32 %v47, 1.442695
  %v56 = vpow.pop %v55
  %v57 = vmul.f32 %v48, 1.442695
  %v58 = vpow.pop %v57
  %v59 = vmul.f32 %v49, 1.442695
  %v60 = vpow.pop %v59
  %v61 = vmul.f32 %v50, 1.442695
  %v62 = vpow.pop %v61
  %v63 = vsub.f32 %v56, 1.0
  %v64 = vsub.f32 %v58, 1.0
  %v65 = vsub.f32 %v60, 1.0
  %v66 = vsub.f32 %v62, 1.0
  %v67 = vmul.f32 %v63, 1.6732632
  %v68 = vmul.f32 %v64, 1.6732632
  %v69 = vmul.f32 %v65, 1.6732632
  %v70 = vmul.f32 %v66, 1.6732632
  %v71 = vsel %vm51, %v47, %v67
  %v72 = vsel %vm52, %v48, %v68
  %v73 = vsel %vm53, %v49, %v69
  %v74 = vsel %vm54, %v50, %v70
  %v75 = vmul.f32 %v71, 1.050701
  %v76 = vmul.f32 %v72, 1.050701
  %v77 = vmul.f32 %v73, 1.050701
  %v78 = vmul.f32 %v74, 1.050701
  %79 = vst [vmem:[%s4] sm:$0xff] %v75
  %80 = vst [vmem:[%s4 + $0x8] sm:$0xff] %v76
  %81 = vst [vmem:[%s4 + $0x10] sm:$0xff] %v77
  %82 = vst [vmem:[%s4 + $0x18] sm:$0xff] %v78
  // Predicated region
  $region18: #{residual_block_forward.7} parent=0 // pred_check
    _
  $region19: #{residual_block_forward.7} parent=0 // pred_check_branch
    %84 = sbr.rel (0) target = $region21
  $region20: #{residual_block_forward.7} parent=0 // pred_region
    _
  $region21: #{residual_block_forward.7} parent=0 // pred_fallthru
    _
  // Predicated region
  $region22: #{residual_block_forward.7} parent=0 // pred_check
    _
  $region23: #{residual_block_forward.7} parent=0 // pred_check_branch
    %86 = sbr.rel (0) target = $region25
  $region24: #{residual_block_forward.7} parent=0 // pred_region
    _
  $region25: #{residual_block_forward.7} parent=0 // pred_fallthru
    _

// kernel: residual_block_forward.4
$region0: #{residual_block_forward.4}
  #allocation0 [shape = 'u32[]', space=smem, size = 0x4, offset = 0x4, fixed_abs, tag = 'smem constant byte address 0x4 - core index']
  #allocation1 [shape = 'u32[144,128]{1,0:T(1,128)}', space=vmem, size = 0x12000, scoped, tag = 'internal scratch']
  %s0 = inlined_call_operand.vmem [shape: bf16[2,18,18,8], index: 0, kind: input, shape index: {}]
  %s1 = inlined_call_operand.vmem [shape: bf16[9,8,8], index: 1, kind: input, shape index: {}]
  %s2 = inlined_call_operand.vmem [shape: f32[2,16,16,8], index: 2, kind: output, shape index: {0}]
  %s3 = inlined_call_operand.vmem [shape: f32[2,8], index: 3, kind: output, shape index: {1}]
  %4 = xla_tuple %s2, %s3
  %s5 = sld [smem:[#allocation0]]
  $region53: #{residual_block_forward.4} parent=0
    _
  %s7 = ssub.s32 1, %s5
  %s8 = scalar_select 0, %s7, %s5
  loop: start=0, step=1, limit=4
  $region2: #{residual_block_forward.4} parent=0 // loop_pre_header
    _
  $region3: #{residual_block_forward.4} parent=0 // loop_header
    %s10 = sphi 0, %s14
    %p11 = scmp.ge.s32.totalorder %s10, 4
    %s20 = sphi 0, %s22
    %s23 = sphi 0, %s20
    %s24 = sphi 0, %s23
    %s40 = sphi 0, %s24
    %s44 = sphi 0, %s44
    %s46 = sphi 0, %s44
    %s47 = sphi 0, %s46
    %s61 = sphi 0, %s47
    %s67 = sphi 0, %s69
    %s70 = sphi 0, %s67
    %s71 = sphi 0, %s70
    %s87 = sphi 0, %s71
    %s91 = sphi 0, %s91
    %s93 = sphi 0, %s91
    %s94 = sphi 0, %s93
    %s108 = sphi 0, %s94
  $region4: #{residual_block_forward.4} parent=0 // loop_header_branch
    %13 = sbr.rel (%p11) target = $region8
  $region5: #{residual_block_forward.4} parent=0 // loop_body
    %s15 = ssub.s32 %s10, 1
    %s16 = ssub.s32 %s10, 2
    %s17 = sadd.s32 %s10, 1
    %s18 = ssub.s32 %s10, %s17
    %p19 = scmp.eq.s32.totalorder %s18, 0
    %s21 = sadd.s32 %s20, 1
    %s22 = scalar_select %p19, %s20, %s21
    %p25 = pneg %p19
    %p26 = scmp.eq.s32.totalorder %s10, 1
    %p27 = por %p25, %p26
    %p28 = scmp.ne.s32.totalorder %s20, %s23
    %p29 = scmp.eq.s32.totalorder %s10, 0
    %p30 = por %p28, %p29
    %p31 = scmp.ne.s32.totalorder %s20, %s23
    %p32 = scmp.eq.s32.totalorder %s15, 1
    %p33 = por %p31, %p32
    %p34 = scmp.ne.s32.totalorder %s23, %s24
    %p35 = scmp.eq.s32.totalorder %s15, 0
    %p36 = por %p34, %p35
    %p37 = scmp.ne.s32.totalorder %s23, %s24
    %p38 = scmp.eq.s32.totalorder %s16, 1
    %p39 = por %p37, %p38
    %p41 = scmp.ne.s32.totalorder %s24, %s40
    %p42 = scmp.eq.s32.totalorder %s16, 0
    %p43 = por %p41, %p42
    %s45 = sadd.s32 %s44, 1
    %p48 = scmp.eq.s32.totalorder %s10, 1
    %p49 = scmp.ne.s32.totalorder %s44, %s46
    %p50 = scmp.eq.s32.totalorder %s10, 0
    %p51 = por %p49, %p50
    %p52 = scmp.ne.s32.totalorder %s44, %s46
    %p53 = scmp.eq.s32.totalorder %s15, 1
    %p54 = por %p52, %p53
    %p55 = scmp.ne.s32.totalorder %s46, %s47
    %p56 = scmp.eq.s32.totalorder %s15, 0
    %p57 = por %p55, %p56
    %p58 = scmp.ne.s32.totalorder %s46, %s47
    %p59 = scmp.eq.s32.totalorder %s16, 1
    %p60 = por %p58, %p59
    %p62 = scmp.ne.s32.totalorder %s47, %s61
    %p63 = scmp.eq.s32.totalorder %s16, 0
    %p64 = por %p62, %p63
    %s65 = ssub.s32 %s10, %s17
    %p66 = scmp.eq.s32.totalorder %s65, 0
    %s68 = sadd.s32 %s67, 1
    %s69 = scalar_select %p66, %s67, %s68
    %p72 = pneg %p66
    %p73 = scmp.eq.s32.totalorder %s10, 1
    %p74 = por %p72, %p73
    %p75 = scmp.ne.s32.totalorder %s67, %s70
    %p76 = scmp.eq.s32.totalorder %s10, 0
    %p77 = por %p75, %p76
    %p78 = scmp.ne.s32.totalorder %s67, %s70
    %p79 = scmp.eq.s32.totalorder %s15, 1
    %p80 = por %p78, %p79
    %p81 = scmp.ne.s32.totalorder %s70, %s71
    %p82 = scmp.eq.s32.totalorder %s15, 0
    %p83 = por %p81, %p82
    %p84 = scmp.ne.s32.totalorder %s70, %s71
    %p85 = scmp.eq.s32.totalorder %s16, 1
    %p86 = por %p84, %p85
    %p88 = scmp.ne.s32.totalorder %s71, %s87
    %p89 = scmp.eq.s32.totalorder %s16, 0
    %p90 = por %p88, %p89
    %s92 = sadd.s32 %s91, 1
    %p95 = scmp.eq.s32.totalorder %s10, 1
    %p96 = scmp.ne.s32.totalorder %s91, %s93
    %p97 = scmp.eq.s32.totalorder %s10, 0
    %p98 = por %p96, %p97
    %p99 = scmp.ne.s32.totalorder %s91, %s93
    %p100 = scmp.eq.s32.totalorder %s15, 1
    %p101 = por %p99, %p100
    %p102 = scmp.ne.s32.totalorder %s93, %s94
    %p103 = scmp.eq.s32.totalorder %s15, 0
    %p104 = por %p102, %p103
    %p105 = scmp.ne.s32.totalorder %s93, %s94
    %p106 = scmp.eq.s32.totalorder %s16, 1
    %p107 = por %p105, %p106
    %p109 = scmp.ne.s32.totalorder %s94, %s108
    %p110 = scmp.eq.s32.totalorder %s16, 0
    %p111 = por %p109, %p110
    %p112 = scmp.le.s32.totalorder 1, %s10
    %p113 = scmp.lt.s32.totalorder %s10, 3
    %p114 = pnand %p112, %p113
    %p115 = pneg %p114
    // Predicated region
    $region9: #{residual_block_forward.4} parent=5 // pred_check
      _
    $region10: #{residual_block_forward.4} parent=5 // pred_check_branch
      %117 = sbr.rel (%p114) target = $region12
    $region11: #{residual_block_forward.4} parent=5 // pred_region
      %s118 = ssub.s32 %s10, 1
      // Predicated region
      $region13: #{residual_block_forward.4} parent=11 // pred_check
        %p119 = pneg %p57
      $region14: #{residual_block_forward.4} parent=11 // pred_check_branch
        %121 = sbr.rel (%p119) target = $region16
      $region15: #{residual_block_forward.4} parent=11 // pred_region
        _
      $region16: #{residual_block_forward.4} parent=11 // pred_fallthru
        _
    $region12: #{residual_block_forward.4} parent=5 // pred_fallthru
      _
    %p122 = scmp.lt.s32.totalorder %s10, 2
    // Predicated region
    $region17: #{residual_block_forward.4} parent=5 // pred_check
      %p123 = pneg %p122
    $region18: #{residual_block_forward.4} parent=5 // pred_check_branch
      %125 = sbr.rel (%p123) target = $region20
    $region19: #{residual_block_forward.4} parent=5 // pred_region
      // Predicated region
      $region21: #{residual_block_forward.4} parent=19 // pred_check
        %p126 = pneg %p30
      $region22: #{residual_block_forward.4} parent=19 // pred_check_branch
        %128 = sbr.rel (%p126) target = $region24
      $region23: #{residual_block_forward.4} parent=19 // pred_region
        %p129 = scmp.lt.s32.totalorder %s10, 1
        %s130 = scalar_select %p129, %s10, 1
        %s131 = smul.addr %s130, 54
        %s132 = smul.addr %s131, 4
        %s133 = scalar_lea.vmem %s0, %s132
      $region24: #{residual_block_forward.4} parent=19 // pred_fallthru
        _
    $region20: #{residual_block_forward.4} parent=5 // pred_fallthru
      _
    %p134 = scmp.le.s32.totalorder 1, %s10
    %p135 = scmp.lt.s32.totalorder %s10, 3
    %p136 = pnand %p134, %p135
    %p137 = pneg %p136
    // Predicated region
    $region25: #{residual_block_forward.4} parent=5 // pred_check
      _
    $region26: #{residual_block_forward.4} parent=5 // pred_check_branch
      %139 = sbr.rel (%p136) target = $region28
    $region27: #{residual_block_forward.4} parent=5 // pred_region
      %s140 = ssub.s32 %s10, 1
      %p141 = scmp.lt.s32.totalorder %s15, 1
      %s142 = scalar_select %p141, %s15, 1
      %s143 = smul.addr %s142, 54
      %s144 = smul.addr %s143, 4
      %s145 = scalar_lea.vmem %s0, %s144
      %p146 = pneg %p36
      %p147 = pneg %p33
      %p148 = pneg %p57
      %p149 = pneg %p54
      %p150 = pneg %p83
      %p151 = pneg %p80
      %p152 = scmp.lt.s32.totalorder %s15, 1
      %s153 = scalar_select %p152, %s15, 1
      %s154 = smul.addr %s153, 32
      %s155 = smul.addr %s154, 8
      %s156 = scalar_lea.vmem %s2, %s155
      %p157 = pneg %p104
      %p158 = pneg %p101
      %p159 = scmp.lt.s32.totalorder %s15, 1
      %s160 = scalar_select %p159, %s15, 1
      %s161 = smul.addr %s160, 54
      %s162 = smul.addr %s161, 4
      %s163 = scalar_lea.vmem %s0, %s162
      %p164 = scmp.lt.s32.totalorder %s15, 1
      %s165 = scalar_select %p164, %s15, 1
      %s166 = smul.addr %s165, 32
      %s167 = smul.addr %s166, 8
      %s168 = scalar_lea.vmem %s2, %s167
      %p170 = scmp.eq.s32.totalorder %s15, 0
      // Predicated region
      $region29: #{residual_block_forward.4} parent=27 // pred_check
        %p171 = pneg %p170
      $region30: #{residual_block_forward.4} parent=27 // pred_check_branch
        %173 = sbr.rel (%p171) target = $region32
      $region31: #{residual_block_forward.4} parent=27 // pred_region
        %vm174 = vcmask 58368
        %175 = vst.msk [vmem:[%s3] sm:$0x3] %vm174, 0.0
      $region32: #{residual_block_forward.4} parent=27 // pred_fallthru
        _
      %v176 = vld [vmem:[%s163] sm:$0xf]
      %v177 = vld [vmem:[%s163 + $0x4] sm:$0xf]
      %v178 = vld [vmem:[%s163 + $0x8] sm:$0x1]
      %v179 = vld [vmem:[%s163 + $0xc] sm:$0xf]
      %v180 = vld [vmem:[%s163 + $0x10] sm:$0xf]
      %v181 = vld [vmem:[%s163 + $0x14] sm:$0x1]
      %v182 = vld [vmem:[%s163 + $0x18] sm:$0xf]
      %v183 = vld [vmem:[%s163 + $0x1c] sm:$0xf]
      %v184 = vld [vmem:[%s163 + $0x20] sm:$0x1]
      %v185 = vld [vmem:[%s163 + $0x24] sm:$0xf]
      %v186 = vld [vmem:[%s163 + $0x28] sm:$0xf]
      %v187 = vld [vmem:[%s163 + $0x2c] sm:$0x1]
      %v188 = vld [vmem:[%s163 + $0x30] sm:$0xf]
      %v189 = vld [vmem:[%s163 + $0x34] sm:$0xf]
      %v190 = vld [vmem:[%s163 + $0x38] sm:$0x1]
      %v191 = vld [vmem:[%s163 + $0x3c] sm:$0xf]
      %v192 = vld [vmem:[%s163 + $0x40] sm:$0xf]
      %v193 = vld [vmem:[%s163 + $0x44] sm:$0x1]
      %v194 = vld [vmem:[%s163 + $0x48] sm:$0xf]
      %v195 = vld [vmem:[%s163 + $0x4c] sm:$0xf]
      %v196 = vld [vmem:[%s163 + $0x50] sm:$0x1]
      %v197 = vld [vmem:[%s163 + $0x54] sm:$0xf]
      %v198 = vld [vmem:[%s163 + $0x58] sm:$0xf]
      %v199 = vld [vmem:[%s163 + $0x5c] sm:$0x1]
      %v200 = vld [vmem:[%s163 + $0x60] sm:$0xf]
      %v201 = vld [vmem:[%s163 + $0x64] sm:$0xf]
      %v202 = vld [vmem:[%s163 + $0x68] sm:$0x1]
      %v203 = vld [vmem:[%s163 + $0x6c] sm:$0xf]
      %v204 = vld [vmem:[%s163 + $0x70] sm:$0xf]
      %v205 = vld [vmem:[%s163 + $0x74] sm:$0x1]
      %v206 = vld [vmem:[%s163 + $0x78] sm:$0xf]
      %v207 = vld [vmem:[%s163 + $0x7c] sm:$0xf]
      %v208 = vld [vmem:[%s163 + $0x80] sm:$0x1]
      %v209 = vld [vmem:[%s163 + $0x84] sm:$0xf]
      %v210 = vld [vmem:[%s163 + $0x88] sm:$0xf]
      %v211 = vld [vmem:[%s163 + $0x8c] sm:$0x1]
      %v212 = vld [vmem:[%s163 + $0x90] sm:$0xf]
      %v213 = vld [vmem:[%s163 + $0x94] sm:$0xf]
      %v214 = vld [vmem:[%s163 + $0x98] sm:$0x1]
      %v215 = vld [vmem:[%s163 + $0x9c] sm:$0xf]
      %v216 = vld [vmem:[%s163 + $0xa0] sm:$0xf]
      %v217 = vld [vmem:[%s163 + $0xa4] sm:$0x1]
      %v218 = vld [vmem:[%s163 + $0xa8] sm:$0xf]
      %v219 = vld [vmem:[%s163 + $0xac] sm:$0xf]
      %v220 = vld [vmem:[%s163 + $0xb0] sm:$0x1]
      %v221 = vld [vmem:[%s163 + $0xb4] sm:$0xf]
      %v222 = vld [vmem:[%s163 + $0xb8] sm:$0xf]
      %v223 = vld [vmem:[%s163 + $0xbc] sm:$0x1]
      %v224 = vld [vmem:[%s163 + $0xc0] sm:$0xf]
      %v225 = vld [vmem:[%s163 + $0xc4] sm:$0xf]
      %v226 = vld [vmem:[%s163 + $0xc8] sm:$0x1]
      %v227 = vld [vmem:[%s163 + $0xcc] sm:$0xf]
      %v228 = vld [vmem:[%s163 + $0xd0] sm:$0xf]
      %v229 = vld [vmem:[%s163 + $0xd4] sm:$0x1]
      %v230 = vld [vmem:[%s1] sm:$0xf]
      %vm231 = vsmask.f32 3328
      %vm232 = vsmask.f32 7440
      %vm233 = vmor %vm231, %vm232
      %v235 = vshrl.u32 %v176, 16
      %v237 = vrot.slane %v235, 4
      %v238 = vshll.u32 %v176, 16
      %v240 = vrot.slane %v238, 5
      %v241 = vor.u32 %v237, %v240
      %v242 = vrot.slane %v241, 4
      %v244 = vshll.u32 %v177, 16
      %v246 = vrot.slane %v244, 5
      %v247 = vsel %vm233, %v242, %v246
      %v248 = vshrl.u32 %v177, 16
      %v250 = vrot.slane %v248, 4
      %v251 = vor.u32 %v250, %v246
      %v252 = vrot.slane %v251, 4
      %v254 = vshll.u32 %v178, 16
      %v256 = vrot.slane %v254, 5
      %v257 = vsel %vm233, %v252, %v256
      %v259 = vshrl.u32 %v179, 16
      %v261 = vrot.slane %v259, 4
      %v262 = vshll.u32 %v179, 16
      %v264 = vrot.slane %v262, 5
      %v265 = vor.u32 %v261, %v264
      %v266 = vrot.slane %v265, 4
      %v268 = vshll.u32 %v180, 16
      %v270 = vrot.slane %v268, 5
      %v271 = vsel %vm233, %v266, %v270
      %v272 = vshrl.u32 %v180, 16
      %v274 = vrot.slane %v272, 4
      %v275 = vor.u32 %v274, %v270
      %v276 = vrot.slane %v275, 4
      %v278 = vshll.u32 %v181, 16
      %v280 = vrot.slane %v278, 5
      %v281 = vsel %vm233, %v276, %v280
      %v283 = vshrl.u32 %v182, 16
      %v285 = vrot.slane %v283, 4
      %v286 = vshll.u32 %v182, 16
      %v288 = vrot.slane %v286, 5
      %v289 = vor.u32 %v285, %v288
      %v290 = vrot.slane %v289, 4
      %v292 = vshll.u32 %v183, 16
      %v294 = vrot.slane %v292, 5
      %v295 = vsel %vm233, %v290, %v294
      %v296 = vshrl.u32 %v183, 16
      %v298 = vrot.slane %v296, 4
      %v299 = vor.u32 %v298, %v294
      %v300 = vrot.slane %v299, 4
      %v302 = vshll.u32 %v184, 16
      %v304 = vrot.slane %v302, 5
      %v305 = vsel %vm233, %v300, %v304
      %v307 = vshrl.u32 %v185, 16
      %v309 = vrot.slane %v307, 4
      %v310 = vshll.u32 %v185, 16
      %v312 = vrot.slane %v310, 5
      %v313 = vor.u32 %v309, %v312
      %v314 = vrot.slane %v313, 4
      %v316 = vshll.u32 %v186, 16
      %v318 = vrot.slane %v316, 5
      %v319 = vsel %vm233, %v314, %v318
      %v320 = vshrl.u32 %v186, 16
      %v322 = vrot.slane %v320, 4
      %v323 = vor.u32 %v322, %v318
      %v324 = vrot.slane %v323, 4
      %v326 = vshll.u32 %v187, 16
      %v328 = vrot.slane %v326, 5
      %v329 = vsel %vm233, %v324, %v328
      %v331 = vshrl.u32 %v188, 16
      %v333 = vrot.slane %v331, 4
      %v334 = vshll.u32 %v188, 16
      %v336 = vrot.slane %v334, 5
      %v337 = vor.u32 %v333, %v336
      %v338 = vrot.slane %v337, 4
      %v340 = vshll.u32 %v189, 16
      %v342 = vrot.slane %v340, 5
      %v343 = vsel %vm233, %v338, %v342
      %v344 = vshrl.u32 %v189, 16
      %v346 = vrot.slane %v344, 4
      %v347 = vor.u32 %v346, %v342
      %v348 = vrot.slane %v347, 4
      %v350 = vshll.u32 %v190, 16
      %v352 = vrot.slane %v350, 5
      %v353 = vsel %vm233, %v348, %v352
      %v355 = vshrl.u32 %v191, 16
      %v357 = vrot.slane %v355, 4
      %v358 = vshll.u32 %v191, 16
      %v360 = vrot.slane %v358, 5
      %v361 = vor.u32 %v357, %v360
      %v362 = vrot.slane %v361, 4
      %v364 = vshll.u32 %v192, 16
      %v366 = vrot.slane %v364, 5
      %v367 = vsel %vm233, %v362, %v366
      %v368 = vshrl.u32 %v192, 16
      %v370 = vrot.slane %v368, 4
      %v371 = vor.u32 %v370, %v366
      %v372 = vrot.slane %v371, 4
      %v374 = vshll.u32 %v193, 16
      %v376 = vrot.slane %v374, 5
      %v377 = vsel %vm233, %v372, %v376
      %v379 = vshrl.u32 %v194, 16
      %v381 = vrot.slane %v379, 4
      %v382 = vshll.u32 %v194, 16
      %v384 = vrot.slane %v382, 5
      %v385 = vor.u32 %v381, %v384
      %v386 = vrot.slane %v385, 4
      %v388 = vshll.u32 %v195, 16
      %v390 = vrot.slane %v388, 5
      %v391 = vsel %vm233, %v386, %v390
      %v392 = vshrl.u32 %v195, 16
      %v394 = vrot.slane %v392, 4
      %v395 = vor.u32 %v394, %v390
      %v396 = vrot.slane %v395, 4
      %v398 = vshll.u32 %v196, 16
      %v400 = vrot.slane %v398, 5
      %v401 = vsel %vm233, %v396, %v400
      %v403 = vshrl.u32 %v197, 16
      %v405 = vrot.slane %v403, 4
      %v406 = vshll.u32 %v197, 16
      %v408 = vrot.slane %v406, 5
      %v409 = vor.u32 %v405, %v408
      %v410 = vrot.slane %v409, 4
      %v412 = vshll.u32 %v198, 16
      %v414 = vrot.slane %v412, 5
      %v415 = vsel %vm233, %v410, %v414
      %v416 = vshrl.u32 %v198, 16
      %v418 = vrot.slane %v416, 4
      %v419 = vor.u32 %v418, %v414
      %v420 = vrot.slane %v419, 4
      %v422 = vshll.u32 %v199, 16
      %v424 = vrot.slane %v422, 5
      %v425 = vsel %vm233, %v420, %v424
      %v427 = vshrl.u32 %v200, 16
      %v429 = vrot.slane %v427, 4
      %v430 = vshll.u32 %v200, 16
      %v432 = vrot.slane %v430, 5
      %v433 = vor.u32 %v429, %v432
      %v434 = vrot.slane %v433, 4
      %v436 = vshll.u32 %v201, 16
      %v438 = vrot.slane %v436, 5
      %v439 = vsel %vm233, %v434, %v438
      %v440 = vshrl.u32 %v201, 16
      %v442 = vrot.slane %v440, 4
      %v443 = vor.u32 %v442, %v438
      %v444 = vrot.slane %v443, 4
      %v446 = vshll.u32 %v202, 16
      %v448 = vrot.slane %v446, 5
      %v449 = vsel %vm233, %v444, %v448
      %v451 = vshrl.u32 %v203, 16
      %v453 = vrot.slane %v451, 4
      %v454 = vshll.u32 %v203, 16
      %v456 = vrot.slane %v454, 5
      %v457 = vor.u32 %v453, %v456
      %v458 = vrot.slane %v457, 4
      %v460 = vshll.u32 %v204, 16
      %v462 = vrot.slane %v460, 5
      %v463 = vsel %vm233, %v458, %v462
      %v464 = vshrl.u32 %v204, 16
      %v466 = vrot.slane %v464, 4
      %v467 = vor.u32 %v466, %v462
      %v468 = vrot.slane %v467, 4
      %v470 = vshll.u32 %v205, 16
      %v472 = vrot.slane %v470, 5
      %v473 = vsel %vm233, %v468, %v472
      %v475 = vshrl.u32 %v206, 16
      %v477 = vrot.slane %v475, 4
      %v478 = vshll.u32 %v206, 16
      %v480 = vrot.slane %v478, 5
      %v481 = vor.u32 %v477, %v480
      %v482 = vrot.slane %v481, 4
      %v484 = vshll.u32 %v207, 16
      %v486 = vrot.slane %v484, 5
      %v487 = vsel %vm233, %v482, %v486
      %v488 = vshrl.u32 %v207, 16
      %v490 = vrot.slane %v488, 4
      %v491 = vor.u32 %v490, %v486
      %v492 = vrot.slane %v491, 4
      %v494 = vshll.u32 %v208, 16
      %v496 = vrot.slane %v494, 5
      %v497 = vsel %vm233, %v492, %v496
      %v499 = vshrl.u32 %v209, 16
      %v501 = vrot.slane %v499, 4
      %v502 = vshll.u32 %v209, 16
      %v504 = vrot.slane %v502, 5
      %v505 = vor.u32 %v501, %v504
      %v506 = vrot.slane %v505, 4
      %v508 = vshll.u32 %v210, 16
      %v510 = vrot.slane %v508, 5
      %v511 = vsel %vm233, %v506, %v510
      %v512 = vshrl.u32 %v210, 16
      %v514 = vrot.slane %v512, 4
      %v515 = vor.u32 %v514, %v510
      %v516 = vrot.slane %v515, 4
      %v518 = vshll.u32 %v211, 16
      %v520 = vrot.slane %v518, 5
      %v521 = vsel %vm233, %v516, %v520
      %v523 = vshrl.u32 %v212, 16
      %v525 = vrot.slane %v523, 4
      %v526 = vshll.u32 %v212, 16
      %v528 = vrot.slane %v526, 5
      %v529 = vor.u32 %v525, %v528
      %v530 = vrot.slane %v529, 4
      %v532 = vshll.u32 %v213, 16
      %v534 = vrot.slane %v532, 5
      %v535 = vsel %vm233, %v530, %v534
      %v536 = vshrl.u32 %v213, 16
      %v538 = vrot.slane %v536, 4
      %v539 = vor.u32 %v538, %v534
      %v540 = vrot.slane %v539, 4
      %v542 = vshll.u32 %v214, 16
      %v544 = vrot.slane %v542, 5
      %v545 = vsel %vm233, %v540, %v544
      %v547 = vshrl.u32 %v215, 16
      %v549 = vrot.slane %v547, 4
      %v550 = vshll.u32 %v215, 16
      %v552 = vrot.slane %v550, 5
      %v553 = vor.u32 %v549, %v552
      %v554 = vrot.slane %v553, 4
      %v556 = vshll.u32 %v216, 16
      %v558 = vrot.slane %v556, 5
      %v559 = vsel %vm233, %v554, %v558
      %v560 = vshrl.u32 %v216, 16
      %v562 = vrot.slane %v560, 4
      %v563 = vor.u32 %v562, %v558
      %v564 = vrot.slane %v563, 4
      %v566 = vshll.u32 %v217, 16
      %v568 = vrot.slane %v566, 5
      %v569 = vsel %vm233, %v564, %v568
      %v571 = vshrl.u32 %v218, 16
      %v573 = vrot.slane %v571, 4
      %v574 = vshll.u32 %v218, 16
      %v576 = vrot.slane %v574, 5
      %v577 = vor.u32 %v573, %v576
      %v578 = vrot.slane %v577, 4
      %v580 = vshll.u32 %v219, 16
      %v582 = vrot.slane %v580, 5
      %v583 = vsel %vm233, %v578, %v582
      %v584 = vshrl.u32 %v219, 16
      %v586 = vrot.slane %v584, 4
      %v587 = vor.u32 %v586, %v582
      %v588 = vrot.slane %v587, 4
      %v590 = vshll.u32 %v220, 16
      %v592 = vrot.slane %v590, 5
      %v593 = vsel %vm233, %v588, %v592
      %v595 = vshrl.u32 %v221, 16
      %v597 = vrot.slane %v595, 4
      %v598 = vshll.u32 %v221, 16
      %v600 = vrot.slane %v598, 5
      %v601 = vor.u32 %v597, %v600
      %v602 = vrot.slane %v601, 4
      %v604 = vshll.u32 %v222, 16
      %v606 = vrot.slane %v604, 5
      %v607 = vsel %vm233, %v602, %v606
      %v608 = vshrl.u32 %v222, 16
      %v610 = vrot.slane %v608, 4
      %v611 = vor.u32 %v610, %v606
      %v612 = vrot.slane %v611, 4
      %v614 = vshll.u32 %v223, 16
      %v616 = vrot.slane %v614, 5
      %v617 = vsel %vm233, %v612, %v616
      %s618 = scalar_lea.vmem %s1, 4
      %v619 = vld [vmem:[%s618] sm:$0xf]
      %v620 = vunpack.c.l.b16 %v247
      %v621 = vunpack.c.l.b16 %v257
      %v622 = vunpack.c.l.b16 %v271
      %v623 = vunpack.c.l.b16 %v281
      %v624 = vunpack.c.l.b16 %v295
      %v625 = vunpack.c.l.b16 %v305
      %v626 = vunpack.c.l.b16 %v319
      %v627 = vunpack.c.l.b16 %v329
      %v628 = vunpack.c.l.b16 %v343
      %v629 = vunpack.c.l.b16 %v353
      %v630 = vunpack.c.l.b16 %v367
      %v631 = vunpack.c.l.b16 %v377
      %v632 = vunpack.c.l.b16 %v391
      %v633 = vunpack.c.l.b16 %v401
      %v634 = vunpack.c.l.b16 %v415
      %v635 = vunpack.c.l.b16 %v425
      %v636 = vunpack.c.l.b16 %v439
      %v637 = vunpack.c.l.b16 %v449
      %v638 = vunpack.c.l.b16 %v463
      %v639 = vunpack.c.l.b16 %v473
      %v640 = vunpack.c.l.b16 %v487
      %v641 = vunpack.c.l.b16 %v497
      %v642 = vunpack.c.l.b16 %v511
      %v643 = vunpack.c.l.b16 %v521
      %v644 = vunpack.c.l.b16 %v535
      %v645 = vunpack.c.l.b16 %v545
      %v646 = vunpack.c.l.b16 %v559
      %v647 = vunpack.c.l.b16 %v569
      %v648 = vunpack.c.l.b16 %v583
      %v649 = vunpack.c.l.b16 %v593
      %v650 = vunpack.c.l.b16 %v607
      %v651 = vunpack.c.l.b16 %v617
      %v652 = vpack.c.b16 %v621, %v620
      %v653 = vpack.c.b16 %v623, %v622
      %v654 = vpack.c.b16 %v625, %v624
      %v655 = vpack.c.b16 %v627, %v626
      %v656 = vpack.c.b16 %v629, %v628
      %v657 = vpack.c.b16 %v631, %v630
      %v658 = vpack.c.b16 %v633, %v632
      %v659 = vpack.c.b16 %v635, %v634
      %v660 = vpack.c.b16 %v637, %v636
      %v661 = vpack.c.b16 %v639, %v638
      %v662 = vpack.c.b16 %v641, %v640
      %v663 = vpack.c.b16 %v643, %v642
      %v664 = vpack.c.b16 %v645, %v644
      %v665 = vpack.c.b16 %v647, %v646
      %v666 = vpack.c.b16 %v649, %v648
      %v667 = vpack.c.b16 %v651, %v650
      %vm668 = vcmask 64512
      %v670 = vsel %vm668, %v652, 0
      %v673 = vsel %vm668, %v653, 0
      %v676 = vsel %vm668, %v654, 0
      %v679 = vsel %vm668, %v655, 0
      %v682 = vsel %vm668, %v656, 0
      %v685 = vsel %vm668, %v657, 0
      %v688 = vsel %vm668, %v658, 0
      %v691 = vsel %vm668, %v659, 0
      %v694 = vsel %vm668, %v660, 0
      %v697 = vsel %vm668, %v661, 0
      %v700 = vsel %vm668, %v662, 0
      %v703 = vsel %vm668, %v663, 0
      %v706 = vsel %vm668, %v664, 0
      %v709 = vsel %vm668, %v665, 0
      %v712 = vsel %vm668, %v666, 0
      %v715 = vsel %vm668, %v667, 0
      %vm717 = vcmask 1043456
      %v719 = vsel %vm717, %v619, 0
      %721 = vmatprep.subr.bf16.mxu0 0
      %722 = vmatpush1.bf16.msra.mxu0 %v719
      %723 = vmatprep.subr.bf16.mxu0 0
      %724 = vmatpush1.bf16.msra.mxu0 0
      %725 = vmatprep.subr.bf16.mxu0 0
      %726 = vmatpush1.bf16.msra.mxu0 0
      %727 = vmatprep.subr.bf16.mxu0 0
      %728 = vmatpush1.bf16.msra.mxu0 0
      %729 = vmatprep.subr.bf16.mxu0 0
      %730 = vmatpush1.bf16.msra.mxu0 0
      %731 = vmatprep.subr.bf16.mxu0 0
      %732 = vmatpush1.bf16.msra.mxu0 0
      %733 = vmatprep.subr.bf16.mxu0 0
      %734 = vmatpush1.bf16.msra.mxu0 0
      %735 = vmatprep.subr.bf16.mxu0 0
      %736 = vmatpush1.bf16.msra.mxu0 0
      %737 = vmatprep.subr.bf16.mxu0 0
      %738 = vmatpush1.bf16.msra.mxu0 0
      %739 = vmatprep.subr.bf16.mxu0 0
      %740 = vmatpush1.bf16.msra.mxu0 0
      %741 = vmatprep.subr.bf16.mxu0 0
      %742 = vmatpush1.bf16.msra.mxu0 0
      %743 = vmatprep.subr.bf16.mxu0 0
      %744 = vmatpush1.bf16.msra.mxu0 0
      %745 = vmatprep.subr.bf16.mxu0 0
      %746 = vmatpush1.bf16.msra.mxu0 0
      %747 = vmatprep.subr.bf16.mxu0 0
      %748 = vmatpush1.bf16.msra.mxu0 0
      %749 = vmatprep.subr.bf16.mxu0 0
      %750 = vmatpush1.bf16.msra.mxu0 0
      %751 = vmatprep.subr.bf16.mxu0 0
      %752 = vmatpush1.bf16.msra.mxu0 0
      %753 = vmatprep.mubr.bf16.mxu0 0
      %754 = vmatmul.mubr.bf16.gmra.mrb[0].mxu0 %v670
      %v755 = vpop.f32.mrb[0].mxu0
      %v756 = vadd.f32 0.0, %v755
      %v757 = vpop.f32.mrb[0].mxu0
      %v758 = vpop.f32.mrb[0].mxu0
      %v759 = vadd.f32 0.0, %v758
      %v760 = vpop.f32.mrb[0].mxu0
      %761 = vmatprep.mubr.bf16.mxu0 0
      %762 = vmatmul.mubr.bf16.gmra.mrb[0].mxu0 %v673
      %v763 = vpop.f32.mrb[0].mxu0
      %v764 = vadd.f32 0.0, %v763
      %v765 = vpop.f32.mrb[0].mxu0
      %v766 = vpop.f32.mrb[0].mxu0
      %v767 = vadd.f32 0.0, %v766
      %v768 = vpop.f32.mrb[0].mxu0
      %769 = vmatprep.mubr.bf16.mxu0 0
      %770 = vmatmul.mubr.bf16.gmra.mrb[0].mxu0 %v676
      %v771 = vpop.f32.mrb[0].mxu0
      %v772 = vadd.f32 0.0, %v771
      %v773 = vpop.f32.mrb[0].mxu0
      %v774 = vpop.f32.mrb[0].mxu0
      %v775 = vadd.f32 0.0, %v774
      %v776 = vpop.f32.mrb[0].mxu0
      %777 = vmatprep.mubr.bf16.mxu0 0
      %778 = vmatmul.mubr.bf16.gmra.mrb[0].mxu0 %v679
      %v779 = vpop.f32.mrb[0].mxu0
      %v780 = vadd.f32 0.0, %v779
      %v781 = vpop.f32.mrb[0].mxu0
      %v782 = vpop.f32.mrb[0].mxu0
      %v783 = vadd.f32 0.0, %v782
      %v784 = vpop.f32.mrb[0].mxu0
      %785 = vmatprep.mubr.bf16.mxu0 0
      %786 = vmatmul.mubr.bf16.gmra.mrb[0].mxu0 %v682
      %v787 = vpop.f32.mrb[0].mxu0
      %v788 = vadd.f32 0.0, %v787
      %v789 = vpop.f32.mrb[0].mxu0
      %v790 = vpop.f32.mrb[0].mxu0
      %v791 = vadd.f32 0.0, %v790
      %v792 = vpop.f32.mrb[0].mxu0
      %793 = vmatprep.mubr.bf16.mxu0 0
      %794 = vmatmul.mubr.bf16.gmra.mrb[0].mxu0 %v685
      %v795 = vpop.f32.mrb[0].mxu0
      %v796 = vadd.f32 0.0, %v795
      %v797 = vpop.f32.mrb[0].mxu0
      %v798 = vpop.f32.mrb[0].mxu0
      %v799 = vadd.f32 0.0, %v798
      %v800 = vpop.f32.mrb[0].mxu0
      %801 = vmatprep.mubr.bf16.mxu0 0
      %802 = vmatmul.mubr.bf16.gmra.mrb[0].mxu0 %v688
      %v803 = vpop.f32.mrb[0].mxu0
      %v804 = vadd.f32 0.0, %v803
      %v805 = vpop.f32.mrb[0].mxu0
      %v806 = vpop.f32.mrb[0].mxu0
      %v807 = vadd.f32 0.0, %v806
      %v808 = vpop.f32.mrb[0].mxu0
      %809 = vmatprep.mubr.bf16.mxu0 0
      %810 = vmatmul.mubr.bf16.gmra.mrb[0].mxu0 %v691
      %v811 = vpop.f32.mrb[0].mxu0
      %v812 = vadd.f32 0.0, %v811
      %v813 = vpop.f32.mrb[0].mxu0
      %v814 = vpop.f32.mrb[0].mxu0
      %v815 = vadd.f32 0.0, %v814
      %v816 = vpop.f32.mrb[0].mxu0
      %817 = vmatprep.mubr.bf16.mxu0 0
      %818 = vmatmul.mubr.bf16.gmra.mrb[0].mxu0 %v694
      %v819 = vpop.f32.mrb[0].mxu0
      %v820 = vadd.f32 0.0, %v819
      %v821 = vpop.f32.mrb[0].mxu0
      %v822 = vpop.f32.mrb[0].mxu0
      %v823 = vadd.f32 0.0, %v822
      %v824 = vpop.f32.mrb[0].mxu0
      %825 = vmatprep.mubr.bf16.mxu0 0
      %826 = vmatmul.mubr.bf16.gmra.mrb[0].mxu0 %v697
      %v827 = vpop.f32.mrb[0].mxu0
      %v828 = vadd.f32 0.0, %v827
      %v829 = vpop.f32.mrb[0].mxu0
      %v830 = vpop.f32.mrb[0].mxu0
      %v831 = vadd.f32 0.0, %v830
      %v832 = vpop.f32.mrb[0].mxu0
      %833 = vmatprep.mubr.bf16.mxu0 0
      %834 = vmatmul.mubr.bf16.gmra.mrb[0].mxu0 %v700
      %v835 = vpop.f32.mrb[0].mxu0
      %v836 = vadd.f32 0.0, %v835
      %v837 = vpop.f32.mrb[0].mxu0
      %v838 = vpop.f32.mrb[0].mxu0
      %v839 = vadd.f32 0.0, %v838
      %v840 = vpop.f32.mrb[0].mxu0
      %841 = vmatprep.mubr.bf16.mxu0 0
      %842 = vmatmul.mubr.bf16.gmra.mrb[0].mxu0 %v703
      %v843 = vpop.f32.mrb[0].mxu0
      %v844 = vadd.f32 0.0, %v843
      %v845 = vpop.f32.mrb[0].mxu0
      %v846 = vpop.f32.mrb[0].mxu0
      %v847 = vadd.f32 0.0, %v846
      %v848 = vpop.f32.mrb[0].mxu0
      %849 = vmatprep.mubr.bf16.mxu0 0
      %850 = vmatmul.mubr.bf16.gmra.mrb[0].mxu0 %v706
      %v851 = vpop.f32.mrb[0].mxu0
      %v852 = vadd.f32 0.0, %v851
      %v853 = vpop.f32.mrb[0].mxu0
      %v854 = vpop.f32.mrb[0].mxu0
      %v855 = vadd.f32 0.0, %v854
      %v856 = vpop.f32.mrb[0].mxu0
      %857 = vmatprep.mubr.bf16.mxu0 0
      %858 = vmatmul.mubr.bf16.gmra.mrb[0].mxu0 %v709
      %v859 = vpop.f32.mrb[0].mxu0
      %v860 = vadd.f32 0.0, %v859
      %v861 = vpop.f32.mrb[0].mxu0
      %v862 = vpop.f32.mrb[0].mxu0
      %v863 = vadd.f32 0.0, %v862
      %v864 = vpop.f32.mrb[0].mxu0
      %865 = vmatprep.mubr.bf16.mxu0 0
      %866 = vmatmul.mubr.bf16.gmra.mrb[0].mxu0 %v712
      %v867 = vpop.f32.mrb[0].mxu0
      %v868 = vadd.f32 0.0, %v867
      %v869 = vpop.f32.mrb[0].mxu0
      %v870 = vpop.f32.mrb[0].mxu0
      %v871 = vadd.f32 0.0, %v870
      %v872 = vpop.f32.mrb[0].mxu0
      %873 = vmatprep.mubr.bf16.mxu0 0
      %874 = vmatmul.mubr.bf16.gmra.mrb[0].mxu0 %v715
      %v875 = vpop.f32.mrb[0].mxu0
      %v876 = vadd.f32 0.0, %v875
      %v877 = vpop.f32.mrb[0].mxu0
      %v878 = vpop.f32.mrb[0].mxu0
      %v879 = vadd.f32 0.0, %v878
      %v880 = vpop.f32.mrb[0].mxu0
      %881 = vdwg.mxu0
      %v914 = vunpack.c.l.b16 %v176
      %v915 = vunpack.c.l.b16 %v177
      %v916 = vunpack.c.l.b16 %v179
      %v917 = vunpack.c.l.b16 %v180
      %v918 = vunpack.c.l.b16 %v182
      %v919 = vunpack.c.l.b16 %v183
      %v920 = vunpack.c.l.b16 %v185
      %v921 = vunpack.c.l.b16 %v186
      %v922 = vunpack.c.l.b16 %v188
      %v923 = vunpack.c.l.b16 %v189
      %v924 = vunpack.c.l.b16 %v191
      %v925 = vunpack.c.l.b16 %v192
      %v926 = vunpack.c.l.b16 %v194
      %v927 = vunpack.c.l.b16 %v195
      %v928 = vunpack.c.l.b16 %v197
      %v929 = vunpack.c.l.b16 %v198
      %v930 = vunpack.c.l.b16 %v200
      %v931 = vunpack.c.l.b16 %v201
      %v932 = vunpack.c.l.b16 %v203
      %v933 = vunpack.c.l.b16 %v204
      %v934 = vunpack.c.l.b16 %v206
      %v935 = vunpack.c.l.b16 %v207
      %v936 = vunpack.c.l.b16 %v209
      %v937 = vunpack.c.l.b16 %v210
      %v938 = vunpack.c.l.b16 %v212
      %v939 = vunpack.c.l.b16 %v213
      %v940 = vunpack.c.l.b16 %v215
      %v941 = vunpack.c.l.b16 %v216
      %v942 = vunpack.c.l.b16 %v218
      %v943 = vunpack.c.l.b16 %v219
      %v944 = vunpack.c.l.b16 %v221
      %v945 = vunpack.c.l.b16 %v222
      %v946 = vpack.c.b16 %v915, %v914
      %v947 = vpack.c.b16 %v917, %v916
      %v948 = vpack.c.b16 %v919, %v918
      %v949 = vpack.c.b16 %v921, %v920
      %v950 = vpack.c.b16 %v923, %v922
      %v951 = vpack.c.b16 %v925, %v924
      %v952 = vpack.c.b16 %v927, %v926
      %v953 = vpack.c.b16 %v929, %v928
      %v954 = vpack.c.b16 %v931, %v930
      %v955 = vpack.c.b16 %v933, %v932
      %v956 = vpack.c.b16 %v935, %v934
      %v957 = vpack.c.b16 %v937, %v936
      %v958 = vpack.c.b16 %v939, %v938
      %v959 = vpack.c.b16 %v941, %v940
      %v960 = vpack.c.b16 %v943, %v942
      %v961 = vpack.c.b16 %v945, %v944
      %v963 = vsel %vm668, %v946, 0
      %v966 = vsel %vm668, %v947, 0
      %v969 = vsel %vm668, %v948, 0
      %v972 = vsel %vm668, %v949, 0
      %v975 = vsel %vm668, %v950, 0
      %v978 = vsel %vm668, %v951, 0
      %v981 = vsel %vm668, %v952, 0
      %v984 = vsel %vm668, %v953, 0
      %v987 = vsel %vm668, %v954, 0
      %v990 = vsel %vm668, %v955, 0
      %v993 = vsel %vm668, %v956, 0
      %v996 = vsel %vm668, %v957, 0
      %v999 = vsel %vm668, %v958, 0
      %v1002 = vsel %vm668, %v959, 0
      %v1005 = vsel %vm668, %v960, 0
      %v1008 = vsel %vm668, %v961, 0
      %v1011 = vsel %vm717, %v230, 0
      %1013 = vmatprep.subr.bf16.mxu0 0
      %1014 = vmatpush1.bf16.msra.mxu0 %v1011
      %1015 = vmatprep.subr.bf16.mxu0 0
      %1016 = vmatpush1.bf16.msra.mxu0 0
      %1017 = vmatprep.subr.bf16.mxu0 0
      %1018 = vmatpush1.bf16.msra.mxu0 0
      %1019 = vmatprep.subr.bf16.mxu0 0
      %1020 = vmatpush1.bf16.msra.mxu0 0
      %1021 = vmatprep.subr.bf16.mxu0 0
      %1022 = vmatpush1.bf16.msra.mxu0 0
      %1023 = vmatprep.subr.bf16.mxu0 0
      %1024 = vmatpush1.bf16.msra.mxu0 0
      %1025 = vmatprep.subr.bf16.mxu0 0
      %1026 = vmatpush1.bf16.msra.mxu0 0
      %1027 = vmatprep.subr.bf16.mxu0 0
      %1028 = vmatpush1.bf16.msra.mxu0 0
      %1029 = vmatprep.subr.bf16.mxu0 0
      %1030 = vmatpush1.bf16.msra.mxu0 0
      %1031 = vmatprep.subr.bf16.mxu0 0
      %1032 = vmatpush1.bf16.msra.mxu0 0
      %1033 = vmatprep.subr.bf16.mxu0 0
      %1034 = vmatpush1.bf16.msra.mxu0 0
      %1035 = vmatprep.subr.bf16.mxu0 0
      %1036 = vmatpush1.bf16.msra.mxu0 0
      %1037 = vmatprep.subr.bf16.mxu0 0
      %1038 = vmatpush1.bf16.msra.mxu0 0
      %1039 = vmatprep.subr.bf16.mxu0 0
      %1040 = vmatpush1.bf16.msra.mxu0 0
      %1041 = vmatprep.subr.bf16.mxu0 0
      %1042 = vmatpush1.bf16.msra.mxu0 0
      %1043 = vmatprep.subr.bf16.mxu0 0
      %1044 = vmatpush1.bf16.msra.mxu0 0
      %1045 = vmatprep.mubr.bf16.mxu0 0
      %1046 = vmatmul.mubr.bf16.gmra.mrb[0].mxu0 %v963
      %v1047 = vpop.f32.mrb[0].mxu0
      %v1048 = vadd.f32 %v756, %v1047
      %v1049 = vpop.f32.mrb[0].mxu0
      %v1050 = vpop.f32.mrb[0].mxu0
      %v1051 = vadd.f32 %v759, %v1050
      %v1052 = vpop.f32.mrb[0].mxu0
      %1053 = vmatprep.mubr.bf16.mxu0 0
      %1054 = vmatmul.mubr.bf16.gmra.mrb[0].mxu0 %v966
      %v1055 = vpop.f32.mrb[0].mxu0
      %v1056 = vadd.f32 %v764, %v1055
      %v1057 = vpop.f32.mrb[0].mxu0
      %v1058 = vpop.f32.mrb[0].mxu0
      %v1059 = vadd.f32 %v767, %v1058
      %v1060 = vpop.f32.mrb[0].mxu0
      %1061 = vmatprep.mubr.bf16.mxu0 0
      %1062 = vmatmul.mubr.bf16.gmra.mrb[0].mxu0 %v969
      %v1063 = vpop.f32.mrb[0].mxu0
      %v1064 = vadd.f32 %v772, %v1063
      %v1065 = vpop.f32.mrb[0].mxu0
      %v1066 = vpop.f32.mrb[0].mxu0
      %v1067 = vadd.f32 %v775, %v1066
      %v1068 = vpop.f32.mrb[0].mxu0
      %1069 = vmatprep.mubr.bf16.mxu0 0
      %1070 = vmatmul.mubr.bf16.gmra.mrb[0].mxu0 %v972
      %v1071 = vpop.f32.mrb[0].mxu0
      %v1072 = vadd.f32 %v780, %v1071
      %v1073 = vpop.f32.mrb[0].mxu0
      %v1074 = vpop.f32.mrb[0].mxu0
      %v1075 = vadd.f32 %v783, %v1074
      %v1076 = vpop.f32.mrb[0].mxu0
      %1077 = vmatprep.mubr.bf16.mxu0 0
      %1078 = vmatmul.mubr.bf16.gmra.mrb[0].mxu0 %v975
      %v1079 = vpop.f32.mrb[0].mxu0
      %v1080 = vadd.f32 %v788, %v1079
      %v1081 = vpop.f32.mrb[0].mxu0
      %v1082 = vpop.f32.mrb[0].mxu0
      %v1083 = vadd.f32 %v791, %v1082
      %v1084 = vpop.f32.mrb[0].mxu0
      %1085 = vmatprep.mubr.bf16.mxu0 0
      %1086 = vmatmul.mubr.bf16.gmra.mrb[0].mxu0 %v978
      %v1087 = vpop.f32.mrb[0].mxu0
      %v1088 = vadd.f32 %v796, %v1087
      %v1089 = vpop.f32.mrb[0].mxu0
      %v1090 = vpop.f32.mrb[0].mxu0
      %v1091 = vadd.f32 %v799, %v1090
      %v1092 = vpop.f32.mrb[0].mxu0
      %1093 = vmatprep.mubr.bf16.mxu0 0
      %1094 = vmatmul.mubr.bf16.gmra.mrb[0].mxu0 %v981
      %v1095 = vpop.f32.mrb[0].mxu0
      %v1096 = vadd.f32 %v804, %v1095
      %v1097 = vpop.f32.mrb[0].mxu0
      %v1098 = vpop.f32.mrb[0].mxu0
      %v1099 = vadd.f32 %v807, %v1098
      %v1100 = vpop.f32.mrb[0].mxu0
      %1101 = vmatprep.mubr.bf16.mxu0 0
      %1102 = vmatmul.mubr.bf16.gmra.mrb[0].mxu0 %v984
      %v1103 = vpop.f32.mrb[0].mxu0
      %v1104 = vadd.f32 %v812, %v1103
      %v1105 = vpop.f32.mrb[0].mxu0
      %v1106 = vpop.f32.mrb[0].mxu0
      %v1107 = vadd.f32 %v815, %v1106
      %v1108 = vpop.f32.mrb[0].mxu0
      %1109 = vmatprep.mubr.bf16.mxu0 0
      %1110 = vmatmul.mubr.bf16.gmra.mrb[0].mxu0 %v987
      %v1111 = vpop.f32.mrb[0].mxu0
      %v1112 = vadd.f32 %v820, %v1111
      %v1113 = vpop.f32.mrb[0].mxu0
      %v1114 = vpop.f32.mrb[0].mxu0
      %v1115 = vadd.f32 %v823, %v1114
      %v1116 = vpop.f32.mrb[0].mxu0
      %1117 = vmatprep.mubr.bf16.mxu0 0
      %1118 = vmatmul.mubr.bf16.gmra.mrb[0].mxu0 %v990
      %v1119 = vpop.f32.mrb[0].mxu0
      %v1120 = vadd.f32 %v828, %v1119
      %v1121 = vpop.f32.mrb[0].mxu0
      %v1122 = vpop.f32.mrb[0].mxu0
      %v1123 = vadd.f32 %v831, %v1122
      %v1124 = vpop.f32.mrb[0].mxu0
      %1125 = vmatprep.mubr.bf16.mxu0 0
      %1126 = vmatmul.mubr.bf16.gmra.mrb[0].mxu0 %v993
      %v1127 = vpop.f32.mrb[0].mxu0
      %v1128 = vadd.f32 %v836, %v1127
      %v1129 = vpop.f32.mrb[0].mxu0
      %v1130 = vpop.f32.mrb[0].mxu0
      %v1131 = vadd.f32 %v839, %v1130
      %v1132 = vpop.f32.mrb[0].mxu0
      %1133 = vmatprep.mubr.bf16.mxu0 0
      %1134 = vmatmul.mubr.bf16.gmra.mrb[0].mxu0 %v996
      %v1135 = vpop.f32.mrb[0].mxu0
      %v1136 = vadd.f32 %v844, %v1135
      %v1137 = vpop.f32.mrb[0].mxu0
      %v1138 = vpop.f32.mrb[0].mxu0
      %v1139 = vadd.f32 %v847, %v1138
      %v1140 = vpop.f32.mrb[0].mxu0
      %1141 = vmatprep.mubr.bf16.mxu0 0
      %1142 = vmatmul.mubr.bf16.gmra.mrb[0].mxu0 %v999
      %v1143 = vpop.f32.mrb[0].mxu0
      %v1144 = vadd.f32 %v852, %v1143
      %v1145 = vpop.f32.mrb[0].mxu0
      %v1146 = vpop.f32.mrb[0].mxu0
      %v1147 = vadd.f32 %v855, %v1146
      %v1148 = vpop.f32.mrb[0].mxu0
      %1149 = vmatprep.mubr.bf16.mxu0 0
      %1150 = vmatmul.mubr.bf16.gmra.mrb[0].mxu0 %v1002
      %v1151 = vpop.f32.mrb[0].mxu0
      %v1152 = vadd.f32 %v860, %v1151
      %v1153 = vpop.f32.mrb[0].mxu0
      %v1154 = vpop.f32.mrb[0].mxu0
      %v1155 = vadd.f32 %v863, %v1154
      %v1156 = vpop.f32.mrb[0].mxu0
      %1157 = vmatprep.mubr.bf16.mxu0 0
      %1158 = vmatmul.mubr.bf16.gmra.mrb[0].mxu0 %v1005
      %v1159 = vpop.f32.mrb[0].mxu0
      %v1160 = vadd.f32 %v868, %v1159
      %v1161 = vpop.f32.mrb[0].mxu0
      %v1162 = vpop.f32.mrb[0].mxu0
      %v1163 = vadd.f32 %v871, %v1162
      %v1164 = vpop.f32.mrb[0].mxu0
      %1165 = vmatprep.mubr.bf16.mxu0 0
      %1166 = vmatmul.mubr.bf16.gmra.mrb[0].mxu0 %v1008
      %v1167 = vpop.f32.mrb[0].mxu0
      %v1168 = vadd.f32 %v876, %v1167
      %v1169 = vpop.f32.mrb[0].mxu0
      %v1170 = vpop.f32.mrb[0].mxu0
      %v1171 = vadd.f32 %v879, %v1170
      %v1172 = vpop.f32.mrb[0].mxu0
      %1173 = vdwg.mxu0
      %vm1190 = vcmask 1042432
      %vm1191 = vcmask 1046532
      %vm1192 = vmor %vm1190, %vm1191
      %v1193 = vrot.slane %v176, 5
      %v1194 = vrot.slane %v1193, 4
      %v1195 = vrot.slane %v177, 5
      %v1196 = vsel %vm1192, %v1194, %v1195
      %v1197 = vrot.slane %v1195, 4
      %v1198 = vrot.slane %v178, 5
      %v1199 = vsel %vm1192, %v1197, %v1198
      %v1200 = vrot.slane %v179, 5
      %v1201 = vrot.slane %v1200, 4
      %v1202 = vrot.slane %v180, 5
      %v1203 = vsel %vm1192, %v1201, %v1202
      %v1204 = vrot.slane %v1202, 4
      %v1205 = vrot.slane %v181, 5
      %v1206 = vsel %vm1192, %v1204, %v1205
      %v1207 = vrot.slane %v182, 5
      %v1208 = vrot.slane %v1207, 4
      %v1209 = vrot.slane %v183, 5
      %v1210 = vsel %vm1192, %v1208, %v1209
      %v1211 = vrot.slane %v1209, 4
      %v1212 = vrot.slane %v184, 5
      %v1213 = vsel %vm1192, %v1211, %v1212
      %v1214 = vrot.slane %v185, 5
      %v1215 = vrot.slane %v1214, 4
      %v1216 = vrot.slane %v186, 5
      %v1217 = vsel %vm1192, %v1215, %v1216
      %v1218 = vrot.slane %v1216, 4
      %v1219 = vrot.slane %v187, 5
      %v1220 = vsel %vm1192, %v1218, %v1219
      %v1221 = vrot.slane %v188, 5
      %v1222 = vrot.slane %v1221, 4
      %v1223 = vrot.slane %v189, 5
      %v1224 = vsel %vm1192, %v1222, %v1223
      %v1225 = vrot.slane %v1223, 4
      %v1226 = vrot.slane %v190, 5
      %v1227 = vsel %vm1192, %v1225, %v1226
      %v1228 = vrot.slane %v191, 5
      %v1229 = vrot.slane %v1228, 4
      %v1230 = vrot.slane %v192, 5
      %v1231 = vsel %vm1192, %v1229, %v1230
      %v1232 = vrot.slane %v1230, 4
      %v1233 = vrot.slane %v193, 5
      %v1234 = vsel %vm1192, %v1232, %v1233
      %v1235 = vrot.slane %v194, 5
      %v1236 = vrot.slane %v1235, 4
      %v1237 = vrot.slane %v195, 5
      %v1238 = vsel %vm1192, %v1236, %v1237
      %v1239 = vrot.slane %v1237, 4
      %v1240 = vrot.slane %v196, 5
      %v1241 = vsel %vm1192, %v1239, %v1240
      %v1242 = vrot.slane %v197, 5
      %v1243 = vrot.slane %v1242, 4
      %v1244 = vrot.slane %v198, 5
      %v1245 = vsel %vm1192, %v1243, %v1244
      %v1246 = vrot.slane %v1244, 4
      %v1247 = vrot.slane %v199, 5
      %v1248 = vsel %vm1192, %v1246, %v1247
      %v1249 = vrot.slane %v200, 5
      %v1250 = vrot.slane %v1249, 4
      %v1251 = vrot.slane %v201, 5
      %v1252 = vsel %vm1192, %v1250, %v1251
      %v1253 = vrot.slane %v1251, 4
      %v1254 = vrot.slane %v202, 5
      %v1255 = vsel %vm1192, %v1253, %v1254
      %v1256 = vrot.slane %v203, 5
      %v1257 = vrot.slane %v1256, 4
      %v1258 = vrot.slane %v204, 5
      %v1259 = vsel %vm1192, %v1257, %v1258
      %v1260 = vrot.slane %v1258, 4
      %v1261 = vrot.slane %v205, 5
      %v1262 = vsel %vm1192, %v1260, %v1261
      %v1263 = vrot.slane %v206, 5
      %v1264 = vrot.slane %v1263, 4
      %v1265 = vrot.slane %v207, 5
      %v1266 = vsel %vm1192, %v1264, %v1265
      %v1267 = vrot.slane %v1265, 4
      %v1268 = vrot.slane %v208, 5
      %v1269 = vsel %vm1192, %v1267, %v1268
      %v1270 = vrot.slane %v209, 5
      %v1271 = vrot.slane %v1270, 4
      %v1272 = vrot.slane %v210, 5
      %v1273 = vsel %vm1192, %v1271, %v1272
      %v1274 = vrot.slane %v1272, 4
      %v1275 = vrot.slane %v211, 5
      %v1276 = vsel %vm1192, %v1274, %v1275
      %v1277 = vrot.slane %v212, 5
      %v1278 = vrot.slane %v1277, 4
      %v1279 = vrot.slane %v213, 5
      %v1280 = vsel %vm1192, %v1278, %v1279
      %v1281 = vrot.slane %v1279, 4
      %v1282 = vrot.slane %v214, 5
      %v1283 = vsel %vm1192, %v1281, %v1282
      %v1284 = vrot.slane %v215, 5
      %v1285 = vrot.slane %v1284, 4
      %v1286 = vrot.slane %v216, 5
      %v1287 = vsel %vm1192, %v1285, %v1286
      %v1288 = vrot.slane %v1286, 4
      %v1289 = vrot.slane %v217, 5
      %v1290 = vsel %vm1192, %v1288, %v1289
      %v1291 = vrot.slane %v218, 5
      %v1292 = vrot.slane %v1291, 4
      %v1293 = vrot.slane %v219, 5
      %v1294 = vsel %vm1192, %v1292, %v1293
      %v1295 = vrot.slane %v1293, 4
      %v1296 = vrot.slane %v220, 5
      %v1297 = vsel %vm1192, %v1295, %v1296
      %v1298 = vrot.slane %v221, 5
      %v1299 = vrot.slane %v1298, 4
      %v1300 = vrot.slane %v222, 5
      %v1301 = vsel %vm1192, %v1299, %v1300
      %v1302 = vrot.slane %v1300, 4
      %v1303 = vrot.slane %v223, 5
      %v1304 = vsel %vm1192, %v1302, %v1303
      %s1305 = scalar_lea.vmem %s1, 8
      %v1306 = vld [vmem:[%s1305] sm:$0xf]
      %v1307 = vunpack.c.l.b16 %v1196
      %v1308 = vunpack.c.l.b16 %v1199
      %v1309 = vunpack.c.l.b16 %v1203
      %v1310 = vunpack.c.l.b16 %v1206
      %v1311 = vunpack.c.l.b16 %v1210
      %v1312 = vunpack.c.l.b16 %v1213
      %v1313 = vunpack.c.l.b16 %v1217
      %v1314 = vunpack.c.l.b16 %v1220
      %v1315 = vunpack.c.l.b16 %v1224
      %v1316 = vunpack.c.l.b16 %v1227
      %v1317 = vunpack.c.l.b16 %v1231
      %v1318 = vunpack.c.l.b16 %v1234
      %v1319 = vunpack.c.l.b16 %v1238
      %v1320 = vunpack.c.l.b16 %v1241
      %v1321 = vunpack.c.l.b16 %v1245
      %v1322 = vunpack.c.l.b16 %v1248
      %v1323 = vunpack.c.l.b16 %v1252
      %v1324 = vunpack.c.l.b16 %v1255
      %v1325 = vunpack.c.l.b16 %v1259
      %v1326 = vunpack.c.l.b16 %v1262
      %v1327 = vunpack.c.l.b16 %v1266
      %v1328 = vunpack.c.l.b16 %v1269
      %v1329 = vunpack.c.l.b16 %v1273
      %v1330 = vunpack.c.l.b16 %v1276
      %v1331 = vunpack.c.l.b16 %v1280
      %v1332 = vunpack.c.l.b16 %v1283
      %v1333 = vunpack.c.l.b16 %v1287
      %v1334 = vunpack.c.l.b16 %v1290
      %v1335 = vunpack.c.l.b16 %v1294
      %v1336 = vunpack.c.l.b16 %v1297
      %v1337 = vunpack.c.l.b16 %v1301
      %v1338 = vunpack.c.l.b16 %v1304
      %v1339 = vpack.c.b16 %v1308, %v1307
      %v1340 = vpack.c.b16 %v1310, %v1309
      %v1341 = vpack.c.b16 %v1312, %v1311
      %v1342 = vpack.c.b16 %v1314, %v1313
      %v1343 = vpack.c.b16 %v1316, %v1315
      %v1344 = vpack.c.b16 %v1318, %v1317
      %v1345 = vpack.c.b16 %v1320, %v1319
      %v1346 = vpack.c.b16 %v1322, %v1321
      %v1347 = vpack.c.b16 %v1324, %v1323
      %v1348 = vpack.c.b16 %v1326, %v1325
      %v1349 = vpack.c.b16 %v1328, %v1327
      %v1350 = vpack.c.b16 %v1330, %v1329
      %v1351 = vpack.c.b16 %v1332, %v1331
      %v1352 = vpack.c.b16 %v1334, %v1333
      %v1353 = vpack.c.b16 %v1336, %v1335
      %v1354 = vpack.c.b16 %v1338, %v1337
      %v1356 = vsel %vm668, %v1339, 0
      %v1359 = vsel %vm668, %v1340, 0
      %v1362 = vsel %vm668, %v1341, 0
      %v1365 = vsel %vm668, %v1342, 0
      %v1368 = vsel %vm668, %v1343, 0
      %v1371 = vsel %vm668, %v1344, 0
      %v1374 = vsel %vm668, %v1345, 0
      %v1377 = vsel %vm668, %v1346, 0
      %v1380 = vsel %vm668, %v1347, 0
      %v1383 = vsel %vm668, %v1348, 0
      %v1386 = vsel %vm668, %v1349, 0
      %v1389 = vsel %vm668, %v1350, 0
      %v1392 = vsel %vm668, %v1351, 0
      %v1395 = vsel %vm668, %v1352, 0
      %v1398 = vsel %vm668, %v1353, 0
      %v1401 = vsel %vm668, %v1354, 0
      %v1404 = vsel %vm717, %v1306, 0
      %1406 = vmatprep.subr.bf16.mxu0 0
      %1407 = vmatpush1.bf16.msra.mxu0 %v1404
      %1408 = vmatprep.subr.bf16.mxu0 0
      %1409 = vmatpush1.bf16.msra.mxu0 0
      %1410 = vmatprep.subr.bf16.mxu0 0
      %1411 = vmatpush1.bf16.msra.mxu0 0
      %1412 = vmatprep.subr.bf16.mxu0 0
      %1413 = vmatpush1.bf16.msra.mxu0 0
      %1414 = vmatprep.subr.bf16.mxu0 0
      %1415 = vmatpush1.bf16.msra.mxu0 0
      %1416 = vmatprep.subr.bf16.mxu0 0
      %1417 = vmatpush1.bf16.msra.mxu0 0
      %1418 = vmatprep.subr.bf16.mxu0 0
      %1419 = vmatpush1.bf16.msra.mxu0 0
      %1420 = vmatprep.subr.bf16.mxu0 0
      %1421 = vmatpush1.bf16.msra.mxu0 0
      %1422 = vmatprep.subr.bf16.mxu0 0
      %1423 = vmatpush1.bf16.msra.mxu0 0
      %1424 = vmatprep.subr.bf16.mxu0 0
      %1425 = vmatpush1.bf16.msra.mxu0 0
      %1426 = vmatprep.subr.bf16.mxu0 0
      %1427 = vmatpush1.bf16.msra.mxu0 0
      %1428 = vmatprep.subr.bf16.mxu0 0
      %1429 = vmatpush1.bf16.msra.mxu0 0
      %1430 = vmatprep.subr.bf16.mxu0 0
      %1431 = vmatpush1.bf16.msra.mxu0 0
      %1432 = vmatprep.subr.bf16.mxu0 0
      %1433 = vmatpush1.bf16.msra.mxu0 0
      %1434 = vmatprep.subr.bf16.mxu0 0
      %1435 = vmatpush1.bf16.msra.mxu0 0
      %1436 = vmatprep.subr.bf16.mxu0 0
      %1437 = vmatpush1.bf16.msra.mxu0 0
      %1438 = vmatprep.mubr.bf16.mxu0 0
      %1439 = vmatmul.mubr.bf16.gmra.mrb[0].mxu0 %v1356
      %v1440 = vpop.f32.mrb[0].mxu0
      %v1441 = vadd.f32 0.0, %v1440
      %v1442 = vpop.f32.mrb[0].mxu0
      %v1443 = vpop.f32.mrb[0].mxu0
      %v1444 = vadd.f32 0.0, %v1443
      %v1445 = vpop.f32.mrb[0].mxu0
      %1446 = vmatprep.mubr.bf16.mxu0 0
      %1447 = vmatmul.mubr.bf16.gmra.mrb[0].mxu0 %v1359
      %v1448 = vpop.f32.mrb[0].mxu0
      %v1449 = vadd.f32 0.0, %v1448
      %v1450 = vpop.f32.mrb[0].mxu0
      %v1451 = vpop.f32.mrb[0].mxu0
      %v1452 = vadd.f32 0.0, %v1451
      %v1453 = vpop.f32.mrb[0].mxu0
      %1454 = vmatprep.mubr.bf16.mxu0 0
      %1455 = vmatmul.mubr.bf16.gmra.mrb[0].mxu0 %v1362
      %v1456 = vpop.f32.mrb[0].mxu0
      %v1457 = vadd.f32 0.0, %v1456
      %v1458 = vpop.f32.mrb[0].mxu0
      %v1459 = vpop.f32.mrb[0].mxu0
      %v1460 = vadd.f32 0.0, %v1459
      %v1461 = vpop.f32.mrb[0].mxu0
      %1462 = vmatprep.mubr.bf16.mxu0 0
      %1463 = vmatmul.mubr.bf16.gmra.mrb[0].mxu0 %v1365
      %v1464 = vpop.f32.mrb[0].mxu0
      %v1465 = vadd.f32 0.0, %v1464
      %v1466 = vpop.f32.mrb[0].mxu0
      %v1467 = vpop.f32.mrb[0].mxu0
      %v1468 = vadd.f32 0.0, %v1467
      %v1469 = vpop.f32.mrb[0].mxu0
      %1470 = vmatprep.mubr.bf16.mxu0 0
      %1471 = vmatmul.mubr.bf16.gmra.mrb[0].mxu0 %v1368
      %v1472 = vpop.f32.mrb[0].mxu0
      %v1473 = vadd.f32 0.0, %v1472
      %v1474 = vpop.f32.mrb[0].mxu0
      %v1475 = vpop.f32.mrb[0].mxu0
      %v1476 = vadd.f32 0.0, %v1475
      %v1477 = vpop.f32.mrb[0].mxu0
      %1478 = vmatprep.mubr.bf16.mxu0 0
      %1479 = vmatmul.mubr.bf16.gmra.mrb[0].mxu0 %v1371
      %v1480 = vpop.f32.mrb[0].mxu0
      %v1481 = vadd.f32 0.0, %v1480
      %v1482 = vpop.f32.mrb[0].mxu0
      %v1483 = vpop.f32.mrb[0].mxu0
      %v1484 = vadd.f32 0.0, %v1483
      %v1485 = vpop.f32.mrb[0].mxu0
      %1486 = vmatprep.mubr.bf16.mxu0 0
      %1487 = vmatmul.mubr.bf16.gmra.mrb[0].mxu0 %v1374
      %v1488 = vpop.f32.mrb[0].mxu0
      %v1489 = vadd.f32 0.0, %v1488
      %v1490 = vpop.f32.mrb[0].mxu0
      %v1491 = vpop.f32.mrb[0].mxu0
      %v1492 = vadd.f32 0.0, %v1491
      %v1493 = vpop.f32.mrb[0].mxu0
      %1494 = vmatprep.mubr.bf16.mxu0 0
      %1495 = vmatmul.mubr.bf16.gmra.mrb[0].mxu0 %v1377
      %v1496 = vpop.f32.mrb[0].mxu0
      %v1497 = vadd.f32 0.0, %v1496
      %v1498 = vpop.f32.mrb[0].mxu0
      %v1499 = vpop.f32.mrb[0].mxu0
      %v1500 = vadd.f32 0.0, %v1499
      %v1501 = vpop.f32.mrb[0].mxu0
      %1502 = vmatprep.mubr.bf16.mxu0 0
      %1503 = vmatmul.mubr.bf16.gmra.mrb[0].mxu0 %v1380
      %v1504 = vpop.f32.mrb[0].mxu0
      %v1505 = vadd.f32 0.0, %v1504
      %v1506 = vpop.f32.mrb[0].mxu0
      %v1507 = vpop.f32.mrb[0].mxu0
      %v1508 = vadd.f32 0.0, %v1507
      %v1509 = vpop.f32.mrb[0].mxu0
      %1510 = vmatprep.mubr.bf16.mxu0 0
      %1511 = vmatmul.mubr.bf16.gmra.mrb[0].mxu0 %v1383
      %v1512 = vpop.f32.mrb[0].mxu0
      %v1513 = vadd.f32 0.0, %v1512
      %v1514 = vpop.f32.mrb[0].mxu0
      %v1515 = vpop.f32.mrb[0].mxu0
      %v1516 = vadd.f32 0.0, %v1515
      %v1517 = vpop.f32.mrb[0].mxu0
      %1518 = vmatprep.mubr.bf16.mxu0 0
      %1519 = vmatmul.mubr.bf16.gmra.mrb[0].mxu0 %v1386
      %v1520 = vpop.f32.mrb[0].mxu0
      %v1521 = vadd.f32 0.0, %v1520
      %v1522 = vpop.f32.mrb[0].mxu0
      %v1523 = vpop.f32.mrb[0].mxu0
      %v1524 = vadd.f32 0.0, %v1523
      %v1525 = vpop.f32.mrb[0].mxu0
      %1526 = vmatprep.mubr.bf16.mxu0 0
      %1527 = vmatmul.mubr.bf16.gmra.mrb[0].mxu0 %v1389
      %v1528 = vpop.f32.mrb[0].mxu0
      %v1529 = vadd.f32 0.0, %v1528
      %v1530 = vpop.f32.mrb[0].mxu0
      %v1531 = vpop.f32.mrb[0].mxu0
      %v1532 = vadd.f32 0.0, %v1531
      %v1533 = vpop.f32.mrb[0].mxu0
      %1534 = vmatprep.mubr.bf16.mxu0 0
      %1535 = vmatmul.mubr.bf16.gmra.mrb[0].mxu0 %v1392
      %v1536 = vpop.f32.mrb[0].mxu0
      %v1537 = vadd.f32 0.0, %v1536
      %v1538 = vpop.f32.mrb[0].mxu0
      %v1539 = vpop.f32.mrb[0].mxu0
      %v1540 = vadd.f32 0.0, %v1539
      %v1541 = vpop.f32.mrb[0].mxu0
      %1542 = vmatprep.mubr.bf16.mxu0 0
      %1543 = vmatmul.mubr.bf16.gmra.mrb[0].mxu0 %v1395
      %v1544 = vpop.f32.mrb[0].mxu0
      %v1545 = vadd.f32 0.0, %v1544
      %v1546 = vpop.f32.mrb[0].mxu0
      %v1547 = vpop.f32.mrb[0].mxu0
      %v1548 = vadd.f32 0.0, %v1547
      %v1549 = vpop.f32.mrb[0].mxu0
      %1550 = vmatprep.mubr.bf16.mxu0 0
      %1551 = vmatmul.mubr.bf16.gmra.mrb[0].mxu0 %v1398
      %v1552 = vpop.f32.mrb[0].mxu0
      %v1553 = vadd.f32 0.0, %v1552
      %v1554 = vpop.f32.mrb[0].mxu0
      %v1555 = vpop.f32.mrb[0].mxu0
      %v1556 = vadd.f32 0.0, %v1555
      %v1557 = vpop.f32.mrb[0].mxu0
      %1558 = vmatprep.mubr.bf16.mxu0 0
      %1559 = vmatmul.mubr.bf16.gmra.mrb[0].mxu0 %v1401
      %v1560 = vpop.f32.mrb[0].mxu0
      %v1561 = vadd.f32 0.0, %v1560
      %v1562 = vpop.f32.mrb[0].mxu0
      %v1563 = vpop.f32.mrb[0].mxu0
      %v1564 = vadd.f32 0.0, %v1563
      %v1565 = vpop.f32.mrb[0].mxu0
      %1566 = vdwg.mxu0
      %v1567 = vadd.f32 %v1048, %v1441
      %v1568 = vadd.f32 %v1051, %v1444
      %v1569 = vadd.f32 %v1056, %v1449
      %v1570 = vadd.f32 %v1059, %v1452
      %v1571 = vadd.f32 %v1064, %v1457
      %v1572 = vadd.f32 %v1067, %v1460
      %v1573 = vadd.f32 %v1072, %v1465
      %v1574 = vadd.f32 %v1075, %v1468
      %v1575 = vadd.f32 %v1080, %v1473
      %v1576 = vadd.f32 %v1083, %v1476
      %v1577 = vadd.f32 %v1088, %v1481
      %v1578 = vadd.f32 %v1091, %v1484
      %v1579 = vadd.f32 %v1096, %v1489
      %v1580 = vadd.f32 %v1099, %v1492
      %v1581 = vadd.f32 %v1104, %v1497
      %v1582 = vadd.f32 %v1107, %v1500
      %v1583 = vadd.f32 %v1112, %v1505
      %v1584 = vadd.f32 %v1115, %v1508
      %v1585 = vadd.f32 %v1120, %v1513
      %v1586 = vadd.f32 %v1123, %v1516
      %v1587 = vadd.f32 %v1128, %v1521
      %v1588 = vadd.f32 %v1131, %v1524
      %v1589 = vadd.f32 %v1136, %v1529
      %v1590 = vadd.f32 %v1139, %v1532
      %v1591 = vadd.f32 %v1144, %v1537
      %v1592 = vadd.f32 %v1147, %v1540
      %v1593 = vadd.f32 %v1152, %v1545
      %v1594 = vadd.f32 %v1155, %v1548
      %v1595 = vadd.f32 %v1160, %v1553
      %v1596 = vadd.f32 %v1163, %v1556
      %v1597 = vadd.f32 %v1168, %v1561
      %v1598 = vadd.f32 %v1171, %v1564
      %s1599 = scalar_lea.vmem %s1, 12
      %v1600 = vld [vmem:[%s1599] sm:$0xf]
      %v1603 = vunpack.c.l.b16 %v224
      %v1604 = vunpack.c.l.b16 %v225
      %v1605 = vpack.c.b16 %v1604, %v1603
      %v1607 = vsel %vm668, %v1605, 0
      %v1610 = vsel %vm717, %v1600, 0
      %1612 = vmatprep.subr.bf16.mxu0 0
      %1613 = vmatpush1.bf16.msra.mxu0 %v1610
      %1614 = vmatprep.subr.bf16.mxu0 0
      %1615 = vmatpush1.bf16.msra.mxu0 0
      %1616 = vmatprep.subr.bf16.mxu0 0
      %1617 = vmatpush1.bf16.msra.mxu0 0
      %1618 = vmatprep.subr.bf16.mxu0 0
      %1619 = vmatpush1.bf16.msra.mxu0 0
      %1620 = vmatprep.subr.bf16.mxu0 0
      %1621 = vmatpush1.bf16.msra.mxu0 0
      %1622 = vmatprep.subr.bf16.mxu0 0
      %1623 = vmatpush1.bf16.msra.mxu0 0
      %1624 = vmatprep.subr.bf16.mxu0 0
      %1625 = vmatpush1.bf16.msra.mxu0 0
      %1626 = vmatprep.subr.bf16.mxu0 0
      %1627 = vmatpush1.bf16.msra.mxu0 0
      %1628 = vmatprep.subr.bf16.mxu0 0
      %1629 = vmatpush1.bf16.msra.mxu0 0
      %1630 = vmatprep.subr.bf16.mxu0 0
      %1631 = vmatpush1.bf16.msra.mxu0 0
      %1632 = vmatprep.subr.bf16.mxu0 0
      %1633 = vmatpush1.bf16.msra.mxu0 0
      %1634 = vmatprep.subr.bf16.mxu0 0
      %1635 = vmatpush1.bf16.msra.mxu0 0
      %1636 = vmatprep.subr.bf16.mxu0 0
      %1637 = vmatpush1.bf16.msra.mxu0 0
      %1638 = vmatprep.subr.bf16.mxu0 0
      %1639 = vmatpush1.bf16.msra.mxu0 0
      %1640 = vmatprep.subr.bf16.mxu0 0
      %1641 = vmatpush1.bf16.msra.mxu0 0
      %1642 = vmatprep.subr.bf16.mxu0 0
      %1643 = vmatpush1.bf16.msra.mxu0 0
      %1644 = vmatprep.mubr.bf16.mxu0 0
      %1645 = vmatmul.mubr.bf16.gmra.mrb[0].mxu0 %v966
      %v1646 = vpop.f32.mrb[0].mxu0
      %v1647 = vadd.f32 0.0, %v1646
      %v1648 = vpop.f32.mrb[0].mxu0
      %v1649 = vpop.f32.mrb[0].mxu0
      %v1650 = vadd.f32 0.0, %v1649
      %v1651 = vpop.f32.mrb[0].mxu0
      %1652 = vmatprep.mubr.bf16.mxu0 0
      %1653 = vmatmul.mubr.bf16.gmra.mrb[0].mxu0 %v969
      %v1654 = vpop.f32.mrb[0].mxu0
      %v1655 = vadd.f32 0.0, %v1654
      %v1656 = vpop.f32.mrb[0].mxu0
      %v1657 = vpop.f32.mrb[0].mxu0
      %v1658 = vadd.f32 0.0, %v1657
      %v1659 = vpop.f32.mrb[0].mxu0
      %1660 = vmatprep.mubr.bf16.mxu0 0
      %1661 = vmatmul.mubr.bf16.gmra.mrb[0].mxu0 %v972
      %v1662 = vpop.f32.mrb[0].mxu0
      %v1663 = vadd.f32 0.0, %v1662
      %v1664 = vpop.f32.mrb[0].mxu0
      %v1665 = vpop.f32.mrb[0].mxu0
      %v1666 = vadd.f32 0.0, %v1665
      %v1667 = vpop.f32.mrb[0].mxu0
      %1668 = vmatprep.mubr.bf16.mxu0 0
      %1669 = vmatmul.mubr.bf16.gmra.mrb[0].mxu0 %v975
      %v1670 = vpop.f32.mrb[0].mxu0
      %v1671 = vadd.f32 0.0, %v1670
      %v1672 = vpop.f32.mrb[0].mxu0
      %v1673 = vpop.f32.mrb[0].mxu0
      %v1674 = vadd.f32 0.0, %v1673
      %v1675 = vpop.f32.mrb[0].mxu0
      %1676 = vmatprep.mubr.bf16.mxu0 0
      %1677 = vmatmul.mubr.bf16.gmra.mrb[0].mxu0 %v978
      %v1678 = vpop.f32.mrb[0].mxu0
      %v1679 = vadd.f32 0.0, %v1678
      %v1680 = vpop.f32.mrb[0].mxu0
      %v1681 = vpop.f32.mrb[0].mxu0
      %v1682 = vadd.f32 0.0, %v1681
      %v1683 = vpop.f32.mrb[0].mxu0
      %1684 = vmatprep.mubr.bf16.mxu0 0
      %1685 = vmatmul.mubr.bf16.gmra.mrb[0].mxu0 %v981
      %v1686 = vpop.f32.mrb[0].mxu0
      %v1687 = vadd.f32 0.0, %v1686
      %v1688 = vpop.f32.mrb[0].mxu0
      %v1689 = vpop.f32.mrb[0].mxu0
      %v1690 = vadd.f32 0.0, %v1689
      %v1691 = vpop.f32.mrb[0].mxu0
      %1692 = vmatprep.mubr.bf16.mxu0 0
      %1693 = vmatmul.mubr.bf16.gmra.mrb[0].mxu0 %v984
      %v1694 = vpop.f32.mrb[0].mxu0
      %v1695 = vadd.f32 0.0, %v1694
      %v1696 = vpop.f32.mrb[0].mxu0
      %v1697 = vpop.f32.mrb[0].mxu0
      %v1698 = vadd.f32 0.0, %v1697
      %v1699 = vpop.f32.mrb[0].mxu0
      %1700 = vmatprep.mubr.bf16.mxu0 0
      %1701 = vmatmul.mubr.bf16.gmra.mrb[0].mxu0 %v987
      %v1702 = vpop.f32.mrb[0].mxu0
      %v1703 = vadd.f32 0.0, %v1702
      %v1704 = vpop.f32.mrb[0].mxu0
      %v1705 = vpop.f32.mrb[0].mxu0
      %v1706 = vadd.f32 0.0, %v1705
      %v1707 = vpop.f32.mrb[0].mxu0
      %1708 = vmatprep.mubr.bf16.mxu0 0
      %1709 = vmatmul.mubr.bf16.gmra.mrb[0].mxu0 %v990
      %v1710 = vpop.f32.mrb[0].mxu0
      %v1711 = vadd.f32 0.0, %v1710
      %v1712 = vpop.f32.mrb[0].mxu0
      %v1713 = vpop.f32.mrb[0].mxu0
      %v1714 = vadd.f32 0.0, %v1713
      %v1715 = vpop.f32.mrb[0].mxu0
      %1716 = vmatprep.mubr.bf16.mxu0 0
      %1717 = vmatmul.mubr.bf16.gmra.mrb[0].mxu0 %v993
      %v1718 = vpop.f32.mrb[0].mxu0
      %v1719 = vadd.f32 0.0, %v1718
      %v1720 = vpop.f32.mrb[0].mxu0
      %v1721 = vpop.f32.mrb[0].mxu0
      %v1722 = vadd.f32 0.0, %v1721
      %v1723 = vpop.f32.mrb[0].mxu0
      %1724 = vmatprep.mubr.bf16.mxu0 0
      %1725 = vmatmul.mubr.bf16.gmra.mrb[0].mxu0 %v996
      %v1726 = vpop.f32.mrb[0].mxu0
      %v1727 = vadd.f32 0.0, %v1726
      %v1728 = vpop.f32.mrb[0].mxu0
      %v1729 = vpop.f32.mrb[0].mxu0
      %v1730 = vadd.f32 0.0, %v1729
      %v1731 = vpop.f32.mrb[0].mxu0
      %1732 = vmatprep.mubr.bf16.mxu0 0
      %1733 = vmatmul.mubr.bf16.gmra.mrb[0].mxu0 %v999
      %v1734 = vpop.f32.mrb[0].mxu0
      %v1735 = vadd.f32 0.0, %v1734
      %v1736 = vpop.f32.mrb[0].mxu0
      %v1737 = vpop.f32.mrb[0].mxu0
      %v1738 = vadd.f32 0.0, %v1737
      %v1739 = vpop.f32.mrb[0].mxu0
      %1740 = vmatprep.mubr.bf16.mxu0 0
      %1741 = vmatmul.mubr.bf16.gmra.mrb[0].mxu0 %v1002
      %v1742 = vpop.f32.mrb[0].mxu0
      %v1743 = vadd.f32 0.0, %v1742
      %v1744 = vpop.f32.mrb[0].mxu0
      %v1745 = vpop.f32.mrb[0].mxu0
      %v1746 = vadd.f32 0.0, %v1745
      %v1747 = vpop.f32.mrb[0].mxu0
      %1748 = vmatprep.mubr.bf16.mxu0 0
      %1749 = vmatmul.mubr.bf16.gmra.mrb[0].mxu0 %v1005
      %v1750 = vpop.f32.mrb[0].mxu0
      %v1751 = vadd.f32 0.0, %v1750
      %v1752 = vpop.f32.mrb[0].mxu0
      %v1753 = vpop.f32.mrb[0].mxu0
      %v1754 = vadd.f32 0.0, %v1753
      %v1755 = vpop.f32.mrb[0].mxu0
      %1756 = vmatprep.mubr.bf16.mxu0 0
      %1757 = vmatmul.mubr.bf16.gmra.mrb[0].mxu0 %v1008
      %v1758 = vpop.f32.mrb[0].mxu0
      %v1759 = vadd.f32 0.0, %v1758
      %v1760 = vpop.f32.mrb[0].mxu0
      %v1761 = vpop.f32.mrb[0].mxu0
      %v1762 = vadd.f32 0.0, %v1761
      %v1763 = vpop.f32.mrb[0].mxu0
      %1764 = vmatprep.mubr.bf16.mxu0 0
      %1765 = vmatmul.mubr.bf16.gmra.mrb[0].mxu0 %v1607
      %v1766 = vpop.f32.mrb[0].mxu0
      %v1767 = vadd.f32 0.0, %v1766
      %v1768 = vpop.f32.mrb[0].mxu0
      %v1769 = vpop.f32.mrb[0].mxu0
      %v1770 = vadd.f32 0.0, %v1769
      %v1771 = vpop.f32.mrb[0].mxu0
      %1772 = vdwg.mxu0
      %v1773 = vadd.f32 %v1567, %v1647
      %v1774 = vadd.f32 %v1568, %v1650
      %v1775 = vadd.f32 %v1569, %v1655
      %v1776 = vadd.f32 %v1570, %v1658
      %v1777 = vadd.f32 %v1571, %v1663
      %v1778 = vadd.f32 %v1572, %v1666
      %v1779 = vadd.f32 %v1573, %v1671
      %v1780 = vadd.f32 %v1574, %v1674
      %v1781 = vadd.f32 %v1575, %v1679
      %v1782 = vadd.f32 %v1576, %v1682
      %v1783 = vadd.f32 %v1577, %v1687
      %v1784 = vadd.f32 %v1578, %v1690
      %v1785 = vadd.f32 %v1579, %v1695
      %v1786 = vadd.f32 %v1580, %v1698
      %v1787 = vadd.f32 %v1581, %v1703
      %v1788 = vadd.f32 %v1582, %v1706
      %v1789 = vadd.f32 %v1583, %v1711
      %v1790 = vadd.f32 %v1584, %v1714
      %v1791 = vadd.f32 %v1585, %v1719
      %v1792 = vadd.f32 %v1586, %v1722
      %v1793 = vadd.f32 %v1587, %v1727
      %v1794 = vadd.f32 %v1588, %v1730
      %v1795 = vadd.f32 %v1589, %v1735
      %v1796 = vadd.f32 %v1590, %v1738
      %v1797 = vadd.f32 %v1591, %v1743
      %v1798 = vadd.f32 %v1592, %v1746
      %v1799 = vadd.f32 %v1593, %v1751
      %v1800 = vadd.f32 %v1594, %v1754
      %v1801 = vadd.f32 %v1595, %v1759
      %v1802 = vadd.f32 %v1596, %v1762
      %v1803 = vadd.f32 %v1597, %v1767
      %v1804 = vadd.f32 %v1598, %v1770
      %v1806 = vshrl.u32 %v224, 16
      %v1808 = vrot.slane %v1806, 4
      %v1809 = vshll.u32 %v224, 16
      %v1811 = vrot.slane %v1809, 5
      %v1812 = vor.u32 %v1808, %v1811
      %v1813 = vrot.slane %v1812, 4
      %v1815 = vshll.u32 %v225, 16
      %v1817 = vrot.slane %v1815, 5
      %v1818 = vsel %vm233, %v1813, %v1817
      %v1819 = vshrl.u32 %v225, 16
      %v1821 = vrot.slane %v1819, 4
      %v1822 = vor.u32 %v1821, %v1817
      %v1823 = vrot.slane %v1822, 4
      %v1825 = vshll.u32 %v226, 16
      %v1827 = vrot.slane %v1825, 5
      %v1828 = vsel %vm233, %v1823, %v1827
      %s1829 = scalar_lea.vmem %s1, 16
      %v1830 = vld [vmem:[%s1829] sm:$0xf]
      %v1831 = vunpack.c.l.b16 %v1818
      %v1832 = vunpack.c.l.b16 %v1828
      %v1833 = vpack.c.b16 %v1832, %v1831
      %v1835 = vsel %vm668, %v1833, 0
      %v1838 = vsel %vm717, %v1830, 0
      %1840 = vmatprep.subr.bf16.mxu0 0
      %1841 = vmatpush1.bf16.msra.mxu0 %v1838
      %1842 = vmatprep.subr.bf16.mxu0 0
      %1843 = vmatpush1.bf16.msra.mxu0 0
      %1844 = vmatprep.subr.bf16.mxu0 0
      %1845 = vmatpush1.bf16.msra.mxu0 0
      %1846 = vmatprep.subr.bf16.mxu0 0
      %1847 = vmatpush1.bf16.msra.mxu0 0
      %1848 = vmatprep.subr.bf16.mxu0 0
      %1849 = vmatpush1.bf16.msra.mxu0 0
      %1850 = vmatprep.subr.bf16.mxu0 0
      %1851 = vmatpush1.bf16.msra.mxu0 0
      %1852 = vmatprep.subr.bf16.mxu0 0
      %1853 = vmatpush1.bf16.msra.mxu0 0
      %1854 = vmatprep.subr.bf16.mxu0 0
      %1855 = vmatpush1.bf16.msra.mxu0 0
      %1856 = vmatprep.subr.bf16.mxu0 0
      %1857 = vmatpush1.bf16.msra.mxu0 0
      %1858 = vmatprep.subr.bf16.mxu0 0
      %1859 = vmatpush1.bf16.msra.mxu0 0
      %1860 = vmatprep.subr.bf16.mxu0 0
      %1861 = vmatpush1.bf16.msra.mxu0 0
      %1862 = vmatprep.subr.bf16.mxu0 0
      %1863 = vmatpush1.bf16.msra.mxu0 0
      %1864 = vmatprep.subr.bf16.mxu0 0
      %1865 = vmatpush1.bf16.msra.mxu0 0
      %1866 = vmatprep.subr.bf16.mxu0 0
      %1867 = vmatpush1.bf16.msra.mxu0 0
      %1868 = vmatprep.subr.bf16.mxu0 0
      %1869 = vmatpush1.bf16.msra.mxu0 0
      %1870 = vmatprep.subr.bf16.mxu0 0
      %1871 = vmatpush1.bf16.msra.mxu0 0
      %1872 = vmatprep.mubr.bf16.mxu0 0
      %1873 = vmatmul.mubr.bf16.gmra.mrb[0].mxu0 %v673
      %v1874 = vpop.f32.mrb[0].mxu0
      %v1875 = vadd.f32 0.0, %v1874
      %v1876 = vpop.f32.mrb[0].mxu0
      %v1877 = vpop.f32.mrb[0].mxu0
      %v1878 = vadd.f32 0.0, %v1877
      %v1879 = vpop.f32.mrb[0].mxu0
      %1880 = vmatprep.mubr.bf16.mxu0 0
      %1881 = vmatmul.mubr.bf16.gmra.mrb[0].mxu0 %v676
      %v1882 = vpop.f32.mrb[0].mxu0
      %v1883 = vadd.f32 0.0, %v1882
      %v1884 = vpop.f32.mrb[0].mxu0
      %v1885 = vpop.f32.mrb[0].mxu0
      %v1886 = vadd.f32 0.0, %v1885
      %v1887 = vpop.f32.mrb[0].mxu0
      %1888 = vmatprep.mubr.bf16.mxu0 0
      %1889 = vmatmul.mubr.bf16.gmra.mrb[0].mxu0 %v679
      %v1890 = vpop.f32.mrb[0].mxu0
      %v1891 = vadd.f32 0.0, %v1890
      %v1892 = vpop.f32.mrb[0].mxu0
      %v1893 = vpop.f32.mrb[0].mxu0
      %v1894 = vadd.f32 0.0, %v1893
      %v1895 = vpop.f32.mrb[0].mxu0
      %1896 = vmatprep.mubr.bf16.mxu0 0
      %1897 = vmatmul.mubr.bf16.gmra.mrb[0].mxu0 %v682
      %v1898 = vpop.f32.mrb[0].mxu0
      %v1899 = vadd.f32 0.0, %v1898
      %v1900 = vpop.f32.mrb[0].mxu0
      %v1901 = vpop.f32.mrb[0].mxu0
      %v1902 = vadd.f32 0.0, %v1901
      %v1903 = vpop.f32.mrb[0].mxu0
      %1904 = vmatprep.mubr.bf16.mxu0 0
      %1905 = vmatmul.mubr.bf16.gmra.mrb[0].mxu0 %v685
      %v1906 = vpop.f32.mrb[0].mxu0
      %v1907 = vadd.f32 0.0, %v1906
      %v1908 = vpop.f32.mrb[0].mxu0
      %v1909 = vpop.f32.mrb[0].mxu0
      %v1910 = vadd.f32 0.0, %v1909
      %v1911 = vpop.f32.mrb[0].mxu0
      %1912 = vmatprep.mubr.bf16.mxu0 0
      %1913 = vmatmul.mubr.bf16.gmra.mrb[0].mxu0 %v688
      %v1914 = vpop.f32.mrb[0].mxu0
      %v1915 = vadd.f32 0.0, %v1914
      %v1916 = vpop.f32.mrb[0].mxu0
      %v1917 = vpop.f32.mrb[0].mxu0
      %v1918 = vadd.f32 0.0, %v1917
      %v1919 = vpop.f32.mrb[0].mxu0
      %1920 = vmatprep.mubr.bf16.mxu0 0
      %1921 = vmatmul.mubr.bf16.gmra.mrb[0].mxu0 %v691
      %v1922 = vpop.f32.mrb[0].mxu0
      %v1923 = vadd.f32 0.0, %v1922
      %v1924 = vpop.f32.mrb[0].mxu0
      %v1925 = vpop.f32.mrb[0].mxu0
      %v1926 = vadd.f32 0.0, %v1925
      %v1927 = vpop.f32.mrb[0].mxu0
      %1928 = vmatprep.mubr.bf16.mxu0 0
      %1929 = vmatmul.mubr.bf16.gmra.mrb[0].mxu0 %v694
      %v1930 = vpop.f32.mrb[0].mxu0
      %v1931 = vadd.f32 0.0, %v1930
      %v1932 = vpop.f32.mrb[0].mxu0
      %v1933 = vpop.f32.mrb[0].mxu0
      %v1934 = vadd.f32 0.0, %v1933
      %v1935 = vpop.f32.mrb[0].mxu0
      %1936 = vmatprep.mubr.bf16.mxu0 0
      %1937 = vmatmul.mubr.bf16.gmra.mrb[0].mxu0 %v697
      %v1938 = vpop.f32.mrb[0].mxu0
      %v1939 = vadd.f32 0.0, %v1938
      %v1940 = vpop.f32.mrb[0].mxu0
      %v1941 = vpop.f32.mrb[0].mxu0
      %v1942 = vadd.f32 0.0, %v1941
      %v1943 = vpop.f32.mrb[0].mxu0
      %1944 = vmatprep.mubr.bf16.mxu0 0
      %1945 = vmatmul.mubr.bf16.gmra.mrb[0].mxu0 %v700
      %v1946 = vpop.f32.mrb[0].mxu0
      %v1947 = vadd.f32 0.0, %v1946
      %v1948 = vpop.f32.mrb[0].mxu0
      %v1949 = vpop.f32.mrb[0].mxu0
      %v1950 = vadd.f32 0.0, %v1949
      %v1951 = vpop.f32.mrb[0].mxu0
      %1952 = vmatprep.mubr.bf16.mxu0 0
      %1953 = vmatmul.mubr.bf16.gmra.mrb[0].mxu0 %v703
      %v1954 = vpop.f32.mrb[0].mxu0
      %v1955 = vadd.f32 0.0, %v1954
      %v1956 = vpop.f32.mrb[0].mxu0
      %v1957 = vpop.f32.mrb[0].mxu0
      %v1958 = vadd.f32 0.0, %v1957
      %v1959 = vpop.f32.mrb[0].mxu0
      %1960 = vmatprep.mubr.bf16.mxu0 0
      %1961 = vmatmul.mubr.bf16.gmra.mrb[0].mxu0 %v706
      %v1962 = vpop.f32.mrb[0].mxu0
      %v1963 = vadd.f32 0.0, %v1962
      %v1964 = vpop.f32.mrb[0].mxu0
      %v1965 = vpop.f32.mrb[0].mxu0
      %v1966 = vadd.f32 0.0, %v1965
      %v1967 = vpop.f32.mrb[0].mxu0
      %1968 = vmatprep.mubr.bf16.mxu0 0
      %1969 = vmatmul.mubr.bf16.gmra.mrb[0].mxu0 %v709
      %v1970 = vpop.f32.mrb[0].mxu0
      %v1971 = vadd.f32 0.0, %v1970
      %v1972 = vpop.f32.mrb[0].mxu0
      %v1973 = vpop.f32.mrb[0].mxu0
      %v1974 = vadd.f32 0.0, %v1973
      %v1975 = vpop.f32.mrb[0].mxu0
      %1976 = vmatprep.mubr.bf16.mxu0 0
      %1977 = vmatmul.mubr.bf16.gmra.mrb[0].mxu0 %v712
      %v1978 = vpop.f32.mrb[0].mxu0
      %v1979 = vadd.f32 0.0, %v1978
      %v1980 = vpop.f32.mrb[0].mxu0
      %v1981 = vpop.f32.mrb[0].mxu0
      %v1982 = vadd.f32 0.0, %v1981
      %v1983 = vpop.f32.mrb[0].mxu0
      %1984 = vmatprep.mubr.bf16.mxu0 0
      %1985 = vmatmul.mubr.bf16.gmra.mrb[0].mxu0 %v715
      %v1986 = vpop.f32.mrb[0].mxu0
      %v1987 = vadd.f32 0.0, %v1986
      %v1988 = vpop.f32.mrb[0].mxu0
      %v1989 = vpop.f32.mrb[0].mxu0
      %v1990 = vadd.f32 0.0, %v1989
      %v1991 = vpop.f32.mrb[0].mxu0
      %1992 = vmatprep.mubr.bf16.mxu0 0
      %1993 = vmatmul.mubr.bf16.gmra.mrb[0].mxu0 %v1835
      %v1994 = vpop.f32.mrb[0].mxu0
      %v1995 = vadd.f32 0.0, %v1994
      %v1996 = vpop.f32.mrb[0].mxu0
      %v1997 = vpop.f32.mrb[0].mxu0
      %v1998 = vadd.f32 0.0, %v1997
      %v1999 = vpop.f32.mrb[0].mxu0
      %2000 = vdwg.mxu0
      %v2001 = vadd.f32 %v1773, %v1875
      %v2002 = vadd.f32 %v1774, %v1878
      %v2003 = vadd.f32 %v1775, %v1883
      %v2004 = vadd.f32 %v1776, %v1886
      %v2005 = vadd.f32 %v1777, %v1891
      %v2006 = vadd.f32 %v1778, %v1894
      %v2007 = vadd.f32 %v1779, %v1899
      %v2008 = vadd.f32 %v1780, %v1902
      %v2009 = vadd.f32 %v1781, %v1907
      %v2010 = vadd.f32 %v1782, %v1910
      %v2011 = vadd.f32 %v1783, %v1915
      %v2012 = vadd.f32 %v1784, %v1918
      %v2013 = vadd.f32 %v1785, %v1923
      %v2014 = vadd.f32 %v1786, %v1926
      %v2015 = vadd.f32 %v1787, %v1931
      %v2016 = vadd.f32 %v1788, %v1934
      %v2017 = vadd.f32 %v1789, %v1939
      %v2018 = vadd.f32 %v1790, %v1942
      %v2019 = vadd.f32 %v1791, %v1947
      %v2020 = vadd.f32 %v1792, %v1950
      %v2021 = vadd.f32 %v1793, %v1955
      %v2022 = vadd.f32 %v1794, %v1958
      %v2023 = vadd.f32 %v1795, %v1963
      %v2024 = vadd.f32 %v1796, %v1966
      %v2025 = vadd.f32 %v1797, %v1971
      %v2026 = vadd.f32 %v1798, %v1974
      %v2027 = vadd.f32 %v1799, %v1979
      %v2028 = vadd.f32 %v1800, %v1982
      %v2029 = vadd.f32 %v1801, %v1987
      %v2030 = vadd.f32 %v1802, %v1990
      %v2031 = vadd.f32 %v1803, %v1995
      %v2032 = vadd.f32 %v1804, %v1998
      %v2034 = vrot.slane %v224, 5
      %v2035 = vrot.slane %v2034, 4
      %v2036 = vrot.slane %v225, 5
      %v2037 = vsel %vm1192, %v2035, %v2036
      %v2038 = vrot.slane %v2036, 4
      %v2039 = vrot.slane %v226, 5
      %v2040 = vsel %vm1192, %v2038, %v2039
      %s2041 = scalar_lea.vmem %s1, 20
      %v2042 = vld [vmem:[%s2041] sm:$0xf]
      %v2043 = vunpack.c.l.b16 %v2037
      %v2044 = vunpack.c.l.b16 %v2040
      %v2045 = vpack.c.b16 %v2044, %v2043
      %v2047 = vsel %vm668, %v2045, 0
      %v2050 = vsel %vm717, %v2042, 0
      %2052 = vmatprep.subr.bf16.mxu0 0
      %2053 = vmatpush1.bf16.msra.mxu0 %v2050
      %2054 = vmatprep.subr.bf16.mxu0 0
      %2055 = vmatpush1.bf16.msra.mxu0 0
      %2056 = vmatprep.subr.bf16.mxu0 0
      %2057 = vmatpush1.bf16.msra.mxu0 0
      %2058 = vmatprep.subr.bf16.mxu0 0
      %2059 = vmatpush1.bf16.msra.mxu0 0
      %2060 = vmatprep.subr.bf16.mxu0 0
      %2061 = vmatpush1.bf16.msra.mxu0 0
      %2062 = vmatprep.subr.bf16.mxu0 0
      %2063 = vmatpush1.bf16.msra.mxu0 0
      %2064 = vmatprep.subr.bf16.mxu0 0
      %2065 = vmatpush1.bf16.msra.mxu0 0
      %2066 = vmatprep.subr.bf16.mxu0 0
      %2067 = vmatpush1.bf16.msra.mxu0 0
      %2068 = vmatprep.subr.bf16.mxu0 0
      %2069 = vmatpush1.bf16.msra.mxu0 0
      %2070 = vmatprep.subr.bf16.mxu0 0
      %2071 = vmatpush1.bf16.msra.mxu0 0
      %2072 = vmatprep.subr.bf16.mxu0 0
      %2073 = vmatpush1.bf16.msra.mxu0 0
      %2074 = vmatprep.subr.bf16.mxu0 0
      %2075 = vmatpush1.bf16.msra.mxu0 0
      %2076 = vmatprep.subr.bf16.mxu0 0
      %2077 = vmatpush1.bf16.msra.mxu0 0
      %2078 = vmatprep.subr.bf16.mxu0 0
      %2079 = vmatpush1.bf16.msra.mxu0 0
      %2080 = vmatprep.subr.bf16.mxu0 0
      %2081 = vmatpush1.bf16.msra.mxu0 0
      %2082 = vmatprep.subr.bf16.mxu0 0
      %2083 = vmatpush1.bf16.msra.mxu0 0
      %2084 = vmatprep.mubr.bf16.mxu0 0
      %2085 = vmatmul.mubr.bf16.gmra.mrb[0].mxu0 %v1359
      %v2086 = vpop.f32.mrb[0].mxu0
      %v2087 = vadd.f32 0.0, %v2086
      %v2088 = vpop.f32.mrb[0].mxu0
      %v2089 = vpop.f32.mrb[0].mxu0
      %v2090 = vadd.f32 0.0, %v2089
      %v2091 = vpop.f32.mrb[0].mxu0
      %2092 = vmatprep.mubr.bf16.mxu0 0
      %2093 = vmatmul.mubr.bf16.gmra.mrb[0].mxu0 %v1362
      %v2094 = vpop.f32.mrb[0].mxu0
      %v2095 = vadd.f32 0.0, %v2094
      %v2096 = vpop.f32.mrb[0].mxu0
      %v2097 = vpop.f32.mrb[0].mxu0
      %v2098 = vadd.f32 0.0, %v2097
      %v2099 = vpop.f32.mrb[0].mxu0
      %2100 = vmatprep.mubr.bf16.mxu0 0
      %2101 = vmatmul.mubr.bf16.gmra.mrb[0].mxu0 %v1365
      %v2102 = vpop.f32.mrb[0].mxu0
      %v2103 = vadd.f32 0.0, %v2102
      %v2104 = vpop.f32.mrb[0].mxu0
      %v2105 = vpop.f32.mrb[0].mxu0
      %v2106 = vadd.f32 0.0, %v2105
      %v2107 = vpop.f32.mrb[0].mxu0
      %2108 = vmatprep.mubr.bf16.mxu0 0
      %2109 = vmatmul.mubr.bf16.gmra.mrb[0].mxu0 %v1368
      %v2110 = vpop.f32.mrb[0].mxu0
      %v2111 = vadd.f32 0.0, %v2110
      %v2112 = vpop.f32.mrb[0].mxu0
      %v2113 = vpop.f32.mrb[0].mxu0
      %v2114 = vadd.f32 0.0, %v2113
      %v2115 = vpop.f32.mrb[0].mxu0
      %2116 = vmatprep.mubr.bf16.mxu0 0
      %2117 = vmatmul.mubr.bf16.gmra.mrb[0].mxu0 %v1371
      %v2118 = vpop.f32.mrb[0].mxu0
      %v2119 = vadd.f32 0.0, %v2118
      %v2120 = vpop.f32.mrb[0].mxu0
      %v2121 = vpop.f32.mrb[0].mxu0
      %v2122 = vadd.f32 0.0, %v2121
      %v2123 = vpop.f32.mrb[0].mxu0
      %2124 = vmatprep.mubr.bf16.mxu0 0
      %2125 = vmatmul.mubr.bf16.gmra.mrb[0].mxu0 %v1374
      %v2126 = vpop.f32.mrb[0].mxu0
      %v2127 = vadd.f32 0.0, %v2126
      %v2128 = vpop.f32.mrb[0].mxu0
      %v2129 = vpop.f32.mrb[0].mxu0
      %v2130 = vadd.f32 0.0, %v2129
      %v2131 = vpop.f32.mrb[0].mxu0
      %2132 = vmatprep.mubr.bf16.mxu0 0
      %2133 = vmatmul.mubr.bf16.gmra.mrb[0].mxu0 %v1377
      %v2134 = vpop.f32.mrb[0].mxu0
      %v2135 = vadd.f32 0.0, %v2134
      %v2136 = vpop.f32.mrb[0].mxu0
      %v2137 = vpop.f32.mrb[0].mxu0
      %v2138 = vadd.f32 0.0, %v2137
      %v2139 = vpop.f32.mrb[0].mxu0
      %2140 = vmatprep.mubr.bf16.mxu0 0
      %2141 = vmatmul.mubr.bf16.gmra.mrb[0].mxu0 %v1380
      %v2142 = vpop.f32.mrb[0].mxu0
      %v2143 = vadd.f32 0.0, %v2142
      %v2144 = vpop.f32.mrb[0].mxu0
      %v2145 = vpop.f32.mrb[0].mxu0
      %v2146 = vadd.f32 0.0, %v2145
      %v2147 = vpop.f32.mrb[0].mxu0
      %2148 = vmatprep.mubr.bf16.mxu0 0
      %2149 = vmatmul.mubr.bf16.gmra.mrb[0].mxu0 %v1383
      %v2150 = vpop.f32.mrb[0].mxu0
      %v2151 = vadd.f32 0.0, %v2150
      %v2152 = vpop.f32.mrb[0].mxu0
      %v2153 = vpop.f32.mrb[0].mxu0
      %v2154 = vadd.f32 0.0, %v2153
      %v2155 = vpop.f32.mrb[0].mxu0
      %2156 = vmatprep.mubr.bf16.mxu0 0
      %2157 = vmatmul.mubr.bf16.gmra.mrb[0].mxu0 %v1386
      %v2158 = vpop.f32.mrb[0].mxu0
      %v2159 = vadd.f32 0.0, %v2158
      %v2160 = vpop.f32.mrb[0].mxu0
      %v2161 = vpop.f32.mrb[0].mxu0
      %v2162 = vadd.f32 0.0, %v2161
      %v2163 = vpop.f32.mrb[0].mxu0
      %2164 = vmatprep.mubr.bf16.mxu0 0
      %2165 = vmatmul.mubr.bf16.gmra.mrb[0].mxu0 %v1389
      %v2166 = vpop.f32.mrb[0].mxu0
      %v2167 = vadd.f32 0.0, %v2166
      %v2168 = vpop.f32.mrb[0].mxu0
      %v2169 = vpop.f32.mrb[0].mxu0
      %v2170 = vadd.f32 0.0, %v2169
      %v2171 = vpop.f32.mrb[0].mxu0
      %2172 = vmatprep.mubr.bf16.mxu0 0
      %2173 = vmatmul.mubr.bf16.gmra.mrb[0].mxu0 %v1392
      %v2174 = vpop.f32.mrb[0].mxu0
      %v2175 = vadd.f32 0.0, %v2174
      %v2176 = vpop.f32.mrb[0].mxu0
      %v2177 = vpop.f32.mrb[0].mxu0
      %v2178 = vadd.f32 0.0, %v2177
      %v2179 = vpop.f32.mrb[0].mxu0
      %2180 = vmatprep.mubr.bf16.mxu0 0
      %2181 = vmatmul.mubr.bf16.gmra.mrb[0].mxu0 %v1395
      %v2182 = vpop.f32.mrb[0].mxu0
      %v2183 = vadd.f32 0.0, %v2182
      %v2184 = vpop.f32.mrb[0].mxu0
      %v2185 = vpop.f32.mrb[0].mxu0
      %v2186 = vadd.f32 0.0, %v2185
      %v2187 = vpop.f32.mrb[0].mxu0
      %2188 = vmatprep.mubr.bf16.mxu0 0
      %2189 = vmatmul.mubr.bf16.gmra.mrb[0].mxu0 %v1398
      %v2190 = vpop.f32.mrb[0].mxu0
      %v2191 = vadd.f32 0.0, %v2190
      %v2192 = vpop.f32.mrb[0].mxu0
      %v2193 = vpop.f32.mrb[0].mxu0
      %v2194 = vadd.f32 0.0, %v2193
      %v2195 = vpop.f32.mrb[0].mxu0
      %2196 = vmatprep.mubr.bf16.mxu0 0
      %2197 = vmatmul.mubr.bf16.gmra.mrb[0].mxu0 %v1401
      %v2198 = vpop.f32.mrb[0].mxu0
      %v2199 = vadd.f32 0.0, %v2198
      %v2200 = vpop.f32.mrb[0].mxu0
      %v2201 = vpop.f32.mrb[0].mxu0
      %v2202 = vadd.f32 0.0, %v2201
      %v2203 = vpop.f32.mrb[0].mxu0
      %2204 = vmatprep.mubr.bf16.mxu0 0
      %2205 = vmatmul.mubr.bf16.gmra.mrb[0].mxu0 %v2047
      %v2206 = vpop.f32.mrb[0].mxu0
      %v2207 = vadd.f32 0.0, %v2206
      %v2208 = vpop.f32.mrb[0].mxu0
      %v2209 = vpop.f32.mrb[0].mxu0
      %v2210 = vadd.f32 0.0, %v2209
      %v2211 = vpop.f32.mrb[0].mxu0
      %2212 = vdwg.mxu0
      %v2213 = vadd.f32 %v2001, %v2087
      %v2214 = vadd.f32 %v2002, %v2090
      %v2215 = vadd.f32 %v2003, %v2095
      %v2216 = vadd.f32 %v2004, %v2098
      %v2217 = vadd.f32 %v2005, %v2103
      %v2218 = vadd.f32 %v2006, %v2106
      %v2219 = vadd.f32 %v2007, %v2111
      %v2220 = vadd.f32 %v2008, %v2114
      %v2221 = vadd.f32 %v2009, %v2119
      %v2222 = vadd.f32 %v2010, %v2122
      %v2223 = vadd.f32 %v2011, %v2127
      %v2224 = vadd.f32 %v2012, %v2130
      %v2225 = vadd.f32 %v2013, %v2135
      %v2226 = vadd.f32 %v2014, %v2138
      %v2227 = vadd.f32 %v2015, %v2143
      %v2228 = vadd.f32 %v2016, %v2146
      %v2229 = vadd.f32 %v2017, %v2151
      %v2230 = vadd.f32 %v2018, %v2154
      %v2231 = vadd.f32 %v2019, %v2159
      %v2232 = vadd.f32 %v2020, %v2162
      %v2233 = vadd.f32 %v2021, %v2167
      %v2234 = vadd.f32 %v2022, %v2170
      %v2235 = vadd.f32 %v2023, %v2175
      %v2236 = vadd.f32 %v2024, %v2178
      %v2237 = vadd.f32 %v2025, %v2183
      %v2238 = vadd.f32 %v2026, %v2186
      %v2239 = vadd.f32 %v2027, %v2191
      %v2240 = vadd.f32 %v2028, %v2194
      %v2241 = vadd.f32 %v2029, %v2199
      %v2242 = vadd.f32 %v2030, %v2202
      %v2243 = vadd.f32 %v2031, %v2207
      %v2244 = vadd.f32 %v2032, %v2210
      %s2245 = scalar_lea.vmem %s1, 24
      %v2246 = vld [vmem:[%s2245] sm:$0xf]
      %v2249 = vunpack.c.l.b16 %v227
      %v2250 = vunpack.c.l.b16 %v228
      %v2251 = vpack.c.b16 %v2250, %v2249
      %v2253 = vsel %vm668, %v2251, 0
      %v2256 = vsel %vm717, %v2246, 0
      %2258 = vmatprep.subr.bf16.mxu0 0
      %2259 = vmatpush1.bf16.msra.mxu0 %v2256
      %2260 = vmatprep.subr.bf16.mxu0 0
      %2261 = vmatpush1.bf16.msra.mxu0 0
      %2262 = vmatprep.subr.bf16.mxu0 0
      %2263 = vmatpush1.bf16.msra.mxu0 0
      %2264 = vmatprep.subr.bf16.mxu0 0
      %2265 = vmatpush1.bf16.msra.mxu0 0
      %2266 = vmatprep.subr.bf16.mxu0 0
      %2267 = vmatpush1.bf16.msra.mxu0 0
      %2268 = vmatprep.subr.bf16.mxu0 0
      %2269 = vmatpush1.bf16.msra.mxu0 0
      %2270 = vmatprep.subr.bf16.mxu0 0
      %2271 = vmatpush1.bf16.msra.mxu0 0
      %2272 = vmatprep.subr.bf16.mxu0 0
      %2273 = vmatpush1.bf16.msra.mxu0 0
      %2274 = vmatprep.subr.bf16.mxu0 0
      %2275 = vmatpush1.bf16.msra.mxu0 0
      %2276 = vmatprep.subr.bf16.mxu0 0
      %2277 = vmatpush1.bf16.msra.mxu0 0
      %2278 = vmatprep.subr.bf16.mxu0 0
      %2279 = vmatpush1.bf16.msra.mxu0 0
      %2280 = vmatprep.subr.bf16.mxu0 0
      %2281 = vmatpush1.bf16.msra.mxu0 0
      %2282 = vmatprep.subr.bf16.mxu0 0
      %2283 = vmatpush1.bf16.msra.mxu0 0
      %2284 = vmatprep.subr.bf16.mxu0 0
      %2285 = vmatpush1.bf16.msra.mxu0 0
      %2286 = vmatprep.subr.bf16.mxu0 0
      %2287 = vmatpush1.bf16.msra.mxu0 0
      %2288 = vmatprep.subr.bf16.mxu0 0
      %2289 = vmatpush1.bf16.msra.mxu0 0
      %2290 = vmatprep.mubr.bf16.mxu0 0
      %2291 = vmatmul.mubr.bf16.gmra.mrb[0].mxu0 %v969
      %v2292 = vpop.f32.mrb[0].mxu0
      %v2293 = vadd.f32 0.0, %v2292
      %v2294 = vpop.f32.mrb[0].mxu0
      %v2295 = vpop.f32.mrb[0].mxu0
      %v2296 = vadd.f32 0.0, %v2295
      %v2297 = vpop.f32.mrb[0].mxu0
      %2298 = vmatprep.mubr.bf16.mxu0 0
      %2299 = vmatmul.mubr.bf16.gmra.mrb[0].mxu0 %v972
      %v2300 = vpop.f32.mrb[0].mxu0
      %v2301 = vadd.f32 0.0, %v2300
      %v2302 = vpop.f32.mrb[0].mxu0
      %v2303 = vpop.f32.mrb[0].mxu0
      %v2304 = vadd.f32 0.0, %v2303
      %v2305 = vpop.f32.mrb[0].mxu0
      %2306 = vmatprep.mubr.bf16.mxu0 0
      %2307 = vmatmul.mubr.bf16.gmra.mrb[0].mxu0 %v975
      %v2308 = vpop.f32.mrb[0].mxu0
      %v2309 = vadd.f32 0.0, %v2308
      %v2310 = vpop.f32.mrb[0].mxu0
      %v2311 = vpop.f32.mrb[0].mxu0
      %v2312 = vadd.f32 0.0, %v2311
      %v2313 = vpop.f32.mrb[0].mxu0
      %2314 = vmatprep.mubr.bf16.mxu0 0
      %2315 = vmatmul.mubr.bf16.gmra.mrb[0].mxu0 %v978
      %v2316 = vpop.f32.mrb[0].mxu0
      %v2317 = vadd.f32 0.0, %v2316
      %v2318 = vpop.f32.mrb[0].mxu0
      %v2319 = vpop.f32.mrb[0].mxu0
      %v2320 = vadd.f32 0.0, %v2319
      %v2321 = vpop.f32.mrb[0].mxu0
      %2322 = vmatprep.mubr.bf16.mxu0 0
      %2323 = vmatmul.mubr.bf16.gmra.mrb[0].mxu0 %v981
      %v2324 = vpop.f32.mrb[0].mxu0
      %v2325 = vadd.f32 0.0, %v2324
      %v2326 = vpop.f32.mrb[0].mxu0
      %v2327 = vpop.f32.mrb[0].mxu0
      %v2328 = vadd.f32 0.0, %v2327
      %v2329 = vpop.f32.mrb[0].mxu0
      %2330 = vmatprep.mubr.bf16.mxu0 0
      %2331 = vmatmul.mubr.bf16.gmra.mrb[0].mxu0 %v984
      %v2332 = vpop.f32.mrb[0].mxu0
      %v2333 = vadd.f32 0.0, %v2332
      %v2334 = vpop.f32.mrb[0].mxu0
      %v2335 = vpop.f32.mrb[0].mxu0
      %v2336 = vadd.f32 0.0, %v2335
      %v2337 = vpop.f32.mrb[0].mxu0
      %2338 = vmatprep.mubr.bf16.mxu0 0
      %2339 = vmatmul.mubr.bf16.gmra.mrb[0].mxu0 %v987
      %v2340 = vpop.f32.mrb[0].mxu0
      %v2341 = vadd.f32 0.0, %v2340
      %v2342 = vpop.f32.mrb[0].mxu0
      %v2343 = vpop.f32.mrb[0].mxu0
      %v2344 = vadd.f32 0.0, %v2343
      %v2345 = vpop.f32.mrb[0].mxu0
      %2346 = vmatprep.mubr.bf16.mxu0 0
      %2347 = vmatmul.mubr.bf16.gmra.mrb[0].mxu0 %v990
      %v2348 = vpop.f32.mrb[0].mxu0
      %v2349 = vadd.f32 0.0, %v2348
      %v2350 = vpop.f32.mrb[0].mxu0
      %v2351 = vpop.f32.mrb[0].mxu0
      %v2352 = vadd.f32 0.0, %v2351
      %v2353 = vpop.f32.mrb[0].mxu0
      %2354 = vmatprep.mubr.bf16.mxu0 0
      %2355 = vmatmul.mubr.bf16.gmra.mrb[0].mxu0 %v993
      %v2356 = vpop.f32.mrb[0].mxu0
      %v2357 = vadd.f32 0.0, %v2356
      %v2358 = vpop.f32.mrb[0].mxu0
      %v2359 = vpop.f32.mrb[0].mxu0
      %v2360 = vadd.f32 0.0, %v2359
      %v2361 = vpop.f32.mrb[0].mxu0
      %2362 = vmatprep.mubr.bf16.mxu0 0
      %2363 = vmatmul.mubr.bf16.gmra.mrb[0].mxu0 %v996
      %v2364 = vpop.f32.mrb[0].mxu0
      %v2365 = vadd.f32 0.0, %v2364
      %v2366 = vpop.f32.mrb[0].mxu0
      %v2367 = vpop.f32.mrb[0].mxu0
      %v2368 = vadd.f32 0.0, %v2367
      %v2369 = vpop.f32.mrb[0].mxu0
      %2370 = vmatprep.mubr.bf16.mxu0 0
      %2371 = vmatmul.mubr.bf16.gmra.mrb[0].mxu0 %v999
      %v2372 = vpop.f32.mrb[0].mxu0
      %v2373 = vadd.f32 0.0, %v2372
      %v2374 = vpop.f32.mrb[0].mxu0
      %v2375 = vpop.f32.mrb[0].mxu0
      %v2376 = vadd.f32 0.0, %v2375
      %v2377 = vpop.f32.mrb[0].mxu0
      %2378 = vmatprep.mubr.bf16.mxu0 0
      %2379 = vmatmul.mubr.bf16.gmra.mrb[0].mxu0 %v1002
      %v2380 = vpop.f32.mrb[0].mxu0
      %v2381 = vadd.f32 0.0, %v2380
      %v2382 = vpop.f32.mrb[0].mxu0
      %v2383 = vpop.f32.mrb[0].mxu0
      %v2384 = vadd.f32 0.0, %v2383
      %v2385 = vpop.f32.mrb[0].mxu0
      %2386 = vmatprep.mubr.bf16.mxu0 0
      %2387 = vmatmul.mubr.bf16.gmra.mrb[0].mxu0 %v1005
      %v2388 = vpop.f32.mrb[0].mxu0
      %v2389 = vadd.f32 0.0, %v2388
      %v2390 = vpop.f32.mrb[0].mxu0
      %v2391 = vpop.f32.mrb[0].mxu0
      %v2392 = vadd.f32 0.0, %v2391
      %v2393 = vpop.f32.mrb[0].mxu0
      %2394 = vmatprep.mubr.bf16.mxu0 0
      %2395 = vmatmul.mubr.bf16.gmra.mrb[0].mxu0 %v1008
      %v2396 = vpop.f32.mrb[0].mxu0
      %v2397 = vadd.f32 0.0, %v2396
      %v2398 = vpop.f32.mrb[0].mxu0
      %v2399 = vpop.f32.mrb[0].mxu0
      %v2400 = vadd.f32 0.0, %v2399
      %v2401 = vpop.f32.mrb[0].mxu0
      %2402 = vmatprep.mubr.bf16.mxu0 0
      %2403 = vmatmul.mubr.bf16.gmra.mrb[0].mxu0 %v1607
      %v2404 = vpop.f32.mrb[0].mxu0
      %v2405 = vadd.f32 0.0, %v2404
      %v2406 = vpop.f32.mrb[0].mxu0
      %v2407 = vpop.f32.mrb[0].mxu0
      %v2408 = vadd.f32 0.0, %v2407
      %v2409 = vpop.f32.mrb[0].mxu0
      %2410 = vmatprep.mubr.bf16.mxu0 0
      %2411 = vmatmul.mubr.bf16.gmra.mrb[0].mxu0 %v2253
      %v2412 = vpop.f32.mrb[0].mxu0
      %v2413 = vadd.f32 0.0, %v2412
      %v2414 = vpop.f32.mrb[0].mxu0
      %v2415 = vpop.f32.mrb[0].mxu0
      %v2416 = vadd.f32 0.0, %v2415
      %v2417 = vpop.f32.mrb[0].mxu0
      %2418 = vdwg.mxu0
      %v2419 = vadd.f32 %v2213, %v2293
      %v2420 = vadd.f32 %v2214, %v2296
      %v2421 = vadd.f32 %v2215, %v2301
      %v2422 = vadd.f32 %v2216, %v2304
      %v2423 = vadd.f32 %v2217, %v2309
      %v2424 = vadd.f32 %v2218, %v2312
      %v2425 = vadd.f32 %v2219, %v2317
      %v2426 = vadd.f32 %v2220, %v2320
      %v2427 = vadd.f32 %v2221, %v2325
      %v2428 = vadd.f32 %v2222, %v2328
      %v2429 = vadd.f32 %v2223, %v2333
      %v2430 = vadd.f32 %v2224, %v2336
      %v2431 = vadd.f32 %v2225, %v2341
      %v2432 = vadd.f32 %v2226, %v2344
      %v2433 = vadd.f32 %v2227, %v2349
      %v2434 = vadd.f32 %v2228, %v2352
      %v2435 = vadd.f32 %v2229, %v2357
      %v2436 = vadd.f32 %v2230, %v2360
      %v2437 = vadd.f32 %v2231, %v2365
      %v2438 = vadd.f32 %v2232, %v2368
      %v2439 = vadd.f32 %v2233, %v2373
      %v2440 = vadd.f32 %v2234, %v2376
      %v2441 = vadd.f32 %v2235, %v2381
      %v2442 = vadd.f32 %v2236, %v2384
      %v2443 = vadd.f32 %v2237, %v2389
      %v2444 = vadd.f32 %v2238, %v2392
      %v2445 = vadd.f32 %v2239, %v2397
      %v2446 = vadd.f32 %v2240, %v2400
      %v2447 = vadd.f32 %v2241, %v2405
      %v2448 = vadd.f32 %v2242, %v2408
      %v2449 = vadd.f32 %v2243, %v2413
      %v2450 = vadd.f32 %v2244, %v2416
      %v2452 = vshrl.u32 %v227, 16
      %v2454 = vrot.slane %v2452, 4
      %v2455 = vshll.u32 %v227, 16
      %v2457 = vrot.slane %v2455, 5
      %v2458 = vor.u32 %v2454, %v2457
      %v2459 = vrot.slane %v2458, 4
      %v2461 = vshll.u32 %v228, 16
      %v2463 = vrot.slane %v2461, 5
      %v2464 = vsel %vm233, %v2459, %v2463
      %v2465 = vshrl.u32 %v228, 16
      %v2467 = vrot.slane %v2465, 4
      %v2468 = vor.u32 %v2467, %v2463
      %v2469 = vrot.slane %v2468, 4
      %v2471 = vshll.u32 %v229, 16
      %v2473 = vrot.slane %v2471, 5
      %v2474 = vsel %vm233, %v2469, %v2473
      %s2475 = scalar_lea.vmem %s1, 28
      %v2476 = vld [vmem:[%s2475] sm:$0xf]
      %v2477 = vunpack.c.l.b16 %v2464
      %v2478 = vunpack.c.l.b16 %v2474
      %v2479 = vpack.c.b16 %v2478, %v2477
      %v2481 = vsel %vm668, %v2479, 0
      %v2484 = vsel %vm717, %v2476, 0
      %2486 = vmatprep.subr.bf16.mxu0 0
      %2487 = vmatpush1.bf16.msra.mxu0 %v2484
      %2488 = vmatprep.subr.bf16.mxu0 0
      %2489 = vmatpush1.bf16.msra.mxu0 0
      %2490 = vmatprep.subr.bf16.mxu0 0
      %2491 = vmatpush1.bf16.msra.mxu0 0
      %2492 = vmatprep.subr.bf16.mxu0 0
      %2493 = vmatpush1.bf16.msra.mxu0 0
      %2494 = vmatprep.subr.bf16.mxu0 0
      %2495 = vmatpush1.bf16.msra.mxu0 0
      %2496 = vmatprep.subr.bf16.mxu0 0
      %2497 = vmatpush1.bf16.msra.mxu0 0
      %2498 = vmatprep.subr.bf16.mxu0 0
      %2499 = vmatpush1.bf16.msra.mxu0 0
      %2500 = vmatprep.subr.bf16.mxu0 0
      %2501 = vmatpush1.bf16.msra.mxu0 0
      %2502 = vmatprep.subr.bf16.mxu0 0
      %2503 = vmatpush1.bf16.msra.mxu0 0
      %2504 = vmatprep.subr.bf16.mxu0 0
      %2505 = vmatpush1.bf16.msra.mxu0 0
      %2506 = vmatprep.subr.bf16.mxu0 0
      %2507 = vmatpush1.bf16.msra.mxu0 0
      %2508 = vmatprep.subr.bf16.mxu0 0
      %2509 = vmatpush1.bf16.msra.mxu0 0
      %2510 = vmatprep.subr.bf16.mxu0 0
      %2511 = vmatpush1.bf16.msra.mxu0 0
      %2512 = vmatprep.subr.bf16.mxu0 0
      %2513 = vmatpush1.bf16.msra.mxu0 0
      %2514 = vmatprep.subr.bf16.mxu0 0
      %2515 = vmatpush1.bf16.msra.mxu0 0
      %2516 = vmatprep.subr.bf16.mxu0 0
      %2517 = vmatpush1.bf16.msra.mxu0 0
      %2518 = vmatprep.mubr.bf16.mxu0 0
      %2519 = vmatmul.mubr.bf16.gmra.mrb[0].mxu0 %v676
      %v2520 = vpop.f32.mrb[0].mxu0
      %v2521 = vadd.f32 0.0, %v2520
      %v2522 = vpop.f32.mrb[0].mxu0
      %v2523 = vpop.f32.mrb[0].mxu0
      %v2524 = vadd.f32 0.0, %v2523
      %v2525 = vpop.f32.mrb[0].mxu0
      %2526 = vmatprep.mubr.bf16.mxu0 0
      %2527 = vmatmul.mubr.bf16.gmra.mrb[0].mxu0 %v679
      %v2528 = vpop.f32.mrb[0].mxu0
      %v2529 = vadd.f32 0.0, %v2528
      %v2530 = vpop.f32.mrb[0].mxu0
      %v2531 = vpop.f32.mrb[0].mxu0
      %v2532 = vadd.f32 0.0, %v2531
      %v2533 = vpop.f32.mrb[0].mxu0
      %2534 = vmatprep.mubr.bf16.mxu0 0
      %2535 = vmatmul.mubr.bf16.gmra.mrb[0].mxu0 %v682
      %v2536 = vpop.f32.mrb[0].mxu0
      %v2537 = vadd.f32 0.0, %v2536
      %v2538 = vpop.f32.mrb[0].mxu0
      %v2539 = vpop.f32.mrb[0].mxu0
      %v2540 = vadd.f32 0.0, %v2539
      %v2541 = vpop.f32.mrb[0].mxu0
      %2542 = vmatprep.mubr.bf16.mxu0 0
      %2543 = vmatmul.mubr.bf16.gmra.mrb[0].mxu0 %v685
      %v2544 = vpop.f32.mrb[0].mxu0
      %v2545 = vadd.f32 0.0, %v2544
      %v2546 = vpop.f32.mrb[0].mxu0
      %v2547 = vpop.f32.mrb[0].mxu0
      %v2548 = vadd.f32 0.0, %v2547
      %v2549 = vpop.f32.mrb[0].mxu0
      %2550 = vmatprep.mubr.bf16.mxu0 0
      %2551 = vmatmul.mubr.bf16.gmra.mrb[0].mxu0 %v688
      %v2552 = vpop.f32.mrb[0].mxu0
      %v2553 = vadd.f32 0.0, %v2552
      %v2554 = vpop.f32.mrb[0].mxu0
      %v2555 = vpop.f32.mrb[0].mxu0
      %v2556 = vadd.f32 0.0, %v2555
      %v2557 = vpop.f32.mrb[0].mxu0
      %2558 = vmatprep.mubr.bf16.mxu0 0
      %2559 = vmatmul.mubr.bf16.gmra.mrb[0].mxu0 %v691
      %v2560 = vpop.f32.mrb[0].mxu0
      %v2561 = vadd.f32 0.0, %v2560
      %v2562 = vpop.f32.mrb[0].mxu0
      %v2563 = vpop.f32.mrb[0].mxu0
      %v2564 = vadd.f32 0.0, %v2563
      %v2565 = vpop.f32.mrb[0].mxu0
      %2566 = vmatprep.mubr.bf16.mxu0 0
      %2567 = vmatmul.mubr.bf16.gmra.mrb[0].mxu0 %v694
      %v2568 = vpop.f32.mrb[0].mxu0
      %v2569 = vadd.f32 0.0, %v2568
      %v2570 = vpop.f32.mrb[0].mxu0
      %v2571 = vpop.f32.mrb[0].mxu0
      %v2572 = vadd.f32 0.0, %v2571
      %v2573 = vpop.f32.mrb[0].mxu0
      %2574 = vmatprep.mubr.bf16.mxu0 0
      %2575 = vmatmul.mubr.bf16.gmra.mrb[0].mxu0 %v697
      %v2576 = vpop.f32.mrb[0].mxu0
      %v2577 = vadd.f32 0.0, %v2576
      %v2578 = vpop.f32.mrb[0].mxu0
      %v2579 = vpop.f32.mrb[0].mxu0
      %v2580 = vadd.f32 0.0, %v2579
      %v2581 = vpop.f32.mrb[0].mxu0
      %2582 = vmatprep.mubr.bf16.mxu0 0
      %2583 = vmatmul.mubr.bf16.gmra.mrb[0].mxu0 %v700
      %v2584 = vpop.f32.mrb[0].mxu0
      %v2585 = vadd.f32 0.0, %v2584
      %v2586 = vpop.f32.mrb[0].mxu0
      %v2587 = vpop.f32.mrb[0].mxu0
      %v2588 = vadd.f32 0.0, %v2587
      %v2589 = vpop.f32.mrb[0].mxu0
      %2590 = vmatprep.mubr.bf16.mxu0 0
      %2591 = vmatmul.mubr.bf16.gmra.mrb[0].mxu0 %v703
      %v2592 = vpop.f32.mrb[0].mxu0
      %v2593 = vadd.f32 0.0, %v2592
      %v2594 = vpop.f32.mrb[0].mxu0
      %v2595 = vpop.f32.mrb[0].mxu0
      %v2596 = vadd.f32 0.0, %v2595
      %v2597 = vpop.f32.mrb[0].mxu0
      %2598 = vmatprep.mubr.bf16.mxu0 0
      %2599 = vmatmul.mubr.bf16.gmra.mrb[0].mxu0 %v706
      %v2600 = vpop.f32.mrb[0].mxu0
      %v2601 = vadd.f32 0.0, %v2600
      %v2602 = vpop.f32.mrb[0].mxu0
      %v2603 = vpop.f32.mrb[0].mxu0
      %v2604 = vadd.f32 0.0, %v2603
      %v2605 = vpop.f32.mrb[0].mxu0
      %2606 = vmatprep.mubr.bf16.mxu0 0
      %2607 = vmatmul.mubr.bf16.gmra.mrb[0].mxu0 %v709
      %v2608 = vpop.f32.mrb[0].mxu0
      %v2609 = vadd.f32 0.0, %v2608
      %v2610 = vpop.f32.mrb[0].mxu0
      %v2611 = vpop.f32.mrb[0].mxu0
      %v2612 = vadd.f32 0.0, %v2611
      %v2613 = vpop.f32.mrb[0].mxu0
      %2614 = vmatprep.mubr.bf16.mxu0 0
      %2615 = vmatmul.mubr.bf16.gmra.mrb[0].mxu0 %v712
      %v2616 = vpop.f32.mrb[0].mxu0
      %v2617 = vadd.f32 0.0, %v2616
      %v2618 = vpop.f32.mrb[0].mxu0
      %v2619 = vpop.f32.mrb[0].mxu0
      %v2620 = vadd.f32 0.0, %v2619
      %v2621 = vpop.f32.mrb[0].mxu0
      %2622 = vmatprep.mubr.bf16.mxu0 0
      %2623 = vmatmul.mubr.bf16.gmra.mrb[0].mxu0 %v715
      %v2624 = vpop.f32.mrb[0].mxu0
      %v2625 = vadd.f32 0.0, %v2624
      %v2626 = vpop.f32.mrb[0].mxu0
      %v2627 = vpop.f32.mrb[0].mxu0
      %v2628 = vadd.f32 0.0, %v2627
      %v2629 = vpop.f32.mrb[0].mxu0
      %2630 = vmatprep.mubr.bf16.mxu0 0
      %2631 = vmatmul.mubr.bf16.gmra.mrb[0].mxu0 %v1835
      %v2632 = vpop.f32.mrb[0].mxu0
      %v2633 = vadd.f32 0.0, %v2632
      %v2634 = vpop.f32.mrb[0].mxu0
      %v2635 = vpop.f32.mrb[0].mxu0
      %v2636 = vadd.f32 0.0, %v2635
      %v2637 = vpop.f32.mrb[0].mxu0
      %2638 = vmatprep.mubr.bf16.mxu0 0
      %2639 = vmatmul.mubr.bf16.gmra.mrb[0].mxu0 %v2481
      %v2640 = vpop.f32.mrb[0].mxu0
      %v2641 = vadd.f32 0.0, %v2640
      %v2642 = vpop.f32.mrb[0].mxu0
      %v2643 = vpop.f32.mrb[0].mxu0
      %v2644 = vadd.f32 0.0, %v2643
      %v2645 = vpop.f32.mrb[0].mxu0
      %2646 = vdwg.mxu0
      %v2647 = vadd.f32 %v2419, %v2521
      %v2648 = vadd.f32 %v2420, %v2524
      %v2649 = vadd.f32 %v2421, %v2529
      %v2650 = vadd.f32 %v2422, %v2532
      %v2651 = vadd.f32 %v2423, %v2537
      %v2652 = vadd.f32 %v2424, %v2540
      %v2653 = vadd.f32 %v2425, %v2545
      %v2654 = vadd.f32 %v2426, %v2548
      %v2655 = vadd.f32 %v2427, %v2553
      %v2656 = vadd.f32 %v2428, %v2556
      %v2657 = vadd.f32 %v2429, %v2561
      %v2658 = vadd.f32 %v2430, %v2564
      %v2659 = vadd.f32 %v2431, %v2569
      %v2660 = vadd.f32 %v2432, %v2572
      %v2661 = vadd.f32 %v2433, %v2577
      %v2662 = vadd.f32 %v2434, %v2580
      %v2663 = vadd.f32 %v2435, %v2585
      %v2664 = vadd.f32 %v2436, %v2588
      %v2665 = vadd.f32 %v2437, %v2593
      %v2666 = vadd.f32 %v2438, %v2596
      %v2667 = vadd.f32 %v2439, %v2601
      %v2668 = vadd.f32 %v2440, %v2604
      %v2669 = vadd.f32 %v2441, %v2609
      %v2670 = vadd.f32 %v2442, %v2612
      %v2671 = vadd.f32 %v2443, %v2617
      %v2672 = vadd.f32 %v2444, %v2620
      %v2673 = vadd.f32 %v2445, %v2625
      %v2674 = vadd.f32 %v2446, %v2628
      %v2675 = vadd.f32 %v2447, %v2633
      %v2676 = vadd.f32 %v2448, %v2636
      %v2677 = vadd.f32 %v2449, %v2641
      %v2678 = vadd.f32 %v2450, %v2644
      %v2680 = vrot.slane %v227, 5
      %v2681 = vrot.slane %v2680, 4
      %v2682 = vrot.slane %v228, 5
      %v2683 = vsel %vm1192, %v2681, %v2682
      %v2684 = vrot.slane %v2682, 4
      %v2685 = vrot.slane %v229, 5
      %v2686 = vsel %vm1192, %v2684, %v2685
      %s2687 = scalar_lea.vmem %s1, 32
      %v2688 = vld [vmem:[%s2687] sm:$0xf]
      %v2689 = vunpack.c.l.b16 %v2683
      %v2690 = vunpack.c.l.b16 %v2686
      %v2691 = vpack.c.b16 %v2690, %v2689
      %v2693 = vsel %vm668, %v2691, 0
      %v2696 = vsel %vm717, %v2688, 0
      %2698 = vmatprep.subr.bf16.mxu0 0
      %2699 = vmatpush1.bf16.msra.mxu0 %v2696
      %2700 = vmatprep.subr.bf16.mxu0 0
      %2701 = vmatpush1.bf16.msra.mxu0 0
      %2702 = vmatprep.subr.bf16.mxu0 0
      %2703 = vmatpush1.bf16.msra.mxu0 0
      %2704 = vmatprep.subr.bf16.mxu0 0
      %2705 = vmatpush1.bf16.msra.mxu0 0
      %2706 = vmatprep.subr.bf16.mxu0 0
      %2707 = vmatpush1.bf16.msra.mxu0 0
      %2708 = vmatprep.subr.bf16.mxu0 0
      %2709 = vmatpush1.bf16.msra.mxu0 0
      %2710 = vmatprep.subr.bf16.mxu0 0
      %2711 = vmatpush1.bf16.msra.mxu0 0
      %2712 = vmatprep.subr.bf16.mxu0 0
      %2713 = vmatpush1.bf16.msra.mxu0 0
      %2714 = vmatprep.subr.bf16.mxu0 0
      %2715 = vmatpush1.bf16.msra.mxu0 0
      %2716 = vmatprep.subr.bf16.mxu0 0
      %2717 = vmatpush1.bf16.msra.mxu0 0
      %2718 = vmatprep.subr.bf16.mxu0 0
      %2719 = vmatpush1.bf16.msra.mxu0 0
      %2720 = vmatprep.subr.bf16.mxu0 0
      %2721 = vmatpush1.bf16.msra.mxu0 0
      %2722 = vmatprep.subr.bf16.mxu0 0
      %2723 = vmatpush1.bf16.msra.mxu0 0
      %2724 = vmatprep.subr.bf16.mxu0 0
      %2725 = vmatpush1.bf16.msra.mxu0 0
      %2726 = vmatprep.subr.bf16.mxu0 0
      %2727 = vmatpush1.bf16.msra.mxu0 0
      %2728 = vmatprep.subr.bf16.mxu0 0
      %2729 = vmatpush1.bf16.msra.mxu0 0
      %2730 = vmatprep.mubr.bf16.mxu0 0
      %2731 = vmatmul.mubr.bf16.gmra.mrb[0].mxu0 %v1362
      %v2732 = vpop.f32.mrb[0].mxu0
      %v2733 = vadd.f32 0.0, %v2732
      %v2734 = vpop.f32.mrb[0].mxu0
      %v2735 = vpop.f32.mrb[0].mxu0
      %v2736 = vadd.f32 0.0, %v2735
      %v2737 = vpop.f32.mrb[0].mxu0
      %2738 = vmatprep.mubr.bf16.mxu0 0
      %2739 = vmatmul.mubr.bf16.gmra.mrb[0].mxu0 %v1365
      %v2740 = vpop.f32.mrb[0].mxu0
      %v2741 = vadd.f32 0.0, %v2740
      %v2742 = vpop.f32.mrb[0].mxu0
      %v2743 = vpop.f32.mrb[0].mxu0
      %v2744 = vadd.f32 0.0, %v2743
      %v2745 = vpop.f32.mrb[0].mxu0
      %2746 = vmatprep.mubr.bf16.mxu0 0
      %2747 = vmatmul.mubr.bf16.gmra.mrb[0].mxu0 %v1368
      %v2748 = vpop.f32.mrb[0].mxu0
      %v2749 = vadd.f32 0.0, %v2748
      %v2750 = vpop.f32.mrb[0].mxu0
      %v2751 = vpop.f32.mrb[0].mxu0
      %v2752 = vadd.f32 0.0, %v2751
      %v2753 = vpop.f32.mrb[0].mxu0
      %2754 = vmatprep.mubr.bf16.mxu0 0
      %2755 = vmatmul.mubr.bf16.gmra.mrb[0].mxu0 %v1371
      %v2756 = vpop.f32.mrb[0].mxu0
      %v2757 = vadd.f32 0.0, %v2756
      %v2758 = vpop.f32.mrb[0].mxu0
      %v2759 = vpop.f32.mrb[0].mxu0
      %v2760 = vadd.f32 0.0, %v2759
      %v2761 = vpop.f32.mrb[0].mxu0
      %2762 = vmatprep.mubr.bf16.mxu0 0
      %2763 = vmatmul.mubr.bf16.gmra.mrb[0].mxu0 %v1374
      %v2764 = vpop.f32.mrb[0].mxu0
      %v2765 = vadd.f32 0.0, %v2764
      %v2766 = vpop.f32.mrb[0].mxu0
      %v2767 = vpop.f32.mrb[0].mxu0
      %v2768 = vadd.f32 0.0, %v2767
      %v2769 = vpop.f32.mrb[0].mxu0
      %2770 = vmatprep.mubr.bf16.mxu0 0
      %2771 = vmatmul.mubr.bf16.gmra.mrb[0].mxu0 %v1377
      %v2772 = vpop.f32.mrb[0].mxu0
      %v2773 = vadd.f32 0.0, %v2772
      %v2774 = vpop.f32.mrb[0].mxu0
      %v2775 = vpop.f32.mrb[0].mxu0
      %v2776 = vadd.f32 0.0, %v2775
      %v2777 = vpop.f32.mrb[0].mxu0
      %2778 = vmatprep.mubr.bf16.mxu0 0
      %2779 = vmatmul.mubr.bf16.gmra.mrb[0].mxu0 %v1380
      %v2780 = vpop.f32.mrb[0].mxu0
      %v2781 = vadd.f32 0.0, %v2780
      %v2782 = vpop.f32.mrb[0].mxu0
      %v2783 = vpop.f32.mrb[0].mxu0
      %v2784 = vadd.f32 0.0, %v2783
      %v2785 = vpop.f32.mrb[0].mxu0
      %2786 = vmatprep.mubr.bf16.mxu0 0
      %2787 = vmatmul.mubr.bf16.gmra.mrb[0].mxu0 %v1383
      %v2788 = vpop.f32.mrb[0].mxu0
      %v2789 = vadd.f32 0.0, %v2788
      %v2790 = vpop.f32.mrb[0].mxu0
      %v2791 = vpop.f32.mrb[0].mxu0
      %v2792 = vadd.f32 0.0, %v2791
      %v2793 = vpop.f32.mrb[0].mxu0
      %2794 = vmatprep.mubr.bf16.mxu0 0
      %2795 = vmatmul.mubr.bf16.gmra.mrb[0].mxu0 %v1386
      %v2796 = vpop.f32.mrb[0].mxu0
      %v2797 = vadd.f32 0.0, %v2796
      %v2798 = vpop.f32.mrb[0].mxu0
      %v2799 = vpop.f32.mrb[0].mxu0
      %v2800 = vadd.f32 0.0, %v2799
      %v2801 = vpop.f32.mrb[0].mxu0
      %2802 = vmatprep.mubr.bf16.mxu0 0
      %2803 = vmatmul.mubr.bf16.gmra.mrb[0].mxu0 %v1389
      %v2804 = vpop.f32.mrb[0].mxu0
      %v2805 = vadd.f32 0.0, %v2804
      %v2806 = vpop.f32.mrb[0].mxu0
      %v2807 = vpop.f32.mrb[0].mxu0
      %v2808 = vadd.f32 0.0, %v2807
      %v2809 = vpop.f32.mrb[0].mxu0
      %2810 = vmatprep.mubr.bf16.mxu0 0
      %2811 = vmatmul.mubr.bf16.gmra.mrb[0].mxu0 %v1392
      %v2812 = vpop.f32.mrb[0].mxu0
      %v2813 = vadd.f32 0.0, %v2812
      %v2814 = vpop.f32.mrb[0].mxu0
      %v2815 = vpop.f32.mrb[0].mxu0
      %v2816 = vadd.f32 0.0, %v2815
      %v2817 = vpop.f32.mrb[0].mxu0
      %2818 = vmatprep.mubr.bf16.mxu0 0
      %2819 = vmatmul.mubr.bf16.gmra.mrb[0].mxu0 %v1395
      %v2820 = vpop.f32.mrb[0].mxu0
      %v2821 = vadd.f32 0.0, %v2820
      %v2822 = vpop.f32.mrb[0].mxu0
      %v2823 = vpop.f32.mrb[0].mxu0
      %v2824 = vadd.f32 0.0, %v2823
      %v2825 = vpop.f32.mrb[0].mxu0
      %2826 = vmatprep.mubr.bf16.mxu0 0
      %2827 = vmatmul.mubr.bf16.gmra.mrb[0].mxu0 %v1398
      %v2828 = vpop.f32.mrb[0].mxu0
      %v2829 = vadd.f32 0.0, %v2828
      %v2830 = vpop.f32.mrb[0].mxu0
      %v2831 = vpop.f32.mrb[0].mxu0
      %v2832 = vadd.f32 0.0, %v2831
      %v2833 = vpop.f32.mrb[0].mxu0
      %2834 = vmatprep.mubr.bf16.mxu0 0
      %2835 = vmatmul.mubr.bf16.gmra.mrb[0].mxu0 %v1401
      %v2836 = vpop.f32.mrb[0].mxu0
      %v2837 = vadd.f32 0.0, %v2836
      %v2838 = vpop.f32.mrb[0].mxu0
      %v2839 = vpop.f32.mrb[0].mxu0
      %v2840 = vadd.f32 0.0, %v2839
      %v2841 = vpop.f32.mrb[0].mxu0
      %2842 = vmatprep.mubr.bf16.mxu0 0
      %2843 = vmatmul.mubr.bf16.gmra.mrb[0].mxu0 %v2047
      %v2844 = vpop.f32.mrb[0].mxu0
      %v2845 = vadd.f32 0.0, %v2844
      %v2846 = vpop.f32.mrb[0].mxu0
      %v2847 = vpop.f32.mrb[0].mxu0
      %v2848 = vadd.f32 0.0, %v2847
      %v2849 = vpop.f32.mrb[0].mxu0
      %2850 = vmatprep.mubr.bf16.mxu0 0
      %2851 = vmatmul.mubr.bf16.gmra.mrb[0].mxu0 %v2693
      %v2852 = vpop.f32.mrb[0].mxu0
      %v2853 = vadd.f32 0.0, %v2852
      %v2854 = vpop.f32.mrb[0].mxu0
      %v2855 = vpop.f32.mrb[0].mxu0
      %v2856 = vadd.f32 0.0, %v2855
      %v2857 = vpop.f32.mrb[0].mxu0
      %2858 = vdwg.mxu0
      %v2859 = vadd.f32 %v2647, %v2733
      %v2860 = vadd.f32 %v2648, %v2736
      %v2861 = vadd.f32 %v2649, %v2741
      %v2862 = vadd.f32 %v2650, %v2744
      %v2863 = vadd.f32 %v2651, %v2749
      %v2864 = vadd.f32 %v2652, %v2752
      %v2865 = vadd.f32 %v2653, %v2757
      %v2866 = vadd.f32 %v2654, %v2760
      %v2867 = vadd.f32 %v2655, %v2765
      %v2868 = vadd.f32 %v2656, %v2768
      %v2869 = vadd.f32 %v2657, %v2773
      %v2870 = vadd.f32 %v2658, %v2776
      %v2871 = vadd.f32 %v2659, %v2781
      %v2872 = vadd.f32 %v2660, %v2784
      %v2873 = vadd.f32 %v2661, %v2789
      %v2874 = vadd.f32 %v2662, %v2792
      %v2875 = vadd.f32 %v2663, %v2797
      %v2876 = vadd.f32 %v2664, %v2800
      %v2877 = vadd.f32 %v2665, %v2805
      %v2878 = vadd.f32 %v2666, %v2808
      %v2879 = vadd.f32 %v2667, %v2813
      %v2880 = vadd.f32 %v2668, %v2816
      %v2881 = vadd.f32 %v2669, %v2821
      %v2882 = vadd.f32 %v2670, %v2824
      %v2883 = vadd.f32 %v2671, %v2829
      %v2884 = vadd.f32 %v2672, %v2832
      %v2885 = vadd.f32 %v2673, %v2837
      %v2886 = vadd.f32 %v2674, %v2840
      %v2887 = vadd.f32 %v2675, %v2845
      %v2888 = vadd.f32 %v2676, %v2848
      %v2889 = vadd.f32 %v2677, %v2853
      %v2890 = vadd.f32 %v2678, %v2856
      %2891 = vst.msk [vmem:[%s168] sm:$0xff] %vm668, %v2859
      %2892 = vst.msk [vmem:[%s168 + $0x8] sm:$0xff] %vm668, %v2860
      %2893 = vst.msk [vmem:[%s168 + $0x10] sm:$0xff] %vm668, %v2861
      %2894 = vst.msk [vmem:[%s168 + $0x18] sm:$0xff] %vm668, %v2862
      %2895 = vst.msk [vmem:[%s168 + $0x20] sm:$0xff] %vm668, %v2863
      %2896 = vst.msk [vmem:[%s168 + $0x28] sm:$0xff] %vm668, %v2864
      %2897 = vst.msk [vmem:[%s168 + $0x30] sm:$0xff] %vm668, %v2865
      %2898 = vst.msk [vmem:[%s168 + $0x38] sm:$0xff] %vm668, %v2866
      %2899 = vst.msk [vmem:[%s168 + $0x40] sm:$0xff] %vm668, %v2867
      %2900 = vst.msk [vmem:[%s168 + $0x48] sm:$0xff] %vm668, %v2868
      %2901 = vst.msk [vmem:[%s168 + $0x50] sm:$0xff] %vm668, %v2869
      %2902 = vst.msk [vmem:[%s168 + $0x58] sm:$0xff] %vm668, %v2870
      %2903 = vst.msk [vmem:[%s168 + $0x60] sm:$0xff] %vm668, %v2871
      %2904 = vst.msk [vmem:[%s168 + $0x68] sm:$0xff] %vm668, %v2872
      %2905 = vst.msk [vmem:[%s168 + $0x70] sm:$0xff] %vm668, %v2873
      %2906 = vst.msk [vmem:[%s168 + $0x78] sm:$0xff] %vm668, %v2874
      %2907 = vst.msk [vmem:[%s168 + $0x80] sm:$0xff] %vm668, %v2875
      %2908 = vst.msk [vmem:[%s168 + $0x88] sm:$0xff] %vm668, %v2876
      %2909 = vst.msk [vmem:[%s168 + $0x90] sm:$0xff] %vm668, %v2877
      %2910 = vst.msk [vmem:[%s168 + $0x98] sm:$0xff] %vm668, %v2878
      %2911 = vst.msk [vmem:[%s168 + $0xa0] sm:$0xff] %vm668, %v2879
      %2912 = vst.msk [vmem:[%s168 + $0xa8] sm:$0xff] %vm668, %v2880
      %2913 = vst.msk [vmem:[%s168 + $0xb0] sm:$0xff] %vm668, %v2881
      %2914 = vst.msk [vmem:[%s168 + $0xb8] sm:$0xff] %vm668, %v2882
      %2915 = vst.msk [vmem:[%s168 + $0xc0] sm:$0xff] %vm668, %v2883
      %2916 = vst.msk [vmem:[%s168 + $0xc8] sm:$0xff] %vm668, %v2884
      %2917 = vst.msk [vmem:[%s168 + $0xd0] sm:$0xff] %vm668, %v2885
      %2918 = vst.msk [vmem:[%s168 + $0xd8] sm:$0xff] %vm668, %v2886
      %2919 = vst.msk [vmem:[%s168 + $0xe0] sm:$0xff] %vm668, %v2887
      %2920 = vst.msk [vmem:[%s168 + $0xe8] sm:$0xff] %vm668, %v2888
      %2921 = vst.msk [vmem:[%s168 + $0xf0] sm:$0xff] %vm668, %v2889
      %2922 = vst.msk [vmem:[%s168 + $0xf8] sm:$0xff] %vm668, %v2890
      %v2923 = vsel %vm668, %v2859, 0.0
      %v2924 = vsel %vm668, %v2860, 0.0
      %v2925 = vadd.f32 %v2923, %v2924
      %v2926 = vsel %vm668, %v2861, 0.0
      %v2927 = vadd.f32 %v2925, %v2926
      %v2928 = vsel %vm668, %v2862, 0.0
      %v2929 = vadd.f32 %v2927, %v2928
      %v2930 = vsel %vm668, %v2863, 0.0
      %v2931 = vadd.f32 %v2929, %v2930
      %v2932 = vsel %vm668, %v2864, 0.0
      %v2933 = vadd.f32 %v2931, %v2932
      %v2934 = vsel %vm668, %v2865, 0.0
      %v2935 = vadd.f32 %v2933, %v2934
      %v2936 = vsel %vm668, %v2866, 0.0
      %v2937 = vadd.f32 %v2935, %v2936
      %v2938 = vsel %vm668, %v2867, 0.0
      %v2939 = vadd.f32 %v2937, %v2938
      %v2940 = vsel %vm668, %v2868, 0.0
      %v2941 = vadd.f32 %v2939, %v2940
      %v2942 = vsel %vm668, %v2869, 0.0
      %v2943 = vadd.f32 %v2941, %v2942
      %v2944 = vsel %vm668, %v2870, 0.0
      %v2945 = vadd.f32 %v2943, %v2944
      %v2946 = vsel %vm668, %v2871, 0.0
      %v2947 = vadd.f32 %v2945, %v2946
      %v2948 = vsel %vm668, %v2872, 0.0
      %v2949 = vadd.f32 %v2947, %v2948
      %v2950 = vsel %vm668, %v2873, 0.0
      %v2951 = vadd.f32 %v2949, %v2950
      %v2952 = vsel %vm668, %v2874, 0.0
      %v2953 = vadd.f32 %v2951, %v2952
      %v2954 = vsel %vm668, %v2875, 0.0
      %v2955 = vadd.f32 %v2953, %v2954
      %v2956 = vsel %vm668, %v2876, 0.0
      %v2957 = vadd.f32 %v2955, %v2956
      %v2958 = vsel %vm668, %v2877, 0.0
      %v2959 = vadd.f32 %v2957, %v2958
      %v2960 = vsel %vm668, %v2878, 0.0
      %v2961 = vadd.f32 %v2959, %v2960
      %v2962 = vsel %vm668, %v2879, 0.0
      %v2963 = vadd.f32 %v2961, %v2962
      %v2964 = vsel %vm668, %v2880, 0.0
      %v2965 = vadd.f32 %v2963, %v2964
      %v2966 = vsel %vm668, %v2881, 0.0
      %v2967 = vadd.f32 %v2965, %v2966
      %v2968 = vsel %vm668, %v2882, 0.0
      %v2969 = vadd.f32 %v2967, %v2968
      %v2970 = vsel %vm668, %v2883, 0.0
      %v2971 = vadd.f32 %v2969, %v2970
      %v2972 = vsel %vm668, %v2884, 0.0
      %v2973 = vadd.f32 %v2971, %v2972
      %v2974 = vsel %vm668, %v2885, 0.0
      %v2975 = vadd.f32 %v2973, %v2974
      %v2976 = vsel %vm668, %v2886, 0.0
      %v2977 = vadd.f32 %v2975, %v2976
      %v2978 = vsel %vm668, %v2887, 0.0
      %v2979 = vadd.f32 %v2977, %v2978
      %v2980 = vsel %vm668, %v2888, 0.0
      %v2981 = vadd.f32 %v2979, %v2980
      %v2982 = vsel %vm668, %v2889, 0.0
      %v2983 = vadd.f32 %v2981, %v2982
      %v2984 = vsel %vm668, %v2890, 0.0
      %v2985 = vadd.f32 %v2983, %v2984
      %v2986 = vrot.slane %v2985, 4
      %v2987 = vadd.f32 %v2985, %v2986
      %v2988 = vrot.slane %v2987, 2
      %v2989 = vadd.f32 %v2987, %v2988
      %v2990 = vrot.slane %v2989, 1
      %v2991 = vadd.f32 %v2989, %v2990
      %v2992 = vmul.f32 %v2859, %v2859
      %v2993 = vmul.f32 %v2860, %v2860
      %v2994 = vmul.f32 %v2861, %v2861
      %v2995 = vmul.f32 %v2862, %v2862
      %v2996 = vmul.f32 %v2863, %v2863
      %v2997 = vmul.f32 %v2864, %v2864
      %v2998 = vmul.f32 %v2865, %v2865
      %v2999 = vmul.f32 %v2866, %v2866
      %v3000 = vmul.f32 %v2867, %v2867
      %v3001 = vmul.f32 %v2868, %v2868
      %v3002 = vmul.f32 %v2869, %v2869
      %v3003 = vmul.f32 %v2870, %v2870
      %v3004 = vmul.f32 %v2871, %v2871
      %v3005 = vmul.f32 %v2872, %v2872
      %v3006 = vmul.f32 %v2873, %v2873
      %v3007 = vmul.f32 %v2874, %v2874
      %v3008 = vmul.f32 %v2875, %v2875
      %v3009 = vmul.f32 %v2876, %v2876
      %v3010 = vmul.f32 %v2877, %v2877
      %v3011 = vmul.f32 %v2878, %v2878
      %v3012 = vmul.f32 %v2879, %v2879
      %v3013 = vmul.f32 %v2880, %v2880
      %v3014 = vmul.f32 %v2881, %v2881
      %v3015 = vmul.f32 %v2882, %v2882
      %v3016 = vmul.f32 %v2883, %v2883
      %v3017 = vmul.f32 %v2884, %v2884
      %v3018 = vmul.f32 %v2885, %v2885
      %v3019 = vmul.f32 %v2886, %v2886
      %v3020 = vmul.f32 %v2887, %v2887
      %v3021 = vmul.f32 %v2888, %v2888
      %v3022 = vmul.f32 %v2889, %v2889
      %v3023 = vmul.f32 %v2890, %v2890
      %v3024 = vsel %vm668, %v2992, 0.0
      %v3025 = vsel %vm668, %v2993, 0.0
      %v3026 = vadd.f32 %v3024, %v3025
      %v3027 = vsel %vm668, %v2994, 0.0
      %v3028 = vadd.f32 %v3026, %v3027
      %v3029 = vsel %vm668, %v2995, 0.0
      %v3030 = vadd.f32 %v3028, %v3029
      %v3031 = vsel %vm668, %v2996, 0.0
      %v3032 = vadd.f32 %v3030, %v3031
      %v3033 = vsel %vm668, %v2997, 0.0
      %v3034 = vadd.f32 %v3032, %v3033
      %v3035 = vsel %vm668, %v2998, 0.0
      %v3036 = vadd.f32 %v3034, %v3035
      %v3037 = vsel %vm668, %v2999, 0.0
      %v3038 = vadd.f32 %v3036, %v3037
      %v3039 = vsel %vm668, %v3000, 0.0
      %v3040 = vadd.f32 %v3038, %v3039
      %v3041 = vsel %vm668, %v3001, 0.0
      %v3042 = vadd.f32 %v3040, %v3041
      %v3043 = vsel %vm668, %v3002, 0.0
      %v3044 = vadd.f32 %v3042, %v3043
      %v3045 = vsel %vm668, %v3003, 0.0
      %v3046 = vadd.f32 %v3044, %v3045
      %v3047 = vsel %vm668, %v3004, 0.0
      %v3048 = vadd.f32 %v3046, %v3047
      %v3049 = vsel %vm668, %v3005, 0.0
      %v3050 = vadd.f32 %v3048, %v3049
      %v3051 = vsel %vm668, %v3006, 0.0
      %v3052 = vadd.f32 %v3050, %v3051
      %v3053 = vsel %vm668, %v3007, 0.0
      %v3054 = vadd.f32 %v3052, %v3053
      %v3055 = vsel %vm668, %v3008, 0.0
      %v3056 = vadd.f32 %v3054, %v3055
      %v3057 = vsel %vm668, %v3009, 0.0
      %v3058 = vadd.f32 %v3056, %v3057
      %v3059 = vsel %vm668, %v3010, 0.0
      %v3060 = vadd.f32 %v3058, %v3059
      %v3061 = vsel %vm668, %v3011, 0.0
      %v3062 = vadd.f32 %v3060, %v3061
      %v3063 = vsel %vm668, %v3012, 0.0
      %v3064 = vadd.f32 %v3062, %v3063
      %v3065 = vsel %vm668, %v3013, 0.0
      %v3066 = vadd.f32 %v3064, %v3065
      %v3067 = vsel %vm668, %v3014, 0.0
      %v3068 = vadd.f32 %v3066, %v3067
      %v3069 = vsel %vm668, %v3015, 0.0
      %v3070 = vadd.f32 %v3068, %v3069
      %v3071 = vsel %vm668, %v3016, 0.0
      %v3072 = vadd.f32 %v3070, %v3071
      %v3073 = vsel %vm668, %v3017, 0.0
      %v3074 = vadd.f32 %v3072, %v3073
      %v3075 = vsel %vm668, %v3018, 0.0
      %v3076 = vadd.f32 %v3074, %v3075
      %v3077 = vsel %vm668, %v3019, 0.0
      %v3078 = vadd.f32 %v3076, %v3077
      %v3079 = vsel %vm668, %v3020, 0.0
      %v3080 = vadd.f32 %v3078, %v3079
      %v3081 = vsel %vm668, %v3021, 0.0
      %v3082 = vadd.f32 %v3080, %v3081
      %v3083 = vsel %vm668, %v3022, 0.0
      %v3084 = vadd.f32 %v3082, %v3083
      %v3085 = vsel %vm668, %v3023, 0.0
      %v3086 = vadd.f32 %v3084, %v3085
      %v3087 = vrot.slane %v3086, 4
      %v3088 = vadd.f32 %v3086, %v3087
      %v3089 = vrot.slane %v3088, 2
      %v3090 = vadd.f32 %v3088, %v3089
      %v3091 = vrot.slane %v3090, 1
      %v3092 = vadd.f32 %v3090, %v3091
      %v3093 = vld [vmem:[%s3] sm:$0x3]
      %vm3094 = vcmask 1040384
      %v3095 = vsel %vm3094, %v2991, %v3092
      %v3096 = vadd.f32 %v3093, %v3095
      %vm3097 = vcmask 58368
      %3098 = vst.msk [vmem:[%s3] sm:$0x3] %vm3097, %v3096
      %p3099 = scmp.lt.s32.totalorder %s15, 1
      %s3100 = scalar_select %p3099, %s15, 1
      %s3101 = smul.addr %s3100, 32
      %s3102 = smul.addr %s3101, 8
      %s3103 = scalar_lea.vmem %s2, %s3102
      // Predicated region
      $region33: #{residual_block_forward.4} parent=27 // pred_check
        %p3104 = pneg %p80
      $region34: #{residual_block_forward.4} parent=27 // pred_check_branch
        %3106 = sbr.rel (%p3104) target = $region36
      $region35: #{residual_block_forward.4} parent=27 // pred_region
        _
      $region36: #{residual_block_forward.4} parent=27 // pred_fallthru
        _
      // Predicated region
      $region37: #{residual_block_forward.4} parent=27 // pred_check
        %p3107 = pneg %p101
      $region38: #{residual_block_forward.4} parent=27 // pred_check_branch
        %3109 = sbr.rel (%p3107) target = $region40
      $region39: #{residual_block_forward.4} parent=27 // pred_region
        _
      $region40: #{residual_block_forward.4} parent=27 // pred_fallthru
        _
      // Predicated region
      $region41: #{residual_block_forward.4} parent=27 // pred_check
        %p3110 = pneg %p101
      $region42: #{residual_block_forward.4} parent=27 // pred_check_branch
        %3112 = sbr.rel (%p3110) target = $region44
      $region43: #{residual_block_forward.4} parent=27 // pred_region
        _
      $region44: #{residual_block_forward.4} parent=27 // pred_fallthru
        _
    $region28: #{residual_block_forward.4} parent=5 // pred_fallthru
      _
    %p3113 = scmp.le.s32.totalorder 2, %s10
    // Predicated region
    $region45: #{residual_block_forward.4} parent=5 // pred_check
      %p3114 = pneg %p3113
    $region46: #{residual_block_forward.4} parent=5 // pred_check_branch
      %3116 = sbr.rel (%p3114) target = $region48
    $region47: #{residual_block_forward.4} parent=5 // pred_region
      %s3117 = ssub.s32 %s10, 2
      // Predicated region
      $region49: #{residual_block_forward.4} parent=47 // pred_check
        %p3118 = pneg %p86
      $region50: #{residual_block_forward.4} parent=47 // pred_check_branch
        %3120 = sbr.rel (%p3118) target = $region52
      $region51: #{residual_block_forward.4} parent=47 // pred_region
        %p3121 = scmp.lt.s32.totalorder %s16, 1
        %s3122 = scalar_select %p3121, %s16, 1
        %s3123 = smul.addr %s3122, 32
        %s3124 = smul.addr %s3123, 8
        %s3125 = scalar_lea.vmem %s2, %s3124
      $region52: #{residual_block_forward.4} parent=47 // pred_fallthru
        _
    $region48: #{residual_block_forward.4} parent=5 // pred_fallthru
      _
  $region6: #{residual_block_forward.4} parent=0 // loop_footer
    %s14 = sadd.s32 1, %s10
  $region7: #{residual_block_forward.4} parent=0 // loop_footer_branch
    %9 = sbr.rel target = $region3
  $region8: #{residual_block_forward.4} parent=0 // loop_exit
    _

</llo_original>
